<compile_context>
chip_gen: v7x
topology: tpu7x:2x2x1
jax: 0.10.0
libtpu: 0.0.40
codegen_flags: <defaults>
</compile_context>

<pallas_src>
import jax
import jax.numpy as jnp
from jax import lax
from jax.experimental import pallas as pl
from jax.experimental.pallas import tpu as pltpu

B = 2
H, W = 22, 32                      # input spatial (implied by Linear(756, 1))
C1 = 64                            # conv1 out channels
C2 = 6                             # conv2 out channels
K = 5                              # conv2 kernel size
H2, W2 = H - K + 1, W - K + 1      # 18, 28   conv2 output
HP, WP = H2 // 2, W2 // 2          # 9, 14    after 2x2 max pool
FEAT = C2 * HP * WP                # 756

C2P = 8                            # conv2 channels padded to a full sublane group
P_IMG = 768                        # per-image padded lane positions (24 rows * 32) = 6*128
S_MAX = (K - 1) * W + (K - 1)      # 132: largest conv-tap lane shift
RW = (2 * HP) * W                  # 576: readout window (covers all pool anchors)

_HI = lax.Precision.HIGHEST        # reference only


def net_fc5_forward(x, params):
    """x: (B, 1, 22, 32) float32 NCHW.  Returns (B, 1) like the PyTorch module."""
    w1, b1, w2, b2, wro, bro = params
    nb = x.shape[0]

    LT = nb * P_IMG                # total lanes with batch folded in
    L_ACC = LT - S_MAX             # conv2 accumulator lane width
    L_MW = L_ACC - 1               # width after W-direction pool shift
    L_MH = L_MW - W                # width after H-direction pool shift

    # ---------------- layout plumbing (no compute) ----------------
    x_k = jnp.pad(x.reshape(nb, H * W),
                  ((0, 0), (0, P_IMG - H * W))).reshape(1, LT)
    w1_k = w1.reshape(C1, 1)
    b1_k = b1.reshape(C1, 1)
    # conv2 weight: stack the 25 taps on the M axis -> (25*8, 64); rows 8t+c2
    # hold tap t = kh*K + kw, rows 8t+6 and 8t+7 are zero padding.
    w2_t = jnp.transpose(w2, (2, 3, 0, 1)).reshape(K * K, C2, C1)
    wstack = jnp.pad(w2_t, ((0, 0), (0, C2P - C2), (0, 0))).reshape(K * K * C2P, C1)
    b2_k = jnp.pad(b2, (0, C2P - C2)).reshape(C2P, 1)
    # readout weight scattered onto the 2x2-pool anchor grid (even rows/cols of
    # the per-image position grid); torch flatten order is (c, h, w).
    wg5 = jnp.zeros((C2, HP, 2, WP, 2), jnp.float32)
    wg5 = wg5.at[:, :, 0, :, 0].set(wro.reshape(C2, HP, WP))
    wg = jnp.pad(wg5.reshape(C2, 2 * HP, 2 * WP),
                 ((0, C2P - C2), (0, 0), (0, W - 2 * WP))).reshape(C2P, RW)
    bro_k = bro.reshape(1, 1)

    def kernel(x_ref, w1_ref, b1_ref, wstack_ref, b2_ref, wg_ref, bro_ref,
               out_ref, h1_ref, y_ref):
        # ---- conv1 (1x1, 1->64) + ReLU: lane-dense (C1, LT) elementwise ----
        h1_ref[...] = jnp.maximum(w1_ref[...] * x_ref[...] + b1_ref[...], 0.0)

        # ---- conv2 (5x5, 64->6): ONE stacked MXU matmul over all 25 taps ----
        y_ref[...] = jnp.dot(wstack_ref[...], h1_ref[...],
                             preferred_element_type=jnp.float32)

        # combine the 25 per-tap partials with static shifted lane slices;
        # two running accumulators halve the serial add-chain depth while
        # keeping the live-value footprint small (no tree of 25 live terms).
        acc0 = None
        acc1 = None
        for kh in range(K):
            for kw in range(K):
                t = kh * K + kw
                s = kh * W + kw
                blk = y_ref[C2P * t:C2P * (t + 1), :]        # (8, LT), sublane-aligned
                term = blk[:, s:s + L_ACC]                   # shift left by s lanes
                if t % 2 == 0:
                    acc0 = term if acc0 is None else acc0 + term
                else:
                    acc1 = term if acc1 is None else acc1 + term
        acc = acc0 + acc1                                    # raw conv2 (no bias yet)

        # ---- 2x2 max-pool via shifted maxima (anchors at even (oh, ow)) ----
        mw = jnp.maximum(acc[:, 0:L_MW], acc[:, 1:1 + L_MW])   # pool along W
        mh = jnp.maximum(mw[:, 0:L_MH], mw[:, W:W + L_MH])     # pool along H
        # bias + ReLU moved after the pool (per-channel bias and monotone ReLU
        # commute with max) -> applied once on the narrower (C2P, L_MH) slab.
        z = jnp.maximum(mh + b2_ref[...], 0.0)

        # ---- readout Linear(756, 1): masked weighted sum per image ----
        # per-image windows start at 128-aligned lanes (b * 768).
        col = lax.broadcasted_iota(jnp.int32, (1, nb), 1)
        row = jnp.zeros((1, nb), jnp.float32)
        for b in range(nb):
            sb = jnp.sum(z[:, b * P_IMG:b * P_IMG + RW] * wg_ref[...])
            row = row + jnp.where(col == b, sb, 0.0)
        out_ref[...] = row + bro_ref[...]                    # single (1, B) store

    out = pl.pallas_call(
        kernel,
        out_shape=jax.ShapeDtypeStruct((1, nb), jnp.float32),
        in_specs=[pl.BlockSpec(memory_space=pltpu.MemorySpace.VMEM)] * 7,
        out_specs=pl.BlockSpec(memory_space=pltpu.MemorySpace.VMEM),
        scratch_shapes=[
            pltpu.VMEM((C1, LT), jnp.float32),               # conv1 activations
            pltpu.VMEM((K * K * C2P, LT), jnp.float32),      # stacked conv2 partials
        ],
    )(x_k, w1_k, b1_k, wstack, b2_k, wg, bro_k)
    return out.reshape(nb, 1)


def reference_forward(x, params):
    """Pure-JAX reference matching the PyTorch forward exactly."""
    w1, b1, w2, b2, wro, bro = params
    dn = ("NCHW", "OIHW", "NCHW")
    y1 = jnp.maximum(
        lax.conv_general_dilated(x, w1, (1, 1), "VALID", dimension_numbers=dn,
                                 precision=_HI) + b1[None, :, None, None], 0.0)
    y2 = jnp.maximum(
        lax.conv_general_dilated(y1, w2, (1, 1), "VALID", dimension_numbers=dn,
                                 precision=_HI) + b2[None, :, None, None], 0.0)
    p = lax.reduce_window(y2, -jnp.inf, lax.max, (1, 1, 2, 2), (1, 1, 2, 2), "VALID")
    f = p.reshape(p.shape[0], -1)
    return jnp.dot(f, wro.T, precision=_HI) + bro[None, :]


if __name__ == "__main__":
    key = jax.random.PRNGKey(0)
    ks = jax.random.split(key, 7)
    params = (
        0.5 * jax.random.normal(ks[0], (C1, 1, 1, 1), jnp.float32),   # conv1 weight
        0.1 * jax.random.normal(ks[1], (C1,), jnp.float32),           # conv1 bias
        0.05 * jax.random.normal(ks[2], (C2, C1, K, K), jnp.float32),  # conv2 weight
        0.1 * jax.random.normal(ks[3], (C2,), jnp.float32),           # conv2 bias
        0.05 * jax.random.normal(ks[4], (1, FEAT), jnp.float32),       # readout weight
        0.1 * jax.random.normal(ks[5], (1,), jnp.float32),            # readout bias
    )
    x = jax.random.normal(ks[6], (B, 1, H, W), jnp.float32)

    out = jax.jit(net_fc5_forward)(x, params)
    out = jax.block_until_ready(out)

    ref = reference_forward(x, params)
    assert out.shape == (B, 1), out.shape
    assert jnp.allclose(out, ref, atol=2e-2, rtol=2e-2), (out, ref)
    print("KERNEL_OK")
</pallas_src>

<mosaic_0001>
module attributes {stable_mosaic.version = 11 : i64} {
  func.func @kernel(%arg0: memref<1x1536xf32, #tpu.memory_space<vmem>>, %arg1: memref<64x1xf32, #tpu.memory_space<vmem>>, %arg2: memref<64x1xf32, #tpu.memory_space<vmem>>, %arg3: memref<200x64xf32, #tpu.memory_space<vmem>>, %arg4: memref<8x1xf32, #tpu.memory_space<vmem>>, %arg5: memref<8x576xf32, #tpu.memory_space<vmem>>, %arg6: memref<1x1xf32, #tpu.memory_space<vmem>>, %arg7: memref<1x2xf32, #tpu.memory_space<vmem>>, %arg8: memref<64x1536xf32, #tpu.memory_space<vmem>>, %arg9: memref<200x1536xf32, #tpu.memory_space<vmem>>) attributes {dimension_semantics = [], scalar_prefetch = 0 : i64, scratch_operands = 2 : i64, tpu.core_type = #tpu.core_type<tc>} {
    %c0 = arith.constant 0 : index
    %c0_0 = arith.constant 0 : index
    %0 = vector.load %arg1[%c0, %c0_0] : memref<64x1xf32, #tpu.memory_space<vmem>>, vector<64x1xf32>
    %c0_1 = arith.constant 0 : index
    %c0_2 = arith.constant 0 : index
    %1 = vector.load %arg0[%c0_1, %c0_2] : memref<1x1536xf32, #tpu.memory_space<vmem>>, vector<1x1536xf32>
    %2 = vector.broadcast %0 : vector<64x1xf32> to vector<64x1536xf32>
    %3 = vector.broadcast %1 : vector<1x1536xf32> to vector<64x1536xf32>
    %4 = arith.mulf %2, %3 : vector<64x1536xf32>
    %c0_3 = arith.constant 0 : index
    %c0_4 = arith.constant 0 : index
    %5 = vector.load %arg2[%c0_3, %c0_4] : memref<64x1xf32, #tpu.memory_space<vmem>>, vector<64x1xf32>
    %6 = vector.broadcast %5 : vector<64x1xf32> to vector<64x1536xf32>
    %7 = arith.addf %4, %6 : vector<64x1536xf32>
    %cst = arith.constant 0.000000e+00 : f32
    %8 = vector.broadcast %cst : f32 to vector<64x1536xf32>
    %9 = arith.maximumf %7, %8 : vector<64x1536xf32>
    %c0_5 = arith.constant 0 : index
    %c0_6 = arith.constant 0 : index
    %10 = vector.load %arg8[%c0_5, %c0_6] : memref<64x1536xf32, #tpu.memory_space<vmem>>, vector<64x1536xf32>
    tpu.vector_store %arg8[%c0_5, %c0_6], %9 {strides = array<i32>} : memref<64x1536xf32, #tpu.memory_space<vmem>>, vector<64x1536xf32>,
    %c0_7 = arith.constant 0 : index
    %c0_8 = arith.constant 0 : index
    %11 = vector.load %arg3[%c0_7, %c0_8] : memref<200x64xf32, #tpu.memory_space<vmem>>, vector<200x64xf32>
    %c0_9 = arith.constant 0 : index
    %c0_10 = arith.constant 0 : index
    %12 = vector.load %arg8[%c0_9, %c0_10] : memref<64x1536xf32, #tpu.memory_space<vmem>>, vector<64x1536xf32>
    %cst_11 = arith.constant dense<0.000000e+00> : vector<200x1536xf32>
    %13 = tpu.matmul %11, %12, %cst_11 {dimension_numbers = #tpu.dot_dimension_numbers<[1], [0], [0], [1], [0, 0, 1, 1], [], []>} : vector<200x64xf32>, vector<64x1536xf32>, vector<200x1536xf32> -> vector<200x1536xf32>
    %c0_12 = arith.constant 0 : index
    %c0_13 = arith.constant 0 : index
    %14 = vector.load %arg9[%c0_12, %c0_13] : memref<200x1536xf32, #tpu.memory_space<vmem>>, vector<200x1536xf32>
    tpu.vector_store %arg9[%c0_12, %c0_13], %13 {strides = array<i32>} : memref<200x1536xf32, #tpu.memory_space<vmem>>, vector<200x1536xf32>,
    %c0_14 = arith.constant 0 : index
    %c0_15 = arith.constant 0 : index
    %15 = vector.load %arg9[%c0_14, %c0_15] : memref<200x1536xf32, #tpu.memory_space<vmem>>, vector<8x1536xf32>
    %16 = vector.extract_strided_slice %15 {offsets = [0, 0], sizes = [8, 1404], strides = [1, 1]} : vector<8x1536xf32> to vector<8x1404xf32>
    %c8 = arith.constant 8 : index
    %c0_16 = arith.constant 0 : index
    %17 = vector.load %arg9[%c8, %c0_16] : memref<200x1536xf32, #tpu.memory_space<vmem>>, vector<8x1536xf32>
    %18 = vector.extract_strided_slice %17 {offsets = [0, 1], sizes = [8, 1404], strides = [1, 1]} : vector<8x1536xf32> to vector<8x1404xf32>
    %c16 = arith.constant 16 : index
    %c0_17 = arith.constant 0 : index
    %19 = vector.load %arg9[%c16, %c0_17] : memref<200x1536xf32, #tpu.memory_space<vmem>>, vector<8x1536xf32>
    %20 = vector.extract_strided_slice %19 {offsets = [0, 2], sizes = [8, 1404], strides = [1, 1]} : vector<8x1536xf32> to vector<8x1404xf32>
    %21 = arith.addf %16, %20 : vector<8x1404xf32>
    %c24 = arith.constant 24 : index
    %c0_18 = arith.constant 0 : index
    %22 = vector.load %arg9[%c24, %c0_18] : memref<200x1536xf32, #tpu.memory_space<vmem>>, vector<8x1536xf32>
    %23 = vector.extract_strided_slice %22 {offsets = [0, 3], sizes = [8, 1404], strides = [1, 1]} : vector<8x1536xf32> to vector<8x1404xf32>
    %24 = arith.addf %18, %23 : vector<8x1404xf32>
    %c32 = arith.constant 32 : index
    %c0_19 = arith.constant 0 : index
    %25 = vector.load %arg9[%c32, %c0_19] : memref<200x1536xf32, #tpu.memory_space<vmem>>, vector<8x1536xf32>
    %26 = vector.extract_strided_slice %25 {offsets = [0, 4], sizes = [8, 1404], strides = [1, 1]} : vector<8x1536xf32> to vector<8x1404xf32>
    %27 = arith.addf %21, %26 : vector<8x1404xf32>
    %c40 = arith.constant 40 : index
    %c0_20 = arith.constant 0 : index
    %28 = vector.load %arg9[%c40, %c0_20] : memref<200x1536xf32, #tpu.memory_space<vmem>>, vector<8x1536xf32>
    %29 = vector.extract_strided_slice %28 {offsets = [0, 32], sizes = [8, 1404], strides = [1, 1]} : vector<8x1536xf32> to vector<8x1404xf32>
    %30 = arith.addf %24, %29 : vector<8x1404xf32>
    %c48 = arith.constant 48 : index
    %c0_21 = arith.constant 0 : index
    %31 = vector.load %arg9[%c48, %c0_21] : memref<200x1536xf32, #tpu.memory_space<vmem>>, vector<8x1536xf32>
    %32 = vector.extract_strided_slice %31 {offsets = [0, 33], sizes = [8, 1404], strides = [1, 1]} : vector<8x1536xf32> to vector<8x1404xf32>
    %33 = arith.addf %27, %32 : vector<8x1404xf32>
    %c56 = arith.constant 56 : index
    %c0_22 = arith.constant 0 : index
    %34 = vector.load %arg9[%c56, %c0_22] : memref<200x1536xf32, #tpu.memory_space<vmem>>, vector<8x1536xf32>
    %35 = vector.extract_strided_slice %34 {offsets = [0, 34], sizes = [8, 1404], strides = [1, 1]} : vector<8x1536xf32> to vector<8x1404xf32>
    %36 = arith.addf %30, %35 : vector<8x1404xf32>
    %c64 = arith.constant 64 : index
    %c0_23 = arith.constant 0 : index
    %37 = vector.load %arg9[%c64, %c0_23] : memref<200x1536xf32, #tpu.memory_space<vmem>>, vector<8x1536xf32>
    %38 = vector.extract_strided_slice %37 {offsets = [0, 35], sizes = [8, 1404], strides = [1, 1]} : vector<8x1536xf32> to vector<8x1404xf32>
    %39 = arith.addf %33, %38 : vector<8x1404xf32>
    %c72 = arith.constant 72 : index
    %c0_24 = arith.constant 0 : index
    %40 = vector.load %arg9[%c72, %c0_24] : memref<200x1536xf32, #tpu.memory_space<vmem>>, vector<8x1536xf32>
    %41 = vector.extract_strided_slice %40 {offsets = [0, 36], sizes = [8, 1404], strides = [1, 1]} : vector<8x1536xf32> to vector<8x1404xf32>
    %42 = arith.addf %36, %41 : vector<8x1404xf32>
    %c80 = arith.constant 80 : index
    %c0_25 = arith.constant 0 : index
    %43 = vector.load %arg9[%c80, %c0_25] : memref<200x1536xf32, #tpu.memory_space<vmem>>, vector<8x1536xf32>
    %44 = vector.extract_strided_slice %43 {offsets = [0, 64], sizes = [8, 1404], strides = [1, 1]} : vector<8x1536xf32> to vector<8x1404xf32>
    %45 = arith.addf %39, %44 : vector<8x1404xf32>
    %c88 = arith.constant 88 : index
    %c0_26 = arith.constant 0 : index
    %46 = vector.load %arg9[%c88, %c0_26] : memref<200x1536xf32, #tpu.memory_space<vmem>>, vector<8x1536xf32>
    %47 = vector.extract_strided_slice %46 {offsets = [0, 65], sizes = [8, 1404], strides = [1, 1]} : vector<8x1536xf32> to vector<8x1404xf32>
    %48 = arith.addf %42, %47 : vector<8x1404xf32>
    %c96 = arith.constant 96 : index
    %c0_27 = arith.constant 0 : index
    %49 = vector.load %arg9[%c96, %c0_27] : memref<200x1536xf32, #tpu.memory_space<vmem>>, vector<8x1536xf32>
    %50 = vector.extract_strided_slice %49 {offsets = [0, 66], sizes = [8, 1404], strides = [1, 1]} : vector<8x1536xf32> to vector<8x1404xf32>
    %51 = arith.addf %45, %50 : vector<8x1404xf32>
    %c104 = arith.constant 104 : index
    %c0_28 = arith.constant 0 : index
    %52 = vector.load %arg9[%c104, %c0_28] : memref<200x1536xf32, #tpu.memory_space<vmem>>, vector<8x1536xf32>
    %53 = vector.extract_strided_slice %52 {offsets = [0, 67], sizes = [8, 1404], strides = [1, 1]} : vector<8x1536xf32> to vector<8x1404xf32>
    %54 = arith.addf %48, %53 : vector<8x1404xf32>
    %c112 = arith.constant 112 : index
    %c0_29 = arith.constant 0 : index
    %55 = vector.load %arg9[%c112, %c0_29] : memref<200x1536xf32, #tpu.memory_space<vmem>>, vector<8x1536xf32>
    %56 = vector.extract_strided_slice %55 {offsets = [0, 68], sizes = [8, 1404], strides = [1, 1]} : vector<8x1536xf32> to vector<8x1404xf32>
    %57 = arith.addf %51, %56 : vector<8x1404xf32>
    %c120 = arith.constant 120 : index
    %c0_30 = arith.constant 0 : index
    %58 = vector.load %arg9[%c120, %c0_30] : memref<200x1536xf32, #tpu.memory_space<vmem>>, vector<8x1536xf32>
    %59 = vector.extract_strided_slice %58 {offsets = [0, 96], sizes = [8, 1404], strides = [1, 1]} : vector<8x1536xf32> to vector<8x1404xf32>
    %60 = arith.addf %54, %59 : vector<8x1404xf32>
    %c128 = arith.constant 128 : index
    %c0_31 = arith.constant 0 : index
    %61 = vector.load %arg9[%c128, %c0_31] : memref<200x1536xf32, #tpu.memory_space<vmem>>, vector<8x1536xf32>
    %62 = vector.extract_strided_slice %61 {offsets = [0, 97], sizes = [8, 1404], strides = [1, 1]} : vector<8x1536xf32> to vector<8x1404xf32>
    %63 = arith.addf %57, %62 : vector<8x1404xf32>
    %c136 = arith.constant 136 : index
    %c0_32 = arith.constant 0 : index
    %64 = vector.load %arg9[%c136, %c0_32] : memref<200x1536xf32, #tpu.memory_space<vmem>>, vector<8x1536xf32>
    %65 = vector.extract_strided_slice %64 {offsets = [0, 98], sizes = [8, 1404], strides = [1, 1]} : vector<8x1536xf32> to vector<8x1404xf32>
    %66 = arith.addf %60, %65 : vector<8x1404xf32>
    %c144 = arith.constant 144 : index
    %c0_33 = arith.constant 0 : index
    %67 = vector.load %arg9[%c144, %c0_33] : memref<200x1536xf32, #tpu.memory_space<vmem>>, vector<8x1536xf32>
    %68 = vector.extract_strided_slice %67 {offsets = [0, 99], sizes = [8, 1404], strides = [1, 1]} : vector<8x1536xf32> to vector<8x1404xf32>
    %69 = arith.addf %63, %68 : vector<8x1404xf32>
    %c152 = arith.constant 152 : index
    %c0_34 = arith.constant 0 : index
    %70 = vector.load %arg9[%c152, %c0_34] : memref<200x1536xf32, #tpu.memory_space<vmem>>, vector<8x1536xf32>
    %71 = vector.extract_strided_slice %70 {offsets = [0, 100], sizes = [8, 1404], strides = [1, 1]} : vector<8x1536xf32> to vector<8x1404xf32>
    %72 = arith.addf %66, %71 : vector<8x1404xf32>
    %c160 = arith.constant 160 : index
    %c0_35 = arith.constant 0 : index
    %73 = vector.load %arg9[%c160, %c0_35] : memref<200x1536xf32, #tpu.memory_space<vmem>>, vector<8x1536xf32>
    %74 = vector.extract_strided_slice %73 {offsets = [0, 128], sizes = [8, 1404], strides = [1, 1]} : vector<8x1536xf32> to vector<8x1404xf32>
    %75 = arith.addf %69, %74 : vector<8x1404xf32>
    %c168 = arith.constant 168 : index
    %c0_36 = arith.constant 0 : index
    %76 = vector.load %arg9[%c168, %c0_36] : memref<200x1536xf32, #tpu.memory_space<vmem>>, vector<8x1536xf32>
    %77 = vector.extract_strided_slice %76 {offsets = [0, 129], sizes = [8, 1404], strides = [1, 1]} : vector<8x1536xf32> to vector<8x1404xf32>
    %78 = arith.addf %72, %77 : vector<8x1404xf32>
    %c176 = arith.constant 176 : index
    %c0_37 = arith.constant 0 : index
    %79 = vector.load %arg9[%c176, %c0_37] : memref<200x1536xf32, #tpu.memory_space<vmem>>, vector<8x1536xf32>
    %80 = vector.extract_strided_slice %79 {offsets = [0, 130], sizes = [8, 1404], strides = [1, 1]} : vector<8x1536xf32> to vector<8x1404xf32>
    %81 = arith.addf %75, %80 : vector<8x1404xf32>
    %c184 = arith.constant 184 : index
    %c0_38 = arith.constant 0 : index
    %82 = vector.load %arg9[%c184, %c0_38] : memref<200x1536xf32, #tpu.memory_space<vmem>>, vector<8x1536xf32>
    %83 = vector.extract_strided_slice %82 {offsets = [0, 131], sizes = [8, 1404], strides = [1, 1]} : vector<8x1536xf32> to vector<8x1404xf32>
    %84 = arith.addf %78, %83 : vector<8x1404xf32>
    %c192 = arith.constant 192 : index
    %c0_39 = arith.constant 0 : index
    %85 = vector.load %arg9[%c192, %c0_39] : memref<200x1536xf32, #tpu.memory_space<vmem>>, vector<8x1536xf32>
    %86 = vector.extract_strided_slice %85 {offsets = [0, 132], sizes = [8, 1404], strides = [1, 1]} : vector<8x1536xf32> to vector<8x1404xf32>
    %87 = arith.addf %81, %86 : vector<8x1404xf32>
    %88 = arith.addf %87, %84 : vector<8x1404xf32>
    %89 = vector.extract_strided_slice %88 {offsets = [0, 0], sizes = [8, 1403], strides = [1, 1]} : vector<8x1404xf32> to vector<8x1403xf32>
    %90 = vector.extract_strided_slice %88 {offsets = [0, 1], sizes = [8, 1403], strides = [1, 1]} : vector<8x1404xf32> to vector<8x1403xf32>
    %91 = arith.maximumf %89, %90 : vector<8x1403xf32>
    %92 = vector.extract_strided_slice %91 {offsets = [0, 0], sizes = [8, 1371], strides = [1, 1]} : vector<8x1403xf32> to vector<8x1371xf32>
    %93 = vector.extract_strided_slice %91 {offsets = [0, 32], sizes = [8, 1371], strides = [1, 1]} : vector<8x1403xf32> to vector<8x1371xf32>
    %94 = arith.maximumf %92, %93 : vector<8x1371xf32>
    %c0_40 = arith.constant 0 : index
    %c0_41 = arith.constant 0 : index
    %95 = vector.load %arg4[%c0_40, %c0_41] : memref<8x1xf32, #tpu.memory_space<vmem>>, vector<8x1xf32>
    %96 = vector.broadcast %95 : vector<8x1xf32> to vector<8x1371xf32>
    %97 = arith.addf %94, %96 : vector<8x1371xf32>
    %cst_42 = arith.constant 0.000000e+00 : f32
    %98 = vector.broadcast %cst_42 : f32 to vector<8x1371xf32>
    %99 = arith.maximumf %97, %98 : vector<8x1371xf32>
    %100 = tpu.iota {dimensions = array<i32: 1>} : vector<1x2xi32>
    %cst_43 = arith.constant 0.000000e+00 : f32
    %101 = vector.broadcast %cst_43 : f32 to vector<1x2xf32>
    %102 = vector.extract_strided_slice %99 {offsets = [0, 0], sizes = [8, 576], strides = [1, 1]} : vector<8x1371xf32> to vector<8x576xf32>
    %c0_44 = arith.constant 0 : index
    %c0_45 = arith.constant 0 : index
    %103 = vector.load %arg5[%c0_44, %c0_45] : memref<8x576xf32, #tpu.memory_space<vmem>>, vector<8x576xf32>
    %104 = arith.mulf %102, %103 : vector<8x576xf32>
    %105 = vector.shape_cast %104 : vector<8x576xf32> to vector<1x8x576xf32>
    %cst_46 = arith.constant dense<0.000000e+00> : vector<1xf32>
    %106 = vector.multi_reduction <add>, %105, %cst_46 [1, 2] : vector<1x8x576xf32> to vector<1xf32>
    %107 = vector.shape_cast %106 : vector<1xf32> to vector<1x1x1xf32>
    %108 = vector.extract %107[0, 0, 0] : f32 from vector<1x1x1xf32>
    %c0_i32 = arith.constant 0 : i32
    %109 = vector.broadcast %c0_i32 : i32 to vector<1x2xi32>
    %110 = arith.cmpi eq, %100, %109 : vector<1x2xi32>
    %cst_47 = arith.constant 0.000000e+00 : f32
    %111 = vector.broadcast %108 : f32 to vector<1x2xf32>
    %112 = vector.broadcast %cst_47 : f32 to vector<1x2xf32>
    %113 = arith.select %110, %111, %112 : vector<1x2xi1>, vector<1x2xf32>
    %114 = arith.addf %101, %113 : vector<1x2xf32>
    %115 = vector.extract_strided_slice %99 {offsets = [0, 768], sizes = [8, 576], strides = [1, 1]} : vector<8x1371xf32> to vector<8x576xf32>
    %c0_48 = arith.constant 0 : index
    %c0_49 = arith.constant 0 : index
    %116 = vector.load %arg5[%c0_48, %c0_49] : memref<8x576xf32, #tpu.memory_space<vmem>>, vector<8x576xf32>
    %117 = arith.mulf %115, %116 : vector<8x576xf32>
    %118 = vector.shape_cast %117 : vector<8x576xf32> to vector<1x8x576xf32>
    %cst_50 = arith.constant dense<0.000000e+00> : vector<1xf32>
    %119 = vector.multi_reduction <add>, %118, %cst_50 [1, 2] : vector<1x8x576xf32> to vector<1xf32>
    %120 = vector.shape_cast %119 : vector<1xf32> to vector<1x1x1xf32>
    %121 = vector.extract %120[0, 0, 0] : f32 from vector<1x1x1xf32>
    %c1_i32 = arith.constant 1 : i32
    %122 = vector.broadcast %c1_i32 : i32 to vector<1x2xi32>
    %123 = arith.cmpi eq, %100, %122 : vector<1x2xi32>
    %cst_51 = arith.constant 0.000000e+00 : f32
    %124 = vector.broadcast %121 : f32 to vector<1x2xf32>
    %125 = vector.broadcast %cst_51 : f32 to vector<1x2xf32>
    %126 = arith.select %123, %124, %125 : vector<1x2xi1>, vector<1x2xf32>
    %127 = arith.addf %114, %126 : vector<1x2xf32>
    %c0_52 = arith.constant 0 : index
    %c0_53 = arith.constant 0 : index
    %128 = vector.load %arg6[%c0_52, %c0_53] : memref<1x1xf32, #tpu.memory_space<vmem>>, vector<1x1xf32>
    %129 = vector.broadcast %128 : vector<1x1xf32> to vector<1x2xf32>
    %130 = arith.addf %127, %129 : vector<1x2xf32>
    %c0_54 = arith.constant 0 : index
    %c0_55 = arith.constant 0 : index
    %131 = vector.load %arg7[%c0_54, %c0_55] : memref<1x2xf32, #tpu.memory_space<vmem>>, vector<1x2xf32>
    tpu.vector_store %arg7[%c0_54, %c0_55], %130 {strides = array<i32>} : memref<1x2xf32, #tpu.memory_space<vmem>>, vector<1x2xf32>,
    return
  }
}

</mosaic_0001>

<llo_original>
// kernel: net_fc5_forward.1
$region0: #{net_fc5_forward.1}
  #allocation0 [shape = 'u32[]', space=smem, size = 0x4, offset = 0x4, fixed_abs, tag = 'smem constant byte address 0x4 - core index']
  #allocation1 [shape = 'u32[144,128]{1,0:T(1,128)}', space=vmem, size = 0x12000, scoped, tag = 'internal scratch']
  #allocation2 [shape = 'f32[64,1536]{1,0:T(8,128)}', space=vmem, size = 0x60000, scoped, tag = 'scratch operand']
  #allocation3 [shape = 'f32[200,1536]{1,0:T(8,128)}', space=vmem, size = 0x12c000, scoped, tag = 'scratch operand']
  #allocation4 [shape = 'f32[1,1]{1,0:T(1,128)S(1)}', space=vmem, size = 0x200, scoped, tag = 'scoped memory for net_fc5_forward.1']
  %s0 = inlined_call_operand.vmem [shape: f32[1,1536], index: 0, kind: input, shape index: {}]
  %s1 = inlined_call_operand.vmem [shape: f32[64,1], index: 1, kind: input, shape index: {}]
  %s2 = inlined_call_operand.vmem [shape: f32[64,1], index: 2, kind: input, shape index: {}]
  %s3 = inlined_call_operand.vmem [shape: f32[200,64], index: 3, kind: input, shape index: {}]
  %s4 = inlined_call_operand.vmem [shape: f32[8,1], index: 4, kind: input, shape index: {}]
  %s5 = inlined_call_operand.vmem [shape: f32[8,576], index: 5, kind: input, shape index: {}]
  %s6 = inlined_call_operand.<no memory space> [shape: f32[1,1], index: 6, kind: input, shape index: {}]
  %s7 = inlined_call_operand.hbm [shape: f32[1,2], index: 7, kind: output, shape index: {}]
  %s8 = sld [smem:[#allocation0]]
  $region38: #{net_fc5_forward.1} parent=0
    _
  %s10 = ssub.s32 1, %s8
  %s11 = scalar_select 0, %s10, %s8
  %v12 = vstv %s6
  %13 = vst [vmem:[#allocation4] sm:$0x1] %v12
  $region1: #{net_fc5_forward.1} parent=0
    #allocation5 [shape = 'u8[512]{0}', space=vmem, size = 0x400, scoped, tag = 'output window, operand 0, single buffered']
    #allocation6 [shape = 's32[1]{0}', space=sflag, size = 0x4, scoped, tag = 'scoped memory for net_fc5_forward.1']
    %14 = vsyncpa [#allocation6], 0
    // Predicated region
    $region2: #{net_fc5_forward.1} parent=1 // pred_check
      _
    $region3: #{net_fc5_forward.1} parent=1 // pred_check_branch
      %16 = sbr.rel (0) target = $region5
    $region4: #{net_fc5_forward.1} parent=1 // pred_region
      _
    $region5: #{net_fc5_forward.1} parent=1 // pred_fallthru
      _
    // Predicated region
    $region6: #{net_fc5_forward.1} parent=1 // pred_check
      _
    $region7: #{net_fc5_forward.1} parent=1 // pred_check_branch
      %18 = sbr.rel (0) target = $region9
    $region8: #{net_fc5_forward.1} parent=1 // pred_region
      _
    $region9: #{net_fc5_forward.1} parent=1 // pred_fallthru
      _
    // Predicated region
    $region10: #{net_fc5_forward.1} parent=1 // pred_check
      _
    $region11: #{net_fc5_forward.1} parent=1 // pred_check_branch
      %20 = sbr.rel (0) target = $region13
    $region12: #{net_fc5_forward.1} parent=1 // pred_region
      _
    $region13: #{net_fc5_forward.1} parent=1 // pred_fallthru
      _
    // Predicated region
    $region14: #{net_fc5_forward.1} parent=1 // pred_check
      _
    $region15: #{net_fc5_forward.1} parent=1 // pred_check_branch
      %22 = sbr.rel (0) target = $region17
    $region16: #{net_fc5_forward.1} parent=1 // pred_region
      _
    $region17: #{net_fc5_forward.1} parent=1 // pred_fallthru
      _
    // Predicated region
    $region18: #{net_fc5_forward.1} parent=1 // pred_check
      _
    $region19: #{net_fc5_forward.1} parent=1 // pred_check_branch
      %24 = sbr.rel (0) target = $region21
    $region20: #{net_fc5_forward.1} parent=1 // pred_region
      _
    $region21: #{net_fc5_forward.1} parent=1 // pred_fallthru
      _
    // Predicated region
    $region22: #{net_fc5_forward.1} parent=1 // pred_check
      _
    $region23: #{net_fc5_forward.1} parent=1 // pred_check_branch
      %26 = sbr.rel (0) target = $region25
    $region24: #{net_fc5_forward.1} parent=1 // pred_region
      _
    $region25: #{net_fc5_forward.1} parent=1 // pred_fallthru
      _
    // Predicated region
    $region26: #{net_fc5_forward.1} parent=1 // pred_check
      _
    $region27: #{net_fc5_forward.1} parent=1 // pred_check_branch
      %28 = sbr.rel (0) target = $region29
    $region28: #{net_fc5_forward.1} parent=1 // pred_region
      _
    $region29: #{net_fc5_forward.1} parent=1 // pred_fallthru
      _
    %v29 = vld [vmem:[%s1] sm:$0xff]
    %v30 = vld [vmem:[%s1 + $0x8] sm:$0xff]
    %v31 = vld [vmem:[%s1 + $0x10] sm:$0xff]
    %v32 = vld [vmem:[%s1 + $0x18] sm:$0xff]
    %v33 = vld [vmem:[%s1 + $0x20] sm:$0xff]
    %v34 = vld [vmem:[%s1 + $0x28] sm:$0xff]
    %v35 = vld [vmem:[%s1 + $0x30] sm:$0xff]
    %v36 = vld [vmem:[%s1 + $0x38] sm:$0xff]
    %v37 = vld [vmem:[%s0] sm:$0xff]
    %v38 = vld [vmem:[%s0 + $0x8] sm:$0xf]
    %40 = vset.pattern.permute.xlu0 0
    %41 = vperm.xlu0 %40, %v29
    %v42 = vpop.permute.xlu0 %41
    %45 = vset.pattern.permute.xlu0 0
    %46 = vperm.xlu0 %45, %v30
    %v47 = vpop.permute.xlu0 %46
    %50 = vset.pattern.permute.xlu0 0
    %51 = vperm.xlu0 %50, %v31
    %v52 = vpop.permute.xlu0 %51
    %55 = vset.pattern.permute.xlu0 0
    %56 = vperm.xlu0 %55, %v32
    %v57 = vpop.permute.xlu0 %56
    %60 = vset.pattern.permute.xlu0 0
    %61 = vperm.xlu0 %60, %v33
    %v62 = vpop.permute.xlu0 %61
    %65 = vset.pattern.permute.xlu0 0
    %66 = vperm.xlu0 %65, %v34
    %v67 = vpop.permute.xlu0 %66
    %70 = vset.pattern.permute.xlu0 0
    %71 = vperm.xlu0 %70, %v35
    %v72 = vpop.permute.xlu0 %71
    %75 = vset.pattern.permute.xlu0 0
    %76 = vperm.xlu0 %75, %v36
    %v77 = vpop.permute.xlu0 %76
    %v81 = vlaneseq
    %v82 = vshrl.u32 %v81, 7
    %v83 = vsub.s32 0, %v82
    %v84 = vrot.slane %v37, %v83
    %v85 = vlaneseq
    %v86 = vshrl.u32 %v85, 7
    %v87 = vsub.s32 1, %v86
    %v88 = vrot.slane %v37, %v87
    %v89 = vlaneseq
    %v90 = vshrl.u32 %v89, 7
    %v91 = vsub.s32 2, %v90
    %v92 = vrot.slane %v37, %v91
    %v93 = vlaneseq
    %v94 = vshrl.u32 %v93, 7
    %v95 = vsub.s32 3, %v94
    %v96 = vrot.slane %v37, %v95
    %v97 = vlaneseq
    %v98 = vshrl.u32 %v97, 7
    %v99 = vsub.s32 4, %v98
    %v100 = vrot.slane %v37, %v99
    %v101 = vlaneseq
    %v102 = vshrl.u32 %v101, 7
    %v103 = vsub.s32 5, %v102
    %v104 = vrot.slane %v37, %v103
    %v105 = vlaneseq
    %v106 = vshrl.u32 %v105, 7
    %v107 = vsub.s32 6, %v106
    %v108 = vrot.slane %v37, %v107
    %v109 = vlaneseq
    %v110 = vshrl.u32 %v109, 7
    %v111 = vsub.s32 7, %v110
    %v112 = vrot.slane %v37, %v111
    %v113 = vlaneseq
    %v114 = vshrl.u32 %v113, 7
    %v115 = vsub.s32 0, %v114
    %v116 = vrot.slane %v38, %v115
    %v117 = vlaneseq
    %v118 = vshrl.u32 %v117, 7
    %v119 = vsub.s32 1, %v118
    %v120 = vrot.slane %v38, %v119
    %v121 = vlaneseq
    %v122 = vshrl.u32 %v121, 7
    %v123 = vsub.s32 2, %v122
    %v124 = vrot.slane %v38, %v123
    %v125 = vlaneseq
    %v126 = vshrl.u32 %v125, 7
    %v127 = vsub.s32 3, %v126
    %v128 = vrot.slane %v38, %v127
    %v141 = vmul.f32 %v42, %v84
    %v142 = vmul.f32 %v42, %v88
    %v143 = vmul.f32 %v42, %v92
    %v144 = vmul.f32 %v42, %v96
    %v145 = vmul.f32 %v42, %v100
    %v146 = vmul.f32 %v42, %v104
    %v147 = vmul.f32 %v42, %v108
    %v148 = vmul.f32 %v42, %v112
    %v149 = vmul.f32 %v42, %v116
    %v150 = vmul.f32 %v42, %v120
    %v151 = vmul.f32 %v42, %v124
    %v152 = vmul.f32 %v42, %v128
    %v153 = vmul.f32 %v47, %v84
    %v154 = vmul.f32 %v47, %v88
    %v155 = vmul.f32 %v47, %v92
    %v156 = vmul.f32 %v47, %v96
    %v157 = vmul.f32 %v47, %v100
    %v158 = vmul.f32 %v47, %v104
    %v159 = vmul.f32 %v47, %v108
    %v160 = vmul.f32 %v47, %v112
    %v161 = vmul.f32 %v47, %v116
    %v162 = vmul.f32 %v47, %v120
    %v163 = vmul.f32 %v47, %v124
    %v164 = vmul.f32 %v47, %v128
    %v165 = vmul.f32 %v52, %v84
    %v166 = vmul.f32 %v52, %v88
    %v167 = vmul.f32 %v52, %v92
    %v168 = vmul.f32 %v52, %v96
    %v169 = vmul.f32 %v52, %v100
    %v170 = vmul.f32 %v52, %v104
    %v171 = vmul.f32 %v52, %v108
    %v172 = vmul.f32 %v52, %v112
    %v173 = vmul.f32 %v52, %v116
    %v174 = vmul.f32 %v52, %v120
    %v175 = vmul.f32 %v52, %v124
    %v176 = vmul.f32 %v52, %v128
    %v177 = vmul.f32 %v57, %v84
    %v178 = vmul.f32 %v57, %v88
    %v179 = vmul.f32 %v57, %v92
    %v180 = vmul.f32 %v57, %v96
    %v181 = vmul.f32 %v57, %v100
    %v182 = vmul.f32 %v57, %v104
    %v183 = vmul.f32 %v57, %v108
    %v184 = vmul.f32 %v57, %v112
    %v185 = vmul.f32 %v57, %v116
    %v186 = vmul.f32 %v57, %v120
    %v187 = vmul.f32 %v57, %v124
    %v188 = vmul.f32 %v57, %v128
    %v189 = vmul.f32 %v62, %v84
    %v190 = vmul.f32 %v62, %v88
    %v191 = vmul.f32 %v62, %v92
    %v192 = vmul.f32 %v62, %v96
    %v193 = vmul.f32 %v62, %v100
    %v194 = vmul.f32 %v62, %v104
    %v195 = vmul.f32 %v62, %v108
    %v196 = vmul.f32 %v62, %v112
    %v197 = vmul.f32 %v62, %v116
    %v198 = vmul.f32 %v62, %v120
    %v199 = vmul.f32 %v62, %v124
    %v200 = vmul.f32 %v62, %v128
    %v201 = vmul.f32 %v67, %v84
    %v202 = vmul.f32 %v67, %v88
    %v203 = vmul.f32 %v67, %v92
    %v204 = vmul.f32 %v67, %v96
    %v205 = vmul.f32 %v67, %v100
    %v206 = vmul.f32 %v67, %v104
    %v207 = vmul.f32 %v67, %v108
    %v208 = vmul.f32 %v67, %v112
    %v209 = vmul.f32 %v67, %v116
    %v210 = vmul.f32 %v67, %v120
    %v211 = vmul.f32 %v67, %v124
    %v212 = vmul.f32 %v67, %v128
    %v213 = vmul.f32 %v72, %v84
    %v214 = vmul.f32 %v72, %v88
    %v215 = vmul.f32 %v72, %v92
    %v216 = vmul.f32 %v72, %v96
    %v217 = vmul.f32 %v72, %v100
    %v218 = vmul.f32 %v72, %v104
    %v219 = vmul.f32 %v72, %v108
    %v220 = vmul.f32 %v72, %v112
    %v221 = vmul.f32 %v72, %v116
    %v222 = vmul.f32 %v72, %v120
    %v223 = vmul.f32 %v72, %v124
    %v224 = vmul.f32 %v72, %v128
    %v225 = vmul.f32 %v77, %v84
    %v226 = vmul.f32 %v77, %v88
    %v227 = vmul.f32 %v77, %v92
    %v228 = vmul.f32 %v77, %v96
    %v229 = vmul.f32 %v77, %v100
    %v230 = vmul.f32 %v77, %v104
    %v231 = vmul.f32 %v77, %v108
    %v232 = vmul.f32 %v77, %v112
    %v233 = vmul.f32 %v77, %v116
    %v234 = vmul.f32 %v77, %v120
    %v235 = vmul.f32 %v77, %v124
    %v236 = vmul.f32 %v77, %v128
    %v237 = vld [vmem:[%s2] sm:$0xff]
    %v238 = vld [vmem:[%s2 + $0x8] sm:$0xff]
    %v239 = vld [vmem:[%s2 + $0x10] sm:$0xff]
    %v240 = vld [vmem:[%s2 + $0x18] sm:$0xff]
    %v241 = vld [vmem:[%s2 + $0x20] sm:$0xff]
    %v242 = vld [vmem:[%s2 + $0x28] sm:$0xff]
    %v243 = vld [vmem:[%s2 + $0x30] sm:$0xff]
    %v244 = vld [vmem:[%s2 + $0x38] sm:$0xff]
    %246 = vset.pattern.permute.xlu0 0
    %247 = vperm.xlu0 %246, %v237
    %v248 = vpop.permute.xlu0 %247
    %251 = vset.pattern.permute.xlu0 0
    %252 = vperm.xlu0 %251, %v238
    %v253 = vpop.permute.xlu0 %252
    %256 = vset.pattern.permute.xlu0 0
    %257 = vperm.xlu0 %256, %v239
    %v258 = vpop.permute.xlu0 %257
    %261 = vset.pattern.permute.xlu0 0
    %262 = vperm.xlu0 %261, %v240
    %v263 = vpop.permute.xlu0 %262
    %266 = vset.pattern.permute.xlu0 0
    %267 = vperm.xlu0 %266, %v241
    %v268 = vpop.permute.xlu0 %267
    %271 = vset.pattern.permute.xlu0 0
    %272 = vperm.xlu0 %271, %v242
    %v273 = vpop.permute.xlu0 %272
    %276 = vset.pattern.permute.xlu0 0
    %277 = vperm.xlu0 %276, %v243
    %v278 = vpop.permute.xlu0 %277
    %281 = vset.pattern.permute.xlu0 0
    %282 = vperm.xlu0 %281, %v244
    %v283 = vpop.permute.xlu0 %282
    %v285 = vadd.f32 %v141, %v248
    %v286 = vadd.f32 %v142, %v248
    %v287 = vadd.f32 %v143, %v248
    %v288 = vadd.f32 %v144, %v248
    %v289 = vadd.f32 %v145, %v248
    %v290 = vadd.f32 %v146, %v248
    %v291 = vadd.f32 %v147, %v248
    %v292 = vadd.f32 %v148, %v248
    %v293 = vadd.f32 %v149, %v248
    %v294 = vadd.f32 %v150, %v248
    %v295 = vadd.f32 %v151, %v248
    %v296 = vadd.f32 %v152, %v248
    %v297 = vadd.f32 %v153, %v253
    %v298 = vadd.f32 %v154, %v253
    %v299 = vadd.f32 %v155, %v253
    %v300 = vadd.f32 %v156, %v253
    %v301 = vadd.f32 %v157, %v253
    %v302 = vadd.f32 %v158, %v253
    %v303 = vadd.f32 %v159, %v253
    %v304 = vadd.f32 %v160, %v253
    %v305 = vadd.f32 %v161, %v253
    %v306 = vadd.f32 %v162, %v253
    %v307 = vadd.f32 %v163, %v253
    %v308 = vadd.f32 %v164, %v253
    %v309 = vadd.f32 %v165, %v258
    %v310 = vadd.f32 %v166, %v258
    %v311 = vadd.f32 %v167, %v258
    %v312 = vadd.f32 %v168, %v258
    %v313 = vadd.f32 %v169, %v258
    %v314 = vadd.f32 %v170, %v258
    %v315 = vadd.f32 %v171, %v258
    %v316 = vadd.f32 %v172, %v258
    %v317 = vadd.f32 %v173, %v258
    %v318 = vadd.f32 %v174, %v258
    %v319 = vadd.f32 %v175, %v258
    %v320 = vadd.f32 %v176, %v258
    %v321 = vadd.f32 %v177, %v263
    %v322 = vadd.f32 %v178, %v263
    %v323 = vadd.f32 %v179, %v263
    %v324 = vadd.f32 %v180, %v263
    %v325 = vadd.f32 %v181, %v263
    %v326 = vadd.f32 %v182, %v263
    %v327 = vadd.f32 %v183, %v263
    %v328 = vadd.f32 %v184, %v263
    %v329 = vadd.f32 %v185, %v263
    %v330 = vadd.f32 %v186, %v263
    %v331 = vadd.f32 %v187, %v263
    %v332 = vadd.f32 %v188, %v263
    %v333 = vadd.f32 %v189, %v268
    %v334 = vadd.f32 %v190, %v268
    %v335 = vadd.f32 %v191, %v268
    %v336 = vadd.f32 %v192, %v268
    %v337 = vadd.f32 %v193, %v268
    %v338 = vadd.f32 %v194, %v268
    %v339 = vadd.f32 %v195, %v268
    %v340 = vadd.f32 %v196, %v268
    %v341 = vadd.f32 %v197, %v268
    %v342 = vadd.f32 %v198, %v268
    %v343 = vadd.f32 %v199, %v268
    %v344 = vadd.f32 %v200, %v268
    %v345 = vadd.f32 %v201, %v273
    %v346 = vadd.f32 %v202, %v273
    %v347 = vadd.f32 %v203, %v273
    %v348 = vadd.f32 %v204, %v273
    %v349 = vadd.f32 %v205, %v273
    %v350 = vadd.f32 %v206, %v273
    %v351 = vadd.f32 %v207, %v273
    %v352 = vadd.f32 %v208, %v273
    %v353 = vadd.f32 %v209, %v273
    %v354 = vadd.f32 %v210, %v273
    %v355 = vadd.f32 %v211, %v273
    %v356 = vadd.f32 %v212, %v273
    %v357 = vadd.f32 %v213, %v278
    %v358 = vadd.f32 %v214, %v278
    %v359 = vadd.f32 %v215, %v278
    %v360 = vadd.f32 %v216, %v278
    %v361 = vadd.f32 %v217, %v278
    %v362 = vadd.f32 %v218, %v278
    %v363 = vadd.f32 %v219, %v278
    %v364 = vadd.f32 %v220, %v278
    %v365 = vadd.f32 %v221, %v278
    %v366 = vadd.f32 %v222, %v278
    %v367 = vadd.f32 %v223, %v278
    %v368 = vadd.f32 %v224, %v278
    %v369 = vadd.f32 %v225, %v283
    %v370 = vadd.f32 %v226, %v283
    %v371 = vadd.f32 %v227, %v283
    %v372 = vadd.f32 %v228, %v283
    %v373 = vadd.f32 %v229, %v283
    %v374 = vadd.f32 %v230, %v283
    %v375 = vadd.f32 %v231, %v283
    %v376 = vadd.f32 %v232, %v283
    %v377 = vadd.f32 %v233, %v283
    %v378 = vadd.f32 %v234, %v283
    %v379 = vadd.f32 %v235, %v283
    %v380 = vadd.f32 %v236, %v283
    %v381 = vmax.f32 %v285, 0.0
    %v382 = vmax.f32 %v286, 0.0
    %v383 = vmax.f32 %v287, 0.0
    %v384 = vmax.f32 %v288, 0.0
    %v385 = vmax.f32 %v289, 0.0
    %v386 = vmax.f32 %v290, 0.0
    %v387 = vmax.f32 %v291, 0.0
    %v388 = vmax.f32 %v292, 0.0
    %v389 = vmax.f32 %v293, 0.0
    %v390 = vmax.f32 %v294, 0.0
    %v391 = vmax.f32 %v295, 0.0
    %v392 = vmax.f32 %v296, 0.0
    %v393 = vmax.f32 %v297, 0.0
    %v394 = vmax.f32 %v298, 0.0
    %v395 = vmax.f32 %v299, 0.0
    %v396 = vmax.f32 %v300, 0.0
    %v397 = vmax.f32 %v301, 0.0
    %v398 = vmax.f32 %v302, 0.0
    %v399 = vmax.f32 %v303, 0.0
    %v400 = vmax.f32 %v304, 0.0
    %v401 = vmax.f32 %v305, 0.0
    %v402 = vmax.f32 %v306, 0.0
    %v403 = vmax.f32 %v307, 0.0
    %v404 = vmax.f32 %v308, 0.0
    %v405 = vmax.f32 %v309, 0.0
    %v406 = vmax.f32 %v310, 0.0
    %v407 = vmax.f32 %v311, 0.0
    %v408 = vmax.f32 %v312, 0.0
    %v409 = vmax.f32 %v313, 0.0
    %v410 = vmax.f32 %v314, 0.0
    %v411 = vmax.f32 %v315, 0.0
    %v412 = vmax.f32 %v316, 0.0
    %v413 = vmax.f32 %v317, 0.0
    %v414 = vmax.f32 %v318, 0.0
    %v415 = vmax.f32 %v319, 0.0
    %v416 = vmax.f32 %v320, 0.0
    %v417 = vmax.f32 %v321, 0.0
    %v418 = vmax.f32 %v322, 0.0
    %v419 = vmax.f32 %v323, 0.0
    %v420 = vmax.f32 %v324, 0.0
    %v421 = vmax.f32 %v325, 0.0
    %v422 = vmax.f32 %v326, 0.0
    %v423 = vmax.f32 %v327, 0.0
    %v424 = vmax.f32 %v328, 0.0
    %v425 = vmax.f32 %v329, 0.0
    %v426 = vmax.f32 %v330, 0.0
    %v427 = vmax.f32 %v331, 0.0
    %v428 = vmax.f32 %v332, 0.0
    %v429 = vmax.f32 %v333, 0.0
    %v430 = vmax.f32 %v334, 0.0
    %v431 = vmax.f32 %v335, 0.0
    %v432 = vmax.f32 %v336, 0.0
    %v433 = vmax.f32 %v337, 0.0
    %v434 = vmax.f32 %v338, 0.0
    %v435 = vmax.f32 %v339, 0.0
    %v436 = vmax.f32 %v340, 0.0
    %v437 = vmax.f32 %v341, 0.0
    %v438 = vmax.f32 %v342, 0.0
    %v439 = vmax.f32 %v343, 0.0
    %v440 = vmax.f32 %v344, 0.0
    %v441 = vmax.f32 %v345, 0.0
    %v442 = vmax.f32 %v346, 0.0
    %v443 = vmax.f32 %v347, 0.0
    %v444 = vmax.f32 %v348, 0.0
    %v445 = vmax.f32 %v349, 0.0
    %v446 = vmax.f32 %v350, 0.0
    %v447 = vmax.f32 %v351, 0.0
    %v448 = vmax.f32 %v352, 0.0
    %v449 = vmax.f32 %v353, 0.0
    %v450 = vmax.f32 %v354, 0.0
    %v451 = vmax.f32 %v355, 0.0
    %v452 = vmax.f32 %v356, 0.0
    %v453 = vmax.f32 %v357, 0.0
    %v454 = vmax.f32 %v358, 0.0
    %v455 = vmax.f32 %v359, 0.0
    %v456 = vmax.f32 %v360, 0.0
    %v457 = vmax.f32 %v361, 0.0
    %v458 = vmax.f32 %v362, 0.0
    %v459 = vmax.f32 %v363, 0.0
    %v460 = vmax.f32 %v364, 0.0
    %v461 = vmax.f32 %v365, 0.0
    %v462 = vmax.f32 %v366, 0.0
    %v463 = vmax.f32 %v367, 0.0
    %v464 = vmax.f32 %v368, 0.0
    %v465 = vmax.f32 %v369, 0.0
    %v466 = vmax.f32 %v370, 0.0
    %v467 = vmax.f32 %v371, 0.0
    %v468 = vmax.f32 %v372, 0.0
    %v469 = vmax.f32 %v373, 0.0
    %v470 = vmax.f32 %v374, 0.0
    %v471 = vmax.f32 %v375, 0.0
    %v472 = vmax.f32 %v376, 0.0
    %v473 = vmax.f32 %v377, 0.0
    %v474 = vmax.f32 %v378, 0.0
    %v475 = vmax.f32 %v379, 0.0
    %v476 = vmax.f32 %v380, 0.0
    %477 = vst [vmem:[#allocation2] sm:$0xff] %v381
    %478 = vst [vmem:[#allocation2 + $0x8] sm:$0xff] %v382
    %479 = vst [vmem:[#allocation2 + $0x10] sm:$0xff] %v383
    %480 = vst [vmem:[#allocation2 + $0x18] sm:$0xff] %v384
    %481 = vst [vmem:[#allocation2 + $0x20] sm:$0xff] %v385
    %482 = vst [vmem:[#allocation2 + $0x28] sm:$0xff] %v386
    %483 = vst [vmem:[#allocation2 + $0x30] sm:$0xff] %v387
    %484 = vst [vmem:[#allocation2 + $0x38] sm:$0xff] %v388
    %485 = vst [vmem:[#allocation2 + $0x40] sm:$0xff] %v389
    %486 = vst [vmem:[#allocation2 + $0x48] sm:$0xff] %v390
    %487 = vst [vmem:[#allocation2 + $0x50] sm:$0xff] %v391
    %488 = vst [vmem:[#allocation2 + $0x58] sm:$0xff] %v392
    %489 = vst [vmem:[#allocation2 + $0x60] sm:$0xff] %v393
    %490 = vst [vmem:[#allocation2 + $0x68] sm:$0xff] %v394
    %491 = vst [vmem:[#allocation2 + $0x70] sm:$0xff] %v395
    %492 = vst [vmem:[#allocation2 + $0x78] sm:$0xff] %v396
    %493 = vst [vmem:[#allocation2 + $0x80] sm:$0xff] %v397
    %494 = vst [vmem:[#allocation2 + $0x88] sm:$0xff] %v398
    %495 = vst [vmem:[#allocation2 + $0x90] sm:$0xff] %v399
    %496 = vst [vmem:[#allocation2 + $0x98] sm:$0xff] %v400
    %497 = vst [vmem:[#allocation2 + $0xa0] sm:$0xff] %v401
    %498 = vst [vmem:[#allocation2 + $0xa8] sm:$0xff] %v402
    %499 = vst [vmem:[#allocation2 + $0xb0] sm:$0xff] %v403
    %500 = vst [vmem:[#allocation2 + $0xb8] sm:$0xff] %v404
    %501 = vst [vmem:[#allocation2 + $0xc0] sm:$0xff] %v405
    %502 = vst [vmem:[#allocation2 + $0xc8] sm:$0xff] %v406
    %503 = vst [vmem:[#allocation2 + $0xd0] sm:$0xff] %v407
    %504 = vst [vmem:[#allocation2 + $0xd8] sm:$0xff] %v408
    %505 = vst [vmem:[#allocation2 + $0xe0] sm:$0xff] %v409
    %506 = vst [vmem:[#allocation2 + $0xe8] sm:$0xff] %v410
    %507 = vst [vmem:[#allocation2 + $0xf0] sm:$0xff] %v411
    %508 = vst [vmem:[#allocation2 + $0xf8] sm:$0xff] %v412
    %509 = vst [vmem:[#allocation2 + $0x100] sm:$0xff] %v413
    %510 = vst [vmem:[#allocation2 + $0x108] sm:$0xff] %v414
    %511 = vst [vmem:[#allocation2 + $0x110] sm:$0xff] %v415
    %512 = vst [vmem:[#allocation2 + $0x118] sm:$0xff] %v416
    %513 = vst [vmem:[#allocation2 + $0x120] sm:$0xff] %v417
    %514 = vst [vmem:[#allocation2 + $0x128] sm:$0xff] %v418
    %515 = vst [vmem:[#allocation2 + $0x130] sm:$0xff] %v419
    %516 = vst [vmem:[#allocation2 + $0x138] sm:$0xff] %v420
    %517 = vst [vmem:[#allocation2 + $0x140] sm:$0xff] %v421
    %518 = vst [vmem:[#allocation2 + $0x148] sm:$0xff] %v422
    %519 = vst [vmem:[#allocation2 + $0x150] sm:$0xff] %v423
    %520 = vst [vmem:[#allocation2 + $0x158] sm:$0xff] %v424
    %521 = vst [vmem:[#allocation2 + $0x160] sm:$0xff] %v425
    %522 = vst [vmem:[#allocation2 + $0x168] sm:$0xff] %v426
    %523 = vst [vmem:[#allocation2 + $0x170] sm:$0xff] %v427
    %524 = vst [vmem:[#allocation2 + $0x178] sm:$0xff] %v428
    %525 = vst [vmem:[#allocation2 + $0x180] sm:$0xff] %v429
    %526 = vst [vmem:[#allocation2 + $0x188] sm:$0xff] %v430
    %527 = vst [vmem:[#allocation2 + $0x190] sm:$0xff] %v431
    %528 = vst [vmem:[#allocation2 + $0x198] sm:$0xff] %v432
    %529 = vst [vmem:[#allocation2 + $0x1a0] sm:$0xff] %v433
    %530 = vst [vmem:[#allocation2 + $0x1a8] sm:$0xff] %v434
    %531 = vst [vmem:[#allocation2 + $0x1b0] sm:$0xff] %v435
    %532 = vst [vmem:[#allocation2 + $0x1b8] sm:$0xff] %v436
    %533 = vst [vmem:[#allocation2 + $0x1c0] sm:$0xff] %v437
    %534 = vst [vmem:[#allocation2 + $0x1c8] sm:$0xff] %v438
    %535 = vst [vmem:[#allocation2 + $0x1d0] sm:$0xff] %v439
    %536 = vst [vmem:[#allocation2 + $0x1d8] sm:$0xff] %v440
    %537 = vst [vmem:[#allocation2 + $0x1e0] sm:$0xff] %v441
    %538 = vst [vmem:[#allocation2 + $0x1e8] sm:$0xff] %v442
    %539 = vst [vmem:[#allocation2 + $0x1f0] sm:$0xff] %v443
    %540 = vst [vmem:[#allocation2 + $0x1f8] sm:$0xff] %v444
    %541 = vst [vmem:[#allocation2 + $0x200] sm:$0xff] %v445
    %542 = vst [vmem:[#allocation2 + $0x208] sm:$0xff] %v446
    %543 = vst [vmem:[#allocation2 + $0x210] sm:$0xff] %v447
    %544 = vst [vmem:[#allocation2 + $0x218] sm:$0xff] %v448
    %545 = vst [vmem:[#allocation2 + $0x220] sm:$0xff] %v449
    %546 = vst [vmem:[#allocation2 + $0x228] sm:$0xff] %v450
    %547 = vst [vmem:[#allocation2 + $0x230] sm:$0xff] %v451
    %548 = vst [vmem:[#allocation2 + $0x238] sm:$0xff] %v452
    %549 = vst [vmem:[#allocation2 + $0x240] sm:$0xff] %v453
    %550 = vst [vmem:[#allocation2 + $0x248] sm:$0xff] %v454
    %551 = vst [vmem:[#allocation2 + $0x250] sm:$0xff] %v455
    %552 = vst [vmem:[#allocation2 + $0x258] sm:$0xff] %v456
    %553 = vst [vmem:[#allocation2 + $0x260] sm:$0xff] %v457
    %554 = vst [vmem:[#allocation2 + $0x268] sm:$0xff] %v458
    %555 = vst [vmem:[#allocation2 + $0x270] sm:$0xff] %v459
    %556 = vst [vmem:[#allocation2 + $0x278] sm:$0xff] %v460
    %557 = vst [vmem:[#allocation2 + $0x280] sm:$0xff] %v461
    %558 = vst [vmem:[#allocation2 + $0x288] sm:$0xff] %v462
    %559 = vst [vmem:[#allocation2 + $0x290] sm:$0xff] %v463
    %560 = vst [vmem:[#allocation2 + $0x298] sm:$0xff] %v464
    %561 = vst [vmem:[#allocation2 + $0x2a0] sm:$0xff] %v465
    %562 = vst [vmem:[#allocation2 + $0x2a8] sm:$0xff] %v466
    %563 = vst [vmem:[#allocation2 + $0x2b0] sm:$0xff] %v467
    %564 = vst [vmem:[#allocation2 + $0x2b8] sm:$0xff] %v468
    %565 = vst [vmem:[#allocation2 + $0x2c0] sm:$0xff] %v469
    %566 = vst [vmem:[#allocation2 + $0x2c8] sm:$0xff] %v470
    %567 = vst [vmem:[#allocation2 + $0x2d0] sm:$0xff] %v471
    %568 = vst [vmem:[#allocation2 + $0x2d8] sm:$0xff] %v472
    %569 = vst [vmem:[#allocation2 + $0x2e0] sm:$0xff] %v473
    %570 = vst [vmem:[#allocation2 + $0x2e8] sm:$0xff] %v474
    %571 = vst [vmem:[#allocation2 + $0x2f0] sm:$0xff] %v475
    %572 = vst [vmem:[#allocation2 + $0x2f8] sm:$0xff] %v476
    %v573 = vld [vmem:[%s3] sm:$0xff]
    %v574 = vld [vmem:[%s3 + $0x8] sm:$0xff]
    %v575 = vld [vmem:[%s3 + $0x10] sm:$0xff]
    %v576 = vld [vmem:[%s3 + $0x18] sm:$0xff]
    %v577 = vld [vmem:[%s3 + $0x20] sm:$0xff]
    %v578 = vld [vmem:[%s3 + $0x28] sm:$0xff]
    %v579 = vld [vmem:[%s3 + $0x30] sm:$0xff]
    %v580 = vld [vmem:[%s3 + $0x38] sm:$0xff]
    %v581 = vld [vmem:[%s3 + $0x40] sm:$0xff]
    %v582 = vld [vmem:[%s3 + $0x48] sm:$0xff]
    %v583 = vld [vmem:[%s3 + $0x50] sm:$0xff]
    %v584 = vld [vmem:[%s3 + $0x58] sm:$0xff]
    %v585 = vld [vmem:[%s3 + $0x60] sm:$0xff]
    %v586 = vld [vmem:[%s3 + $0x68] sm:$0xff]
    %v587 = vld [vmem:[%s3 + $0x70] sm:$0xff]
    %v588 = vld [vmem:[%s3 + $0x78] sm:$0xff]
    %v589 = vld [vmem:[%s3 + $0x80] sm:$0xff]
    %v590 = vld [vmem:[%s3 + $0x88] sm:$0xff]
    %v591 = vld [vmem:[%s3 + $0x90] sm:$0xff]
    %v592 = vld [vmem:[%s3 + $0x98] sm:$0xff]
    %v593 = vld [vmem:[%s3 + $0xa0] sm:$0xff]
    %v594 = vld [vmem:[%s3 + $0xa8] sm:$0xff]
    %v595 = vld [vmem:[%s3 + $0xb0] sm:$0xff]
    %v596 = vld [vmem:[%s3 + $0xb8] sm:$0xff]
    %v597 = vld [vmem:[%s3 + $0xc0] sm:$0xff]
    %v598 = vld [vmem:[#allocation2] sm:$0xff]
    %v599 = vld [vmem:[#allocation2 + $0x8] sm:$0xff]
    %v600 = vld [vmem:[#allocation2 + $0x10] sm:$0xff]
    %v601 = vld [vmem:[#allocation2 + $0x18] sm:$0xff]
    %v602 = vld [vmem:[#allocation2 + $0x20] sm:$0xff]
    %v603 = vld [vmem:[#allocation2 + $0x28] sm:$0xff]
    %v604 = vld [vmem:[#allocation2 + $0x30] sm:$0xff]
    %v605 = vld [vmem:[#allocation2 + $0x38] sm:$0xff]
    %v606 = vld [vmem:[#allocation2 + $0x40] sm:$0xff]
    %v607 = vld [vmem:[#allocation2 + $0x48] sm:$0xff]
    %v608 = vld [vmem:[#allocation2 + $0x50] sm:$0xff]
    %v609 = vld [vmem:[#allocation2 + $0x58] sm:$0xff]
    %v610 = vld [vmem:[#allocation2 + $0x60] sm:$0xff]
    %v611 = vld [vmem:[#allocation2 + $0x68] sm:$0xff]
    %v612 = vld [vmem:[#allocation2 + $0x70] sm:$0xff]
    %v613 = vld [vmem:[#allocation2 + $0x78] sm:$0xff]
    %v614 = vld [vmem:[#allocation2 + $0x80] sm:$0xff]
    %v615 = vld [vmem:[#allocation2 + $0x88] sm:$0xff]
    %v616 = vld [vmem:[#allocation2 + $0x90] sm:$0xff]
    %v617 = vld [vmem:[#allocation2 + $0x98] sm:$0xff]
    %v618 = vld [vmem:[#allocation2 + $0xa0] sm:$0xff]
    %v619 = vld [vmem:[#allocation2 + $0xa8] sm:$0xff]
    %v620 = vld [vmem:[#allocation2 + $0xb0] sm:$0xff]
    %v621 = vld [vmem:[#allocation2 + $0xb8] sm:$0xff]
    %v622 = vld [vmem:[#allocation2 + $0xc0] sm:$0xff]
    %v623 = vld [vmem:[#allocation2 + $0xc8] sm:$0xff]
    %v624 = vld [vmem:[#allocation2 + $0xd0] sm:$0xff]
    %v625 = vld [vmem:[#allocation2 + $0xd8] sm:$0xff]
    %v626 = vld [vmem:[#allocation2 + $0xe0] sm:$0xff]
    %v627 = vld [vmem:[#allocation2 + $0xe8] sm:$0xff]
    %v628 = vld [vmem:[#allocation2 + $0xf0] sm:$0xff]
    %v629 = vld [vmem:[#allocation2 + $0xf8] sm:$0xff]
    %v630 = vld [vmem:[#allocation2 + $0x100] sm:$0xff]
    %v631 = vld [vmem:[#allocation2 + $0x108] sm:$0xff]
    %v632 = vld [vmem:[#allocation2 + $0x110] sm:$0xff]
    %v633 = vld [vmem:[#allocation2 + $0x118] sm:$0xff]
    %v634 = vld [vmem:[#allocation2 + $0x120] sm:$0xff]
    %v635 = vld [vmem:[#allocation2 + $0x128] sm:$0xff]
    %v636 = vld [vmem:[#allocation2 + $0x130] sm:$0xff]
    %v637 = vld [vmem:[#allocation2 + $0x138] sm:$0xff]
    %v638 = vld [vmem:[#allocation2 + $0x140] sm:$0xff]
    %v639 = vld [vmem:[#allocation2 + $0x148] sm:$0xff]
    %v640 = vld [vmem:[#allocation2 + $0x150] sm:$0xff]
    %v641 = vld [vmem:[#allocation2 + $0x158] sm:$0xff]
    %v642 = vld [vmem:[#allocation2 + $0x160] sm:$0xff]
    %v643 = vld [vmem:[#allocation2 + $0x168] sm:$0xff]
    %v644 = vld [vmem:[#allocation2 + $0x170] sm:$0xff]
    %v645 = vld [vmem:[#allocation2 + $0x178] sm:$0xff]
    %v646 = vld [vmem:[#allocation2 + $0x180] sm:$0xff]
    %v647 = vld [vmem:[#allocation2 + $0x188] sm:$0xff]
    %v648 = vld [vmem:[#allocation2 + $0x190] sm:$0xff]
    %v649 = vld [vmem:[#allocation2 + $0x198] sm:$0xff]
    %v650 = vld [vmem:[#allocation2 + $0x1a0] sm:$0xff]
    %v651 = vld [vmem:[#allocation2 + $0x1a8] sm:$0xff]
    %v652 = vld [vmem:[#allocation2 + $0x1b0] sm:$0xff]
    %v653 = vld [vmem:[#allocation2 + $0x1b8] sm:$0xff]
    %v654 = vld [vmem:[#allocation2 + $0x1c0] sm:$0xff]
    %v655 = vld [vmem:[#allocation2 + $0x1c8] sm:$0xff]
    %v656 = vld [vmem:[#allocation2 + $0x1d0] sm:$0xff]
    %v657 = vld [vmem:[#allocation2 + $0x1d8] sm:$0xff]
    %v658 = vld [vmem:[#allocation2 + $0x1e0] sm:$0xff]
    %v659 = vld [vmem:[#allocation2 + $0x1e8] sm:$0xff]
    %v660 = vld [vmem:[#allocation2 + $0x1f0] sm:$0xff]
    %v661 = vld [vmem:[#allocation2 + $0x1f8] sm:$0xff]
    %v662 = vld [vmem:[#allocation2 + $0x200] sm:$0xff]
    %v663 = vld [vmem:[#allocation2 + $0x208] sm:$0xff]
    %v664 = vld [vmem:[#allocation2 + $0x210] sm:$0xff]
    %v665 = vld [vmem:[#allocation2 + $0x218] sm:$0xff]
    %v666 = vld [vmem:[#allocation2 + $0x220] sm:$0xff]
    %v667 = vld [vmem:[#allocation2 + $0x228] sm:$0xff]
    %v668 = vld [vmem:[#allocation2 + $0x230] sm:$0xff]
    %v669 = vld [vmem:[#allocation2 + $0x238] sm:$0xff]
    %v670 = vld [vmem:[#allocation2 + $0x240] sm:$0xff]
    %v671 = vld [vmem:[#allocation2 + $0x248] sm:$0xff]
    %v672 = vld [vmem:[#allocation2 + $0x250] sm:$0xff]
    %v673 = vld [vmem:[#allocation2 + $0x258] sm:$0xff]
    %v674 = vld [vmem:[#allocation2 + $0x260] sm:$0xff]
    %v675 = vld [vmem:[#allocation2 + $0x268] sm:$0xff]
    %v676 = vld [vmem:[#allocation2 + $0x270] sm:$0xff]
    %v677 = vld [vmem:[#allocation2 + $0x278] sm:$0xff]
    %v678 = vld [vmem:[#allocation2 + $0x280] sm:$0xff]
    %v679 = vld [vmem:[#allocation2 + $0x288] sm:$0xff]
    %v680 = vld [vmem:[#allocation2 + $0x290] sm:$0xff]
    %v681 = vld [vmem:[#allocation2 + $0x298] sm:$0xff]
    %v682 = vld [vmem:[#allocation2 + $0x2a0] sm:$0xff]
    %v683 = vld [vmem:[#allocation2 + $0x2a8] sm:$0xff]
    %v684 = vld [vmem:[#allocation2 + $0x2b0] sm:$0xff]
    %v685 = vld [vmem:[#allocation2 + $0x2b8] sm:$0xff]
    %v686 = vld [vmem:[#allocation2 + $0x2c0] sm:$0xff]
    %v687 = vld [vmem:[#allocation2 + $0x2c8] sm:$0xff]
    %v688 = vld [vmem:[#allocation2 + $0x2d0] sm:$0xff]
    %v689 = vld [vmem:[#allocation2 + $0x2d8] sm:$0xff]
    %v690 = vld [vmem:[#allocation2 + $0x2e0] sm:$0xff]
    %v691 = vld [vmem:[#allocation2 + $0x2e8] sm:$0xff]
    %v692 = vld [vmem:[#allocation2 + $0x2f0] sm:$0xff]
    %v693 = vld [vmem:[#allocation2 + $0x2f8] sm:$0xff]
    %vm694 = vcmask 523264
    %v696 = vsel %vm694, %v573, 0
    %v699 = vsel %vm694, %v574, 0
    %v702 = vsel %vm694, %v575, 0
    %v705 = vsel %vm694, %v576, 0
    %v708 = vsel %vm694, %v577, 0
    %v711 = vsel %vm694, %v578, 0
    %v714 = vsel %vm694, %v579, 0
    %v717 = vsel %vm694, %v580, 0
    %v720 = vsel %vm694, %v581, 0
    %v723 = vsel %vm694, %v582, 0
    %v726 = vsel %vm694, %v583, 0
    %v729 = vsel %vm694, %v584, 0
    %v732 = vsel %vm694, %v585, 0
    %v735 = vsel %vm694, %v586, 0
    %v738 = vsel %vm694, %v587, 0
    %v741 = vsel %vm694, %v588, 0
    %v744 = vsel %vm694, %v589, 0
    %v747 = vsel %vm694, %v590, 0
    %v750 = vsel %vm694, %v591, 0
    %v753 = vsel %vm694, %v592, 0
    %v756 = vsel %vm694, %v593, 0
    %v759 = vsel %vm694, %v594, 0
    %v762 = vsel %vm694, %v595, 0
    %v765 = vsel %vm694, %v596, 0
    %v768 = vsel %vm694, %v597, 0
    %770 = vmatprep.subr.mxu0 %v599
    %771 = vmatpush1.msra.mxu0 %v598
    %772 = vmatprep.subr.mxu0 %v611
    %773 = vmatpush1.msra.mxu0 %v610
    %774 = vmatprep.subr.mxu0 %v623
    %775 = vmatpush1.msra.mxu0 %v622
    %776 = vmatprep.subr.mxu0 %v635
    %777 = vmatpush1.msra.mxu0 %v634
    %778 = vmatprep.subr.mxu0 %v647
    %779 = vmatpush1.msra.mxu0 %v646
    %780 = vmatprep.subr.mxu0 %v659
    %781 = vmatpush1.msra.mxu0 %v658
    %782 = vmatprep.subr.mxu0 %v671
    %783 = vmatpush1.msra.mxu0 %v670
    %784 = vmatprep.subr.mxu0 %v683
    %785 = vmatpush1.msra.mxu0 %v682
    %786 = vmatprep.subr.mxu0 0.0
    %787 = vmatpush1.msra.mxu0 0.0
    %788 = vmatprep.subr.mxu0 0.0
    %789 = vmatpush1.msra.mxu0 0.0
    %790 = vmatprep.subr.mxu0 0.0
    %791 = vmatpush1.msra.mxu0 0.0
    %792 = vmatprep.subr.mxu0 0.0
    %793 = vmatpush1.msra.mxu0 0.0
    %794 = vmatprep.subr.mxu0 0.0
    %795 = vmatpush1.msra.mxu0 0.0
    %796 = vmatprep.subr.mxu0 0.0
    %797 = vmatpush1.msra.mxu0 0.0
    %798 = vmatprep.subr.mxu0 0.0
    %799 = vmatpush1.msra.mxu0 0.0
    %800 = vmatprep.subr.mxu0 0.0
    %801 = vmatpush1.msra.mxu0 0.0
    %802 = vmatprep.subr.mxu0 0.0
    %803 = vmatpush1.msra.mxu0 0.0
    %804 = vmatprep.subr.mxu0 0.0
    %805 = vmatpush1.msra.mxu0 0.0
    %806 = vmatprep.subr.mxu0 0.0
    %807 = vmatpush1.msra.mxu0 0.0
    %808 = vmatprep.subr.mxu0 0.0
    %809 = vmatpush1.msra.mxu0 0.0
    %810 = vmatprep.subr.mxu0 0.0
    %811 = vmatpush1.msra.mxu0 0.0
    %812 = vmatprep.subr.mxu0 0.0
    %813 = vmatpush1.msra.mxu0 0.0
    %814 = vmatprep.subr.mxu0 0.0
    %815 = vmatpush1.msra.mxu0 0.0
    %816 = vmatprep.subr.mxu0 0.0
    %817 = vmatpush1.msra.mxu0 0.0
    %818 = vmatprep.subr.mxu0 0.0
    %819 = vmatpush1.msra.mxu0 0.0
    %820 = vmatprep.subr.mxu0 0.0
    %821 = vmatpush1.msra.mxu0 0.0
    %822 = vmatprep.subr.mxu0 0.0
    %823 = vmatpush1.msra.mxu0 0.0
    %824 = vmatprep.subr.mxu0 0.0
    %825 = vmatpush1.msra.mxu0 0.0
    %826 = vmatprep.subr.mxu0 0.0
    %827 = vmatpush1.msra.mxu0 0.0
    %828 = vmatprep.subr.mxu0 0.0
    %829 = vmatpush1.msra.mxu0 0.0
    %830 = vmatprep.subr.mxu0 0.0
    %831 = vmatpush1.msra.mxu0 0.0
    %832 = vmatprep.subr.mxu0 0.0
    %833 = vmatpush1.msra.mxu0 0.0
    %834 = vmatprep.mubr.f32.mxu0 0.0
    %835 = vmatmul.mubr.f32.gmra.mrb[0].mxu0 %v696
    %v836 = vpop.f32.mrb[0].mxu0
    %v837 = vadd.f32 0.0, %v836
    %v838 = vpop.f32.mrb[0].mxu0
    %v839 = vadd.f32 0.0, %v838
    %840 = vmatprep.mubr.f32.mxu0 0.0
    %841 = vmatmul.mubr.f32.gmra.mrb[0].mxu0 %v699
    %v842 = vpop.f32.mrb[0].mxu0
    %v843 = vadd.f32 0.0, %v842
    %v844 = vpop.f32.mrb[0].mxu0
    %v845 = vadd.f32 0.0, %v844
    %846 = vmatprep.mubr.f32.mxu0 0.0
    %847 = vmatmul.mubr.f32.gmra.mrb[0].mxu0 %v702
    %v848 = vpop.f32.mrb[0].mxu0
    %v849 = vadd.f32 0.0, %v848
    %v850 = vpop.f32.mrb[0].mxu0
    %v851 = vadd.f32 0.0, %v850
    %852 = vmatprep.mubr.f32.mxu0 0.0
    %853 = vmatmul.mubr.f32.gmra.mrb[0].mxu0 %v705
    %v854 = vpop.f32.mrb[0].mxu0
    %v855 = vadd.f32 0.0, %v854
    %v856 = vpop.f32.mrb[0].mxu0
    %v857 = vadd.f32 0.0, %v856
    %858 = vmatprep.mubr.f32.mxu0 0.0
    %859 = vmatmul.mubr.f32.gmra.mrb[0].mxu0 %v708
    %v860 = vpop.f32.mrb[0].mxu0
    %v861 = vadd.f32 0.0, %v860
    %v862 = vpop.f32.mrb[0].mxu0
    %v863 = vadd.f32 0.0, %v862
    %864 = vmatprep.mubr.f32.mxu0 0.0
    %865 = vmatmul.mubr.f32.gmra.mrb[0].mxu0 %v711
    %v866 = vpop.f32.mrb[0].mxu0
    %v867 = vadd.f32 0.0, %v866
    %v868 = vpop.f32.mrb[0].mxu0
    %v869 = vadd.f32 0.0, %v868
    %870 = vmatprep.mubr.f32.mxu0 0.0
    %871 = vmatmul.mubr.f32.gmra.mrb[0].mxu0 %v714
    %v872 = vpop.f32.mrb[0].mxu0
    %v873 = vadd.f32 0.0, %v872
    %v874 = vpop.f32.mrb[0].mxu0
    %v875 = vadd.f32 0.0, %v874
    %876 = vmatprep.mubr.f32.mxu0 0.0
    %877 = vmatmul.mubr.f32.gmra.mrb[0].mxu0 %v717
    %v878 = vpop.f32.mrb[0].mxu0
    %v879 = vadd.f32 0.0, %v878
    %v880 = vpop.f32.mrb[0].mxu0
    %v881 = vadd.f32 0.0, %v880
    %882 = vmatprep.mubr.f32.mxu0 0.0
    %883 = vmatmul.mubr.f32.gmra.mrb[0].mxu0 %v720
    %v884 = vpop.f32.mrb[0].mxu0
    %v885 = vadd.f32 0.0, %v884
    %v886 = vpop.f32.mrb[0].mxu0
    %v887 = vadd.f32 0.0, %v886
    %888 = vmatprep.mubr.f32.mxu0 0.0
    %889 = vmatmul.mubr.f32.gmra.mrb[0].mxu0 %v723
    %v890 = vpop.f32.mrb[0].mxu0
    %v891 = vadd.f32 0.0, %v890
    %v892 = vpop.f32.mrb[0].mxu0
    %v893 = vadd.f32 0.0, %v892
    %894 = vmatprep.mubr.f32.mxu0 0.0
    %895 = vmatmul.mubr.f32.gmra.mrb[0].mxu0 %v726
    %v896 = vpop.f32.mrb[0].mxu0
    %v897 = vadd.f32 0.0, %v896
    %v898 = vpop.f32.mrb[0].mxu0
    %v899 = vadd.f32 0.0, %v898
    %900 = vmatprep.mubr.f32.mxu0 0.0
    %901 = vmatmul.mubr.f32.gmra.mrb[0].mxu0 %v729
    %v902 = vpop.f32.mrb[0].mxu0
    %v903 = vadd.f32 0.0, %v902
    %v904 = vpop.f32.mrb[0].mxu0
    %v905 = vadd.f32 0.0, %v904
    %906 = vmatprep.mubr.f32.mxu0 0.0
    %907 = vmatmul.mubr.f32.gmra.mrb[0].mxu0 %v732
    %v908 = vpop.f32.mrb[0].mxu0
    %v909 = vadd.f32 0.0, %v908
    %v910 = vpop.f32.mrb[0].mxu0
    %v911 = vadd.f32 0.0, %v910
    %912 = vmatprep.mubr.f32.mxu0 0.0
    %913 = vmatmul.mubr.f32.gmra.mrb[0].mxu0 %v735
    %v914 = vpop.f32.mrb[0].mxu0
    %v915 = vadd.f32 0.0, %v914
    %v916 = vpop.f32.mrb[0].mxu0
    %v917 = vadd.f32 0.0, %v916
    %918 = vmatprep.mubr.f32.mxu0 0.0
    %919 = vmatmul.mubr.f32.gmra.mrb[0].mxu0 %v738
    %v920 = vpop.f32.mrb[0].mxu0
    %v921 = vadd.f32 0.0, %v920
    %v922 = vpop.f32.mrb[0].mxu0
    %v923 = vadd.f32 0.0, %v922
    %924 = vmatprep.mubr.f32.mxu0 0.0
    %925 = vmatmul.mubr.f32.gmra.mrb[0].mxu0 %v741
    %v926 = vpop.f32.mrb[0].mxu0
    %v927 = vadd.f32 0.0, %v926
    %v928 = vpop.f32.mrb[0].mxu0
    %v929 = vadd.f32 0.0, %v928
    %930 = vmatprep.mubr.f32.mxu0 0.0
    %931 = vmatmul.mubr.f32.gmra.mrb[0].mxu0 %v744
    %v932 = vpop.f32.mrb[0].mxu0
    %v933 = vadd.f32 0.0, %v932
    %v934 = vpop.f32.mrb[0].mxu0
    %v935 = vadd.f32 0.0, %v934
    %936 = vmatprep.mubr.f32.mxu0 0.0
    %937 = vmatmul.mubr.f32.gmra.mrb[0].mxu0 %v747
    %v938 = vpop.f32.mrb[0].mxu0
    %v939 = vadd.f32 0.0, %v938
    %v940 = vpop.f32.mrb[0].mxu0
    %v941 = vadd.f32 0.0, %v940
    %942 = vmatprep.mubr.f32.mxu0 0.0
    %943 = vmatmul.mubr.f32.gmra.mrb[0].mxu0 %v750
    %v944 = vpop.f32.mrb[0].mxu0
    %v945 = vadd.f32 0.0, %v944
    %v946 = vpop.f32.mrb[0].mxu0
    %v947 = vadd.f32 0.0, %v946
    %948 = vmatprep.mubr.f32.mxu0 0.0
    %949 = vmatmul.mubr.f32.gmra.mrb[0].mxu0 %v753
    %v950 = vpop.f32.mrb[0].mxu0
    %v951 = vadd.f32 0.0, %v950
    %v952 = vpop.f32.mrb[0].mxu0
    %v953 = vadd.f32 0.0, %v952
    %954 = vmatprep.mubr.f32.mxu0 0.0
    %955 = vmatmul.mubr.f32.gmra.mrb[0].mxu0 %v756
    %v956 = vpop.f32.mrb[0].mxu0
    %v957 = vadd.f32 0.0, %v956
    %v958 = vpop.f32.mrb[0].mxu0
    %v959 = vadd.f32 0.0, %v958
    %960 = vmatprep.mubr.f32.mxu0 0.0
    %961 = vmatmul.mubr.f32.gmra.mrb[0].mxu0 %v759
    %v962 = vpop.f32.mrb[0].mxu0
    %v963 = vadd.f32 0.0, %v962
    %v964 = vpop.f32.mrb[0].mxu0
    %v965 = vadd.f32 0.0, %v964
    %966 = vmatprep.mubr.f32.mxu0 0.0
    %967 = vmatmul.mubr.f32.gmra.mrb[0].mxu0 %v762
    %v968 = vpop.f32.mrb[0].mxu0
    %v969 = vadd.f32 0.0, %v968
    %v970 = vpop.f32.mrb[0].mxu0
    %v971 = vadd.f32 0.0, %v970
    %972 = vmatprep.mubr.f32.mxu0 0.0
    %973 = vmatmul.mubr.f32.gmra.mrb[0].mxu0 %v765
    %v974 = vpop.f32.mrb[0].mxu0
    %v975 = vadd.f32 0.0, %v974
    %v976 = vpop.f32.mrb[0].mxu0
    %v977 = vadd.f32 0.0, %v976
    %978 = vmatprep.mubr.f32.mxu0 0.0
    %979 = vmatmul.mubr.f32.gmra.mrb[0].mxu0 %v768
    %v980 = vpop.f32.mrb[0].mxu0
    %v981 = vadd.f32 0.0, %v980
    %v982 = vpop.f32.mrb[0].mxu0
    %v983 = vadd.f32 0.0, %v982
    %984 = vdwg.mxu0
    %985 = vmatprep.subr.mxu0 %v601
    %986 = vmatpush1.msra.mxu0 %v600
    %987 = vmatprep.subr.mxu0 %v613
    %988 = vmatpush1.msra.mxu0 %v612
    %989 = vmatprep.subr.mxu0 %v625
    %990 = vmatpush1.msra.mxu0 %v624
    %991 = vmatprep.subr.mxu0 %v637
    %992 = vmatpush1.msra.mxu0 %v636
    %993 = vmatprep.subr.mxu0 %v649
    %994 = vmatpush1.msra.mxu0 %v648
    %995 = vmatprep.subr.mxu0 %v661
    %996 = vmatpush1.msra.mxu0 %v660
    %997 = vmatprep.subr.mxu0 %v673
    %998 = vmatpush1.msra.mxu0 %v672
    %999 = vmatprep.subr.mxu0 %v685
    %1000 = vmatpush1.msra.mxu0 %v684
    %1001 = vmatprep.subr.mxu0 0.0
    %1002 = vmatpush1.msra.mxu0 0.0
    %1003 = vmatprep.subr.mxu0 0.0
    %1004 = vmatpush1.msra.mxu0 0.0
    %1005 = vmatprep.subr.mxu0 0.0
    %1006 = vmatpush1.msra.mxu0 0.0
    %1007 = vmatprep.subr.mxu0 0.0
    %1008 = vmatpush1.msra.mxu0 0.0
    %1009 = vmatprep.subr.mxu0 0.0
    %1010 = vmatpush1.msra.mxu0 0.0
    %1011 = vmatprep.subr.mxu0 0.0
    %1012 = vmatpush1.msra.mxu0 0.0
    %1013 = vmatprep.subr.mxu0 0.0
    %1014 = vmatpush1.msra.mxu0 0.0
    %1015 = vmatprep.subr.mxu0 0.0
    %1016 = vmatpush1.msra.mxu0 0.0
    %1017 = vmatprep.subr.mxu0 0.0
    %1018 = vmatpush1.msra.mxu0 0.0
    %1019 = vmatprep.subr.mxu0 0.0
    %1020 = vmatpush1.msra.mxu0 0.0
    %1021 = vmatprep.subr.mxu0 0.0
    %1022 = vmatpush1.msra.mxu0 0.0
    %1023 = vmatprep.subr.mxu0 0.0
    %1024 = vmatpush1.msra.mxu0 0.0
    %1025 = vmatprep.subr.mxu0 0.0
    %1026 = vmatpush1.msra.mxu0 0.0
    %1027 = vmatprep.subr.mxu0 0.0
    %1028 = vmatpush1.msra.mxu0 0.0
    %1029 = vmatprep.subr.mxu0 0.0
    %1030 = vmatpush1.msra.mxu0 0.0
    %1031 = vmatprep.subr.mxu0 0.0
    %1032 = vmatpush1.msra.mxu0 0.0
    %1033 = vmatprep.subr.mxu0 0.0
    %1034 = vmatpush1.msra.mxu0 0.0
    %1035 = vmatprep.subr.mxu0 0.0
    %1036 = vmatpush1.msra.mxu0 0.0
    %1037 = vmatprep.subr.mxu0 0.0
    %1038 = vmatpush1.msra.mxu0 0.0
    %1039 = vmatprep.subr.mxu0 0.0
    %1040 = vmatpush1.msra.mxu0 0.0
    %1041 = vmatprep.subr.mxu0 0.0
    %1042 = vmatpush1.msra.mxu0 0.0
    %1043 = vmatprep.subr.mxu0 0.0
    %1044 = vmatpush1.msra.mxu0 0.0
    %1045 = vmatprep.subr.mxu0 0.0
    %1046 = vmatpush1.msra.mxu0 0.0
    %1047 = vmatprep.subr.mxu0 0.0
    %1048 = vmatpush1.msra.mxu0 0.0
    %1049 = vmatprep.mubr.f32.mxu0 0.0
    %1050 = vmatmul.mubr.f32.gmra.mrb[0].mxu0 %v696
    %v1051 = vpop.f32.mrb[0].mxu0
    %v1052 = vadd.f32 0.0, %v1051
    %v1053 = vpop.f32.mrb[0].mxu0
    %v1054 = vadd.f32 0.0, %v1053
    %1055 = vmatprep.mubr.f32.mxu0 0.0
    %1056 = vmatmul.mubr.f32.gmra.mrb[0].mxu0 %v699
    %v1057 = vpop.f32.mrb[0].mxu0
    %v1058 = vadd.f32 0.0, %v1057
    %v1059 = vpop.f32.mrb[0].mxu0
    %v1060 = vadd.f32 0.0, %v1059
    %1061 = vmatprep.mubr.f32.mxu0 0.0
    %1062 = vmatmul.mubr.f32.gmra.mrb[0].mxu0 %v702
    %v1063 = vpop.f32.mrb[0].mxu0
    %v1064 = vadd.f32 0.0, %v1063
    %v1065 = vpop.f32.mrb[0].mxu0
    %v1066 = vadd.f32 0.0, %v1065
    %1067 = vmatprep.mubr.f32.mxu0 0.0
    %1068 = vmatmul.mubr.f32.gmra.mrb[0].mxu0 %v705
    %v1069 = vpop.f32.mrb[0].mxu0
    %v1070 = vadd.f32 0.0, %v1069
    %v1071 = vpop.f32.mrb[0].mxu0
    %v1072 = vadd.f32 0.0, %v1071
    %1073 = vmatprep.mubr.f32.mxu0 0.0
    %1074 = vmatmul.mubr.f32.gmra.mrb[0].mxu0 %v708
    %v1075 = vpop.f32.mrb[0].mxu0
    %v1076 = vadd.f32 0.0, %v1075
    %v1077 = vpop.f32.mrb[0].mxu0
    %v1078 = vadd.f32 0.0, %v1077
    %1079 = vmatprep.mubr.f32.mxu0 0.0
    %1080 = vmatmul.mubr.f32.gmra.mrb[0].mxu0 %v711
    %v1081 = vpop.f32.mrb[0].mxu0
    %v1082 = vadd.f32 0.0, %v1081
    %v1083 = vpop.f32.mrb[0].mxu0
    %v1084 = vadd.f32 0.0, %v1083
    %1085 = vmatprep.mubr.f32.mxu0 0.0
    %1086 = vmatmul.mubr.f32.gmra.mrb[0].mxu0 %v714
    %v1087 = vpop.f32.mrb[0].mxu0
    %v1088 = vadd.f32 0.0, %v1087
    %v1089 = vpop.f32.mrb[0].mxu0
    %v1090 = vadd.f32 0.0, %v1089
    %1091 = vmatprep.mubr.f32.mxu0 0.0
    %1092 = vmatmul.mubr.f32.gmra.mrb[0].mxu0 %v717
    %v1093 = vpop.f32.mrb[0].mxu0
    %v1094 = vadd.f32 0.0, %v1093
    %v1095 = vpop.f32.mrb[0].mxu0
    %v1096 = vadd.f32 0.0, %v1095
    %1097 = vmatprep.mubr.f32.mxu0 0.0
    %1098 = vmatmul.mubr.f32.gmra.mrb[0].mxu0 %v720
    %v1099 = vpop.f32.mrb[0].mxu0
    %v1100 = vadd.f32 0.0, %v1099
    %v1101 = vpop.f32.mrb[0].mxu0
    %v1102 = vadd.f32 0.0, %v1101
    %1103 = vmatprep.mubr.f32.mxu0 0.0
    %1104 = vmatmul.mubr.f32.gmra.mrb[0].mxu0 %v723
    %v1105 = vpop.f32.mrb[0].mxu0
    %v1106 = vadd.f32 0.0, %v1105
    %v1107 = vpop.f32.mrb[0].mxu0
    %v1108 = vadd.f32 0.0, %v1107
    %1109 = vmatprep.mubr.f32.mxu0 0.0
    %1110 = vmatmul.mubr.f32.gmra.mrb[0].mxu0 %v726
    %v1111 = vpop.f32.mrb[0].mxu0
    %v1112 = vadd.f32 0.0, %v1111
    %v1113 = vpop.f32.mrb[0].mxu0
    %v1114 = vadd.f32 0.0, %v1113
    %1115 = vmatprep.mubr.f32.mxu0 0.0
    %1116 = vmatmul.mubr.f32.gmra.mrb[0].mxu0 %v729
    %v1117 = vpop.f32.mrb[0].mxu0
    %v1118 = vadd.f32 0.0, %v1117
    %v1119 = vpop.f32.mrb[0].mxu0
    %v1120 = vadd.f32 0.0, %v1119
    %1121 = vmatprep.mubr.f32.mxu0 0.0
    %1122 = vmatmul.mubr.f32.gmra.mrb[0].mxu0 %v732
    %v1123 = vpop.f32.mrb[0].mxu0
    %v1124 = vadd.f32 0.0, %v1123
    %v1125 = vpop.f32.mrb[0].mxu0
    %v1126 = vadd.f32 0.0, %v1125
    %1127 = vmatprep.mubr.f32.mxu0 0.0
    %1128 = vmatmul.mubr.f32.gmra.mrb[0].mxu0 %v735
    %v1129 = vpop.f32.mrb[0].mxu0
    %v1130 = vadd.f32 0.0, %v1129
    %v1131 = vpop.f32.mrb[0].mxu0
    %v1132 = vadd.f32 0.0, %v1131
    %1133 = vmatprep.mubr.f32.mxu0 0.0
    %1134 = vmatmul.mubr.f32.gmra.mrb[0].mxu0 %v738
    %v1135 = vpop.f32.mrb[0].mxu0
    %v1136 = vadd.f32 0.0, %v1135
    %v1137 = vpop.f32.mrb[0].mxu0
    %v1138 = vadd.f32 0.0, %v1137
    %1139 = vmatprep.mubr.f32.mxu0 0.0
    %1140 = vmatmul.mubr.f32.gmra.mrb[0].mxu0 %v741
    %v1141 = vpop.f32.mrb[0].mxu0
    %v1142 = vadd.f32 0.0, %v1141
    %v1143 = vpop.f32.mrb[0].mxu0
    %v1144 = vadd.f32 0.0, %v1143
    %1145 = vmatprep.mubr.f32.mxu0 0.0
    %1146 = vmatmul.mubr.f32.gmra.mrb[0].mxu0 %v744
    %v1147 = vpop.f32.mrb[0].mxu0
    %v1148 = vadd.f32 0.0, %v1147
    %v1149 = vpop.f32.mrb[0].mxu0
    %v1150 = vadd.f32 0.0, %v1149
    %1151 = vmatprep.mubr.f32.mxu0 0.0
    %1152 = vmatmul.mubr.f32.gmra.mrb[0].mxu0 %v747
    %v1153 = vpop.f32.mrb[0].mxu0
    %v1154 = vadd.f32 0.0, %v1153
    %v1155 = vpop.f32.mrb[0].mxu0
    %v1156 = vadd.f32 0.0, %v1155
    %1157 = vmatprep.mubr.f32.mxu0 0.0
    %1158 = vmatmul.mubr.f32.gmra.mrb[0].mxu0 %v750
    %v1159 = vpop.f32.mrb[0].mxu0
    %v1160 = vadd.f32 0.0, %v1159
    %v1161 = vpop.f32.mrb[0].mxu0
    %v1162 = vadd.f32 0.0, %v1161
    %1163 = vmatprep.mubr.f32.mxu0 0.0
    %1164 = vmatmul.mubr.f32.gmra.mrb[0].mxu0 %v753
    %v1165 = vpop.f32.mrb[0].mxu0
    %v1166 = vadd.f32 0.0, %v1165
    %v1167 = vpop.f32.mrb[0].mxu0
    %v1168 = vadd.f32 0.0, %v1167
    %1169 = vmatprep.mubr.f32.mxu0 0.0
    %1170 = vmatmul.mubr.f32.gmra.mrb[0].mxu0 %v756
    %v1171 = vpop.f32.mrb[0].mxu0
    %v1172 = vadd.f32 0.0, %v1171
    %v1173 = vpop.f32.mrb[0].mxu0
    %v1174 = vadd.f32 0.0, %v1173
    %1175 = vmatprep.mubr.f32.mxu0 0.0
    %1176 = vmatmul.mubr.f32.gmra.mrb[0].mxu0 %v759
    %v1177 = vpop.f32.mrb[0].mxu0
    %v1178 = vadd.f32 0.0, %v1177
    %v1179 = vpop.f32.mrb[0].mxu0
    %v1180 = vadd.f32 0.0, %v1179
    %1181 = vmatprep.mubr.f32.mxu0 0.0
    %1182 = vmatmul.mubr.f32.gmra.mrb[0].mxu0 %v762
    %v1183 = vpop.f32.mrb[0].mxu0
    %v1184 = vadd.f32 0.0, %v1183
    %v1185 = vpop.f32.mrb[0].mxu0
    %v1186 = vadd.f32 0.0, %v1185
    %1187 = vmatprep.mubr.f32.mxu0 0.0
    %1188 = vmatmul.mubr.f32.gmra.mrb[0].mxu0 %v765
    %v1189 = vpop.f32.mrb[0].mxu0
    %v1190 = vadd.f32 0.0, %v1189
    %v1191 = vpop.f32.mrb[0].mxu0
    %v1192 = vadd.f32 0.0, %v1191
    %1193 = vmatprep.mubr.f32.mxu0 0.0
    %1194 = vmatmul.mubr.f32.gmra.mrb[0].mxu0 %v768
    %v1195 = vpop.f32.mrb[0].mxu0
    %v1196 = vadd.f32 0.0, %v1195
    %v1197 = vpop.f32.mrb[0].mxu0
    %v1198 = vadd.f32 0.0, %v1197
    %1199 = vdwg.mxu0
    %1200 = vmatprep.subr.mxu0 %v603
    %1201 = vmatpush1.msra.mxu0 %v602
    %1202 = vmatprep.subr.mxu0 %v615
    %1203 = vmatpush1.msra.mxu0 %v614
    %1204 = vmatprep.subr.mxu0 %v627
    %1205 = vmatpush1.msra.mxu0 %v626
    %1206 = vmatprep.subr.mxu0 %v639
    %1207 = vmatpush1.msra.mxu0 %v638
    %1208 = vmatprep.subr.mxu0 %v651
    %1209 = vmatpush1.msra.mxu0 %v650
    %1210 = vmatprep.subr.mxu0 %v663
    %1211 = vmatpush1.msra.mxu0 %v662
    %1212 = vmatprep.subr.mxu0 %v675
    %1213 = vmatpush1.msra.mxu0 %v674
    %1214 = vmatprep.subr.mxu0 %v687
    %1215 = vmatpush1.msra.mxu0 %v686
    %1216 = vmatprep.subr.mxu0 0.0
    %1217 = vmatpush1.msra.mxu0 0.0
    %1218 = vmatprep.subr.mxu0 0.0
    %1219 = vmatpush1.msra.mxu0 0.0
    %1220 = vmatprep.subr.mxu0 0.0
    %1221 = vmatpush1.msra.mxu0 0.0
    %1222 = vmatprep.subr.mxu0 0.0
    %1223 = vmatpush1.msra.mxu0 0.0
    %1224 = vmatprep.subr.mxu0 0.0
    %1225 = vmatpush1.msra.mxu0 0.0
    %1226 = vmatprep.subr.mxu0 0.0
    %1227 = vmatpush1.msra.mxu0 0.0
    %1228 = vmatprep.subr.mxu0 0.0
    %1229 = vmatpush1.msra.mxu0 0.0
    %1230 = vmatprep.subr.mxu0 0.0
    %1231 = vmatpush1.msra.mxu0 0.0
    %1232 = vmatprep.subr.mxu0 0.0
    %1233 = vmatpush1.msra.mxu0 0.0
    %1234 = vmatprep.subr.mxu0 0.0
    %1235 = vmatpush1.msra.mxu0 0.0
    %1236 = vmatprep.subr.mxu0 0.0
    %1237 = vmatpush1.msra.mxu0 0.0
    %1238 = vmatprep.subr.mxu0 0.0
    %1239 = vmatpush1.msra.mxu0 0.0
    %1240 = vmatprep.subr.mxu0 0.0
    %1241 = vmatpush1.msra.mxu0 0.0
    %1242 = vmatprep.subr.mxu0 0.0
    %1243 = vmatpush1.msra.mxu0 0.0
    %1244 = vmatprep.subr.mxu0 0.0
    %1245 = vmatpush1.msra.mxu0 0.0
    %1246 = vmatprep.subr.mxu0 0.0
    %1247 = vmatpush1.msra.mxu0 0.0
    %1248 = vmatprep.subr.mxu0 0.0
    %1249 = vmatpush1.msra.mxu0 0.0
    %1250 = vmatprep.subr.mxu0 0.0
    %1251 = vmatpush1.msra.mxu0 0.0
    %1252 = vmatprep.subr.mxu0 0.0
    %1253 = vmatpush1.msra.mxu0 0.0
    %1254 = vmatprep.subr.mxu0 0.0
    %1255 = vmatpush1.msra.mxu0 0.0
    %1256 = vmatprep.subr.mxu0 0.0
    %1257 = vmatpush1.msra.mxu0 0.0
    %1258 = vmatprep.subr.mxu0 0.0
    %1259 = vmatpush1.msra.mxu0 0.0
    %1260 = vmatprep.subr.mxu0 0.0
    %1261 = vmatpush1.msra.mxu0 0.0
    %1262 = vmatprep.subr.mxu0 0.0
    %1263 = vmatpush1.msra.mxu0 0.0
    %1264 = vmatprep.mubr.f32.mxu0 0.0
    %1265 = vmatmul.mubr.f32.gmra.mrb[0].mxu0 %v696
    %v1266 = vpop.f32.mrb[0].mxu0
    %v1267 = vadd.f32 0.0, %v1266
    %v1268 = vpop.f32.mrb[0].mxu0
    %v1269 = vadd.f32 0.0, %v1268
    %1270 = vmatprep.mubr.f32.mxu0 0.0
    %1271 = vmatmul.mubr.f32.gmra.mrb[0].mxu0 %v699
    %v1272 = vpop.f32.mrb[0].mxu0
    %v1273 = vadd.f32 0.0, %v1272
    %v1274 = vpop.f32.mrb[0].mxu0
    %v1275 = vadd.f32 0.0, %v1274
    %1276 = vmatprep.mubr.f32.mxu0 0.0
    %1277 = vmatmul.mubr.f32.gmra.mrb[0].mxu0 %v702
    %v1278 = vpop.f32.mrb[0].mxu0
    %v1279 = vadd.f32 0.0, %v1278
    %v1280 = vpop.f32.mrb[0].mxu0
    %v1281 = vadd.f32 0.0, %v1280
    %1282 = vmatprep.mubr.f32.mxu0 0.0
    %1283 = vmatmul.mubr.f32.gmra.mrb[0].mxu0 %v705
    %v1284 = vpop.f32.mrb[0].mxu0
    %v1285 = vadd.f32 0.0, %v1284
    %v1286 = vpop.f32.mrb[0].mxu0
    %v1287 = vadd.f32 0.0, %v1286
    %1288 = vmatprep.mubr.f32.mxu0 0.0
    %1289 = vmatmul.mubr.f32.gmra.mrb[0].mxu0 %v708
    %v1290 = vpop.f32.mrb[0].mxu0
    %v1291 = vadd.f32 0.0, %v1290
    %v1292 = vpop.f32.mrb[0].mxu0
    %v1293 = vadd.f32 0.0, %v1292
    %1294 = vmatprep.mubr.f32.mxu0 0.0
    %1295 = vmatmul.mubr.f32.gmra.mrb[0].mxu0 %v711
    %v1296 = vpop.f32.mrb[0].mxu0
    %v1297 = vadd.f32 0.0, %v1296
    %v1298 = vpop.f32.mrb[0].mxu0
    %v1299 = vadd.f32 0.0, %v1298
    %1300 = vmatprep.mubr.f32.mxu0 0.0
    %1301 = vmatmul.mubr.f32.gmra.mrb[0].mxu0 %v714
    %v1302 = vpop.f32.mrb[0].mxu0
    %v1303 = vadd.f32 0.0, %v1302
    %v1304 = vpop.f32.mrb[0].mxu0
    %v1305 = vadd.f32 0.0, %v1304
    %1306 = vmatprep.mubr.f32.mxu0 0.0
    %1307 = vmatmul.mubr.f32.gmra.mrb[0].mxu0 %v717
    %v1308 = vpop.f32.mrb[0].mxu0
    %v1309 = vadd.f32 0.0, %v1308
    %v1310 = vpop.f32.mrb[0].mxu0
    %v1311 = vadd.f32 0.0, %v1310
    %1312 = vmatprep.mubr.f32.mxu0 0.0
    %1313 = vmatmul.mubr.f32.gmra.mrb[0].mxu0 %v720
    %v1314 = vpop.f32.mrb[0].mxu0
    %v1315 = vadd.f32 0.0, %v1314
    %v1316 = vpop.f32.mrb[0].mxu0
    %v1317 = vadd.f32 0.0, %v1316
    %1318 = vmatprep.mubr.f32.mxu0 0.0
    %1319 = vmatmul.mubr.f32.gmra.mrb[0].mxu0 %v723
    %v1320 = vpop.f32.mrb[0].mxu0
    %v1321 = vadd.f32 0.0, %v1320
    %v1322 = vpop.f32.mrb[0].mxu0
    %v1323 = vadd.f32 0.0, %v1322
    %1324 = vmatprep.mubr.f32.mxu0 0.0
    %1325 = vmatmul.mubr.f32.gmra.mrb[0].mxu0 %v726
    %v1326 = vpop.f32.mrb[0].mxu0
    %v1327 = vadd.f32 0.0, %v1326
    %v1328 = vpop.f32.mrb[0].mxu0
    %v1329 = vadd.f32 0.0, %v1328
    %1330 = vmatprep.mubr.f32.mxu0 0.0
    %1331 = vmatmul.mubr.f32.gmra.mrb[0].mxu0 %v729
    %v1332 = vpop.f32.mrb[0].mxu0
    %v1333 = vadd.f32 0.0, %v1332
    %v1334 = vpop.f32.mrb[0].mxu0
    %v1335 = vadd.f32 0.0, %v1334
    %1336 = vmatprep.mubr.f32.mxu0 0.0
    %1337 = vmatmul.mubr.f32.gmra.mrb[0].mxu0 %v732
    %v1338 = vpop.f32.mrb[0].mxu0
    %v1339 = vadd.f32 0.0, %v1338
    %v1340 = vpop.f32.mrb[0].mxu0
    %v1341 = vadd.f32 0.0, %v1340
    %1342 = vmatprep.mubr.f32.mxu0 0.0
    %1343 = vmatmul.mubr.f32.gmra.mrb[0].mxu0 %v735
    %v1344 = vpop.f32.mrb[0].mxu0
    %v1345 = vadd.f32 0.0, %v1344
    %v1346 = vpop.f32.mrb[0].mxu0
    %v1347 = vadd.f32 0.0, %v1346
    %1348 = vmatprep.mubr.f32.mxu0 0.0
    %1349 = vmatmul.mubr.f32.gmra.mrb[0].mxu0 %v738
    %v1350 = vpop.f32.mrb[0].mxu0
    %v1351 = vadd.f32 0.0, %v1350
    %v1352 = vpop.f32.mrb[0].mxu0
    %v1353 = vadd.f32 0.0, %v1352
    %1354 = vmatprep.mubr.f32.mxu0 0.0
    %1355 = vmatmul.mubr.f32.gmra.mrb[0].mxu0 %v741
    %v1356 = vpop.f32.mrb[0].mxu0
    %v1357 = vadd.f32 0.0, %v1356
    %v1358 = vpop.f32.mrb[0].mxu0
    %v1359 = vadd.f32 0.0, %v1358
    %1360 = vmatprep.mubr.f32.mxu0 0.0
    %1361 = vmatmul.mubr.f32.gmra.mrb[0].mxu0 %v744
    %v1362 = vpop.f32.mrb[0].mxu0
    %v1363 = vadd.f32 0.0, %v1362
    %v1364 = vpop.f32.mrb[0].mxu0
    %v1365 = vadd.f32 0.0, %v1364
    %1366 = vmatprep.mubr.f32.mxu0 0.0
    %1367 = vmatmul.mubr.f32.gmra.mrb[0].mxu0 %v747
    %v1368 = vpop.f32.mrb[0].mxu0
    %v1369 = vadd.f32 0.0, %v1368
    %v1370 = vpop.f32.mrb[0].mxu0
    %v1371 = vadd.f32 0.0, %v1370
    %1372 = vmatprep.mubr.f32.mxu0 0.0
    %1373 = vmatmul.mubr.f32.gmra.mrb[0].mxu0 %v750
    %v1374 = vpop.f32.mrb[0].mxu0
    %v1375 = vadd.f32 0.0, %v1374
    %v1376 = vpop.f32.mrb[0].mxu0
    %v1377 = vadd.f32 0.0, %v1376
    %1378 = vmatprep.mubr.f32.mxu0 0.0
    %1379 = vmatmul.mubr.f32.gmra.mrb[0].mxu0 %v753
    %v1380 = vpop.f32.mrb[0].mxu0
    %v1381 = vadd.f32 0.0, %v1380
    %v1382 = vpop.f32.mrb[0].mxu0
    %v1383 = vadd.f32 0.0, %v1382
    %1384 = vmatprep.mubr.f32.mxu0 0.0
    %1385 = vmatmul.mubr.f32.gmra.mrb[0].mxu0 %v756
    %v1386 = vpop.f32.mrb[0].mxu0
    %v1387 = vadd.f32 0.0, %v1386
    %v1388 = vpop.f32.mrb[0].mxu0
    %v1389 = vadd.f32 0.0, %v1388
    %1390 = vmatprep.mubr.f32.mxu0 0.0
    %1391 = vmatmul.mubr.f32.gmra.mrb[0].mxu0 %v759
    %v1392 = vpop.f32.mrb[0].mxu0
    %v1393 = vadd.f32 0.0, %v1392
    %v1394 = vpop.f32.mrb[0].mxu0
    %v1395 = vadd.f32 0.0, %v1394
    %1396 = vmatprep.mubr.f32.mxu0 0.0
    %1397 = vmatmul.mubr.f32.gmra.mrb[0].mxu0 %v762
    %v1398 = vpop.f32.mrb[0].mxu0
    %v1399 = vadd.f32 0.0, %v1398
    %v1400 = vpop.f32.mrb[0].mxu0
    %v1401 = vadd.f32 0.0, %v1400
    %1402 = vmatprep.mubr.f32.mxu0 0.0
    %1403 = vmatmul.mubr.f32.gmra.mrb[0].mxu0 %v765
    %v1404 = vpop.f32.mrb[0].mxu0
    %v1405 = vadd.f32 0.0, %v1404
    %v1406 = vpop.f32.mrb[0].mxu0
    %v1407 = vadd.f32 0.0, %v1406
    %1408 = vmatprep.mubr.f32.mxu0 0.0
    %1409 = vmatmul.mubr.f32.gmra.mrb[0].mxu0 %v768
    %v1410 = vpop.f32.mrb[0].mxu0
    %v1411 = vadd.f32 0.0, %v1410
    %v1412 = vpop.f32.mrb[0].mxu0
    %v1413 = vadd.f32 0.0, %v1412
    %1414 = vdwg.mxu0
    %1415 = vmatprep.subr.mxu0 %v605
    %1416 = vmatpush1.msra.mxu0 %v604
    %1417 = vmatprep.subr.mxu0 %v617
    %1418 = vmatpush1.msra.mxu0 %v616
    %1419 = vmatprep.subr.mxu0 %v629
    %1420 = vmatpush1.msra.mxu0 %v628
    %1421 = vmatprep.subr.mxu0 %v641
    %1422 = vmatpush1.msra.mxu0 %v640
    %1423 = vmatprep.subr.mxu0 %v653
    %1424 = vmatpush1.msra.mxu0 %v652
    %1425 = vmatprep.subr.mxu0 %v665
    %1426 = vmatpush1.msra.mxu0 %v664
    %1427 = vmatprep.subr.mxu0 %v677
    %1428 = vmatpush1.msra.mxu0 %v676
    %1429 = vmatprep.subr.mxu0 %v689
    %1430 = vmatpush1.msra.mxu0 %v688
    %1431 = vmatprep.subr.mxu0 0.0
    %1432 = vmatpush1.msra.mxu0 0.0
    %1433 = vmatprep.subr.mxu0 0.0
    %1434 = vmatpush1.msra.mxu0 0.0
    %1435 = vmatprep.subr.mxu0 0.0
    %1436 = vmatpush1.msra.mxu0 0.0
    %1437 = vmatprep.subr.mxu0 0.0
    %1438 = vmatpush1.msra.mxu0 0.0
    %1439 = vmatprep.subr.mxu0 0.0
    %1440 = vmatpush1.msra.mxu0 0.0
    %1441 = vmatprep.subr.mxu0 0.0
    %1442 = vmatpush1.msra.mxu0 0.0
    %1443 = vmatprep.subr.mxu0 0.0
    %1444 = vmatpush1.msra.mxu0 0.0
    %1445 = vmatprep.subr.mxu0 0.0
    %1446 = vmatpush1.msra.mxu0 0.0
    %1447 = vmatprep.subr.mxu0 0.0
    %1448 = vmatpush1.msra.mxu0 0.0
    %1449 = vmatprep.subr.mxu0 0.0
    %1450 = vmatpush1.msra.mxu0 0.0
    %1451 = vmatprep.subr.mxu0 0.0
    %1452 = vmatpush1.msra.mxu0 0.0
    %1453 = vmatprep.subr.mxu0 0.0
    %1454 = vmatpush1.msra.mxu0 0.0
    %1455 = vmatprep.subr.mxu0 0.0
    %1456 = vmatpush1.msra.mxu0 0.0
    %1457 = vmatprep.subr.mxu0 0.0
    %1458 = vmatpush1.msra.mxu0 0.0
    %1459 = vmatprep.subr.mxu0 0.0
    %1460 = vmatpush1.msra.mxu0 0.0
    %1461 = vmatprep.subr.mxu0 0.0
    %1462 = vmatpush1.msra.mxu0 0.0
    %1463 = vmatprep.subr.mxu0 0.0
    %1464 = vmatpush1.msra.mxu0 0.0
    %1465 = vmatprep.subr.mxu0 0.0
    %1466 = vmatpush1.msra.mxu0 0.0
    %1467 = vmatprep.subr.mxu0 0.0
    %1468 = vmatpush1.msra.mxu0 0.0
    %1469 = vmatprep.subr.mxu0 0.0
    %1470 = vmatpush1.msra.mxu0 0.0
    %1471 = vmatprep.subr.mxu0 0.0
    %1472 = vmatpush1.msra.mxu0 0.0
    %1473 = vmatprep.subr.mxu0 0.0
    %1474 = vmatpush1.msra.mxu0 0.0
    %1475 = vmatprep.subr.mxu0 0.0
    %1476 = vmatpush1.msra.mxu0 0.0
    %1477 = vmatprep.subr.mxu0 0.0
    %1478 = vmatpush1.msra.mxu0 0.0
    %1479 = vmatprep.mubr.f32.mxu0 0.0
    %1480 = vmatmul.mubr.f32.gmra.mrb[0].mxu0 %v696
    %v1481 = vpop.f32.mrb[0].mxu0
    %v1482 = vadd.f32 0.0, %v1481
    %v1483 = vpop.f32.mrb[0].mxu0
    %v1484 = vadd.f32 0.0, %v1483
    %1485 = vmatprep.mubr.f32.mxu0 0.0
    %1486 = vmatmul.mubr.f32.gmra.mrb[0].mxu0 %v699
    %v1487 = vpop.f32.mrb[0].mxu0
    %v1488 = vadd.f32 0.0, %v1487
    %v1489 = vpop.f32.mrb[0].mxu0
    %v1490 = vadd.f32 0.0, %v1489
    %1491 = vmatprep.mubr.f32.mxu0 0.0
    %1492 = vmatmul.mubr.f32.gmra.mrb[0].mxu0 %v702
    %v1493 = vpop.f32.mrb[0].mxu0
    %v1494 = vadd.f32 0.0, %v1493
    %v1495 = vpop.f32.mrb[0].mxu0
    %v1496 = vadd.f32 0.0, %v1495
    %1497 = vmatprep.mubr.f32.mxu0 0.0
    %1498 = vmatmul.mubr.f32.gmra.mrb[0].mxu0 %v705
    %v1499 = vpop.f32.mrb[0].mxu0
    %v1500 = vadd.f32 0.0, %v1499
    %v1501 = vpop.f32.mrb[0].mxu0
    %v1502 = vadd.f32 0.0, %v1501
    %1503 = vmatprep.mubr.f32.mxu0 0.0
    %1504 = vmatmul.mubr.f32.gmra.mrb[0].mxu0 %v708
    %v1505 = vpop.f32.mrb[0].mxu0
    %v1506 = vadd.f32 0.0, %v1505
    %v1507 = vpop.f32.mrb[0].mxu0
    %v1508 = vadd.f32 0.0, %v1507
    %1509 = vmatprep.mubr.f32.mxu0 0.0
    %1510 = vmatmul.mubr.f32.gmra.mrb[0].mxu0 %v711
    %v1511 = vpop.f32.mrb[0].mxu0
    %v1512 = vadd.f32 0.0, %v1511
    %v1513 = vpop.f32.mrb[0].mxu0
    %v1514 = vadd.f32 0.0, %v1513
    %1515 = vmatprep.mubr.f32.mxu0 0.0
    %1516 = vmatmul.mubr.f32.gmra.mrb[0].mxu0 %v714
    %v1517 = vpop.f32.mrb[0].mxu0
    %v1518 = vadd.f32 0.0, %v1517
    %v1519 = vpop.f32.mrb[0].mxu0
    %v1520 = vadd.f32 0.0, %v1519
    %1521 = vmatprep.mubr.f32.mxu0 0.0
    %1522 = vmatmul.mubr.f32.gmra.mrb[0].mxu0 %v717
    %v1523 = vpop.f32.mrb[0].mxu0
    %v1524 = vadd.f32 0.0, %v1523
    %v1525 = vpop.f32.mrb[0].mxu0
    %v1526 = vadd.f32 0.0, %v1525
    %1527 = vmatprep.mubr.f32.mxu0 0.0
    %1528 = vmatmul.mubr.f32.gmra.mrb[0].mxu0 %v720
    %v1529 = vpop.f32.mrb[0].mxu0
    %v1530 = vadd.f32 0.0, %v1529
    %v1531 = vpop.f32.mrb[0].mxu0
    %v1532 = vadd.f32 0.0, %v1531
    %1533 = vmatprep.mubr.f32.mxu0 0.0
    %1534 = vmatmul.mubr.f32.gmra.mrb[0].mxu0 %v723
    %v1535 = vpop.f32.mrb[0].mxu0
    %v1536 = vadd.f32 0.0, %v1535
    %v1537 = vpop.f32.mrb[0].mxu0
    %v1538 = vadd.f32 0.0, %v1537
    %1539 = vmatprep.mubr.f32.mxu0 0.0
    %1540 = vmatmul.mubr.f32.gmra.mrb[0].mxu0 %v726
    %v1541 = vpop.f32.mrb[0].mxu0
    %v1542 = vadd.f32 0.0, %v1541
    %v1543 = vpop.f32.mrb[0].mxu0
    %v1544 = vadd.f32 0.0, %v1543
    %1545 = vmatprep.mubr.f32.mxu0 0.0
    %1546 = vmatmul.mubr.f32.gmra.mrb[0].mxu0 %v729
    %v1547 = vpop.f32.mrb[0].mxu0
    %v1548 = vadd.f32 0.0, %v1547
    %v1549 = vpop.f32.mrb[0].mxu0
    %v1550 = vadd.f32 0.0, %v1549
    %1551 = vmatprep.mubr.f32.mxu0 0.0
    %1552 = vmatmul.mubr.f32.gmra.mrb[0].mxu0 %v732
    %v1553 = vpop.f32.mrb[0].mxu0
    %v1554 = vadd.f32 0.0, %v1553
    %v1555 = vpop.f32.mrb[0].mxu0
    %v1556 = vadd.f32 0.0, %v1555
    %1557 = vmatprep.mubr.f32.mxu0 0.0
    %1558 = vmatmul.mubr.f32.gmra.mrb[0].mxu0 %v735
    %v1559 = vpop.f32.mrb[0].mxu0
    %v1560 = vadd.f32 0.0, %v1559
    %v1561 = vpop.f32.mrb[0].mxu0
    %v1562 = vadd.f32 0.0, %v1561
    %1563 = vmatprep.mubr.f32.mxu0 0.0
    %1564 = vmatmul.mubr.f32.gmra.mrb[0].mxu0 %v738
    %v1565 = vpop.f32.mrb[0].mxu0
    %v1566 = vadd.f32 0.0, %v1565
    %v1567 = vpop.f32.mrb[0].mxu0
    %v1568 = vadd.f32 0.0, %v1567
    %1569 = vmatprep.mubr.f32.mxu0 0.0
    %1570 = vmatmul.mubr.f32.gmra.mrb[0].mxu0 %v741
    %v1571 = vpop.f32.mrb[0].mxu0
    %v1572 = vadd.f32 0.0, %v1571
    %v1573 = vpop.f32.mrb[0].mxu0
    %v1574 = vadd.f32 0.0, %v1573
    %1575 = vmatprep.mubr.f32.mxu0 0.0
    %1576 = vmatmul.mubr.f32.gmra.mrb[0].mxu0 %v744
    %v1577 = vpop.f32.mrb[0].mxu0
    %v1578 = vadd.f32 0.0, %v1577
    %v1579 = vpop.f32.mrb[0].mxu0
    %v1580 = vadd.f32 0.0, %v1579
    %1581 = vmatprep.mubr.f32.mxu0 0.0
    %1582 = vmatmul.mubr.f32.gmra.mrb[0].mxu0 %v747
    %v1583 = vpop.f32.mrb[0].mxu0
    %v1584 = vadd.f32 0.0, %v1583
    %v1585 = vpop.f32.mrb[0].mxu0
    %v1586 = vadd.f32 0.0, %v1585
    %1587 = vmatprep.mubr.f32.mxu0 0.0
    %1588 = vmatmul.mubr.f32.gmra.mrb[0].mxu0 %v750
    %v1589 = vpop.f32.mrb[0].mxu0
    %v1590 = vadd.f32 0.0, %v1589
    %v1591 = vpop.f32.mrb[0].mxu0
    %v1592 = vadd.f32 0.0, %v1591
    %1593 = vmatprep.mubr.f32.mxu0 0.0
    %1594 = vmatmul.mubr.f32.gmra.mrb[0].mxu0 %v753
    %v1595 = vpop.f32.mrb[0].mxu0
    %v1596 = vadd.f32 0.0, %v1595
    %v1597 = vpop.f32.mrb[0].mxu0
    %v1598 = vadd.f32 0.0, %v1597
    %1599 = vmatprep.mubr.f32.mxu0 0.0
    %1600 = vmatmul.mubr.f32.gmra.mrb[0].mxu0 %v756
    %v1601 = vpop.f32.mrb[0].mxu0
    %v1602 = vadd.f32 0.0, %v1601
    %v1603 = vpop.f32.mrb[0].mxu0
    %v1604 = vadd.f32 0.0, %v1603
    %1605 = vmatprep.mubr.f32.mxu0 0.0
    %1606 = vmatmul.mubr.f32.gmra.mrb[0].mxu0 %v759
    %v1607 = vpop.f32.mrb[0].mxu0
    %v1608 = vadd.f32 0.0, %v1607
    %v1609 = vpop.f32.mrb[0].mxu0
    %v1610 = vadd.f32 0.0, %v1609
    %1611 = vmatprep.mubr.f32.mxu0 0.0
    %1612 = vmatmul.mubr.f32.gmra.mrb[0].mxu0 %v762
    %v1613 = vpop.f32.mrb[0].mxu0
    %v1614 = vadd.f32 0.0, %v1613
    %v1615 = vpop.f32.mrb[0].mxu0
    %v1616 = vadd.f32 0.0, %v1615
    %1617 = vmatprep.mubr.f32.mxu0 0.0
    %1618 = vmatmul.mubr.f32.gmra.mrb[0].mxu0 %v765
    %v1619 = vpop.f32.mrb[0].mxu0
    %v1620 = vadd.f32 0.0, %v1619
    %v1621 = vpop.f32.mrb[0].mxu0
    %v1622 = vadd.f32 0.0, %v1621
    %1623 = vmatprep.mubr.f32.mxu0 0.0
    %1624 = vmatmul.mubr.f32.gmra.mrb[0].mxu0 %v768
    %v1625 = vpop.f32.mrb[0].mxu0
    %v1626 = vadd.f32 0.0, %v1625
    %v1627 = vpop.f32.mrb[0].mxu0
    %v1628 = vadd.f32 0.0, %v1627
    %1629 = vdwg.mxu0
    %1630 = vmatprep.subr.mxu0 %v607
    %1631 = vmatpush1.msra.mxu0 %v606
    %1632 = vmatprep.subr.mxu0 %v619
    %1633 = vmatpush1.msra.mxu0 %v618
    %1634 = vmatprep.subr.mxu0 %v631
    %1635 = vmatpush1.msra.mxu0 %v630
    %1636 = vmatprep.subr.mxu0 %v643
    %1637 = vmatpush1.msra.mxu0 %v642
    %1638 = vmatprep.subr.mxu0 %v655
    %1639 = vmatpush1.msra.mxu0 %v654
    %1640 = vmatprep.subr.mxu0 %v667
    %1641 = vmatpush1.msra.mxu0 %v666
    %1642 = vmatprep.subr.mxu0 %v679
    %1643 = vmatpush1.msra.mxu0 %v678
    %1644 = vmatprep.subr.mxu0 %v691
    %1645 = vmatpush1.msra.mxu0 %v690
    %1646 = vmatprep.subr.mxu0 0.0
    %1647 = vmatpush1.msra.mxu0 0.0
    %1648 = vmatprep.subr.mxu0 0.0
    %1649 = vmatpush1.msra.mxu0 0.0
    %1650 = vmatprep.subr.mxu0 0.0
    %1651 = vmatpush1.msra.mxu0 0.0
    %1652 = vmatprep.subr.mxu0 0.0
    %1653 = vmatpush1.msra.mxu0 0.0
    %1654 = vmatprep.subr.mxu0 0.0
    %1655 = vmatpush1.msra.mxu0 0.0
    %1656 = vmatprep.subr.mxu0 0.0
    %1657 = vmatpush1.msra.mxu0 0.0
    %1658 = vmatprep.subr.mxu0 0.0
    %1659 = vmatpush1.msra.mxu0 0.0
    %1660 = vmatprep.subr.mxu0 0.0
    %1661 = vmatpush1.msra.mxu0 0.0
    %1662 = vmatprep.subr.mxu0 0.0
    %1663 = vmatpush1.msra.mxu0 0.0
    %1664 = vmatprep.subr.mxu0 0.0
    %1665 = vmatpush1.msra.mxu0 0.0
    %1666 = vmatprep.subr.mxu0 0.0
    %1667 = vmatpush1.msra.mxu0 0.0
    %1668 = vmatprep.subr.mxu0 0.0
    %1669 = vmatpush1.msra.mxu0 0.0
    %1670 = vmatprep.subr.mxu0 0.0
    %1671 = vmatpush1.msra.mxu0 0.0
    %1672 = vmatprep.subr.mxu0 0.0
    %1673 = vmatpush1.msra.mxu0 0.0
    %1674 = vmatprep.subr.mxu0 0.0
    %1675 = vmatpush1.msra.mxu0 0.0
    %1676 = vmatprep.subr.mxu0 0.0
    %1677 = vmatpush1.msra.mxu0 0.0
    %1678 = vmatprep.subr.mxu0 0.0
    %1679 = vmatpush1.msra.mxu0 0.0
    %1680 = vmatprep.subr.mxu0 0.0
    %1681 = vmatpush1.msra.mxu0 0.0
    %1682 = vmatprep.subr.mxu0 0.0
    %1683 = vmatpush1.msra.mxu0 0.0
    %1684 = vmatprep.subr.mxu0 0.0
    %1685 = vmatpush1.msra.mxu0 0.0
    %1686 = vmatprep.subr.mxu0 0.0
    %1687 = vmatpush1.msra.mxu0 0.0
    %1688 = vmatprep.subr.mxu0 0.0
    %1689 = vmatpush1.msra.mxu0 0.0
    %1690 = vmatprep.subr.mxu0 0.0
    %1691 = vmatpush1.msra.mxu0 0.0
    %1692 = vmatprep.subr.mxu0 0.0
    %1693 = vmatpush1.msra.mxu0 0.0
    %1694 = vmatprep.mubr.f32.mxu0 0.0
    %1695 = vmatmul.mubr.f32.gmra.mrb[0].mxu0 %v696
    %v1696 = vpop.f32.mrb[0].mxu0
    %v1697 = vadd.f32 0.0, %v1696
    %v1698 = vpop.f32.mrb[0].mxu0
    %v1699 = vadd.f32 0.0, %v1698
    %1700 = vmatprep.mubr.f32.mxu0 0.0
    %1701 = vmatmul.mubr.f32.gmra.mrb[0].mxu0 %v699
    %v1702 = vpop.f32.mrb[0].mxu0
    %v1703 = vadd.f32 0.0, %v1702
    %v1704 = vpop.f32.mrb[0].mxu0
    %v1705 = vadd.f32 0.0, %v1704
    %1706 = vmatprep.mubr.f32.mxu0 0.0
    %1707 = vmatmul.mubr.f32.gmra.mrb[0].mxu0 %v702
    %v1708 = vpop.f32.mrb[0].mxu0
    %v1709 = vadd.f32 0.0, %v1708
    %v1710 = vpop.f32.mrb[0].mxu0
    %v1711 = vadd.f32 0.0, %v1710
    %1712 = vmatprep.mubr.f32.mxu0 0.0
    %1713 = vmatmul.mubr.f32.gmra.mrb[0].mxu0 %v705
    %v1714 = vpop.f32.mrb[0].mxu0
    %v1715 = vadd.f32 0.0, %v1714
    %v1716 = vpop.f32.mrb[0].mxu0
    %v1717 = vadd.f32 0.0, %v1716
    %1718 = vmatprep.mubr.f32.mxu0 0.0
    %1719 = vmatmul.mubr.f32.gmra.mrb[0].mxu0 %v708
    %v1720 = vpop.f32.mrb[0].mxu0
    %v1721 = vadd.f32 0.0, %v1720
    %v1722 = vpop.f32.mrb[0].mxu0
    %v1723 = vadd.f32 0.0, %v1722
    %1724 = vmatprep.mubr.f32.mxu0 0.0
    %1725 = vmatmul.mubr.f32.gmra.mrb[0].mxu0 %v711
    %v1726 = vpop.f32.mrb[0].mxu0
    %v1727 = vadd.f32 0.0, %v1726
    %v1728 = vpop.f32.mrb[0].mxu0
    %v1729 = vadd.f32 0.0, %v1728
    %1730 = vmatprep.mubr.f32.mxu0 0.0
    %1731 = vmatmul.mubr.f32.gmra.mrb[0].mxu0 %v714
    %v1732 = vpop.f32.mrb[0].mxu0
    %v1733 = vadd.f32 0.0, %v1732
    %v1734 = vpop.f32.mrb[0].mxu0
    %v1735 = vadd.f32 0.0, %v1734
    %1736 = vmatprep.mubr.f32.mxu0 0.0
    %1737 = vmatmul.mubr.f32.gmra.mrb[0].mxu0 %v717
    %v1738 = vpop.f32.mrb[0].mxu0
    %v1739 = vadd.f32 0.0, %v1738
    %v1740 = vpop.f32.mrb[0].mxu0
    %v1741 = vadd.f32 0.0, %v1740
    %1742 = vmatprep.mubr.f32.mxu0 0.0
    %1743 = vmatmul.mubr.f32.gmra.mrb[0].mxu0 %v720
    %v1744 = vpop.f32.mrb[0].mxu0
    %v1745 = vadd.f32 0.0, %v1744
    %v1746 = vpop.f32.mrb[0].mxu0
    %v1747 = vadd.f32 0.0, %v1746
    %1748 = vmatprep.mubr.f32.mxu0 0.0
    %1749 = vmatmul.mubr.f32.gmra.mrb[0].mxu0 %v723
    %v1750 = vpop.f32.mrb[0].mxu0
    %v1751 = vadd.f32 0.0, %v1750
    %v1752 = vpop.f32.mrb[0].mxu0
    %v1753 = vadd.f32 0.0, %v1752
    %1754 = vmatprep.mubr.f32.mxu0 0.0
    %1755 = vmatmul.mubr.f32.gmra.mrb[0].mxu0 %v726
    %v1756 = vpop.f32.mrb[0].mxu0
    %v1757 = vadd.f32 0.0, %v1756
    %v1758 = vpop.f32.mrb[0].mxu0
    %v1759 = vadd.f32 0.0, %v1758
    %1760 = vmatprep.mubr.f32.mxu0 0.0
    %1761 = vmatmul.mubr.f32.gmra.mrb[0].mxu0 %v729
    %v1762 = vpop.f32.mrb[0].mxu0
    %v1763 = vadd.f32 0.0, %v1762
    %v1764 = vpop.f32.mrb[0].mxu0
    %v1765 = vadd.f32 0.0, %v1764
    %1766 = vmatprep.mubr.f32.mxu0 0.0
    %1767 = vmatmul.mubr.f32.gmra.mrb[0].mxu0 %v732
    %v1768 = vpop.f32.mrb[0].mxu0
    %v1769 = vadd.f32 0.0, %v1768
    %v1770 = vpop.f32.mrb[0].mxu0
    %v1771 = vadd.f32 0.0, %v1770
    %1772 = vmatprep.mubr.f32.mxu0 0.0
    %1773 = vmatmul.mubr.f32.gmra.mrb[0].mxu0 %v735
    %v1774 = vpop.f32.mrb[0].mxu0
    %v1775 = vadd.f32 0.0, %v1774
    %v1776 = vpop.f32.mrb[0].mxu0
    %v1777 = vadd.f32 0.0, %v1776
    %1778 = vmatprep.mubr.f32.mxu0 0.0
    %1779 = vmatmul.mubr.f32.gmra.mrb[0].mxu0 %v738
    %v1780 = vpop.f32.mrb[0].mxu0
    %v1781 = vadd.f32 0.0, %v1780
    %v1782 = vpop.f32.mrb[0].mxu0
    %v1783 = vadd.f32 0.0, %v1782
    %1784 = vmatprep.mubr.f32.mxu0 0.0
    %1785 = vmatmul.mubr.f32.gmra.mrb[0].mxu0 %v741
    %v1786 = vpop.f32.mrb[0].mxu0
    %v1787 = vadd.f32 0.0, %v1786
    %v1788 = vpop.f32.mrb[0].mxu0
    %v1789 = vadd.f32 0.0, %v1788
    %1790 = vmatprep.mubr.f32.mxu0 0.0
    %1791 = vmatmul.mubr.f32.gmra.mrb[0].mxu0 %v744
    %v1792 = vpop.f32.mrb[0].mxu0
    %v1793 = vadd.f32 0.0, %v1792
    %v1794 = vpop.f32.mrb[0].mxu0
    %v1795 = vadd.f32 0.0, %v1794
    %1796 = vmatprep.mubr.f32.mxu0 0.0
    %1797 = vmatmul.mubr.f32.gmra.mrb[0].mxu0 %v747
    %v1798 = vpop.f32.mrb[0].mxu0
    %v1799 = vadd.f32 0.0, %v1798
    %v1800 = vpop.f32.mrb[0].mxu0
    %v1801 = vadd.f32 0.0, %v1800
    %1802 = vmatprep.mubr.f32.mxu0 0.0
    %1803 = vmatmul.mubr.f32.gmra.mrb[0].mxu0 %v750
    %v1804 = vpop.f32.mrb[0].mxu0
    %v1805 = vadd.f32 0.0, %v1804
    %v1806 = vpop.f32.mrb[0].mxu0
    %v1807 = vadd.f32 0.0, %v1806
    %1808 = vmatprep.mubr.f32.mxu0 0.0
    %1809 = vmatmul.mubr.f32.gmra.mrb[0].mxu0 %v753
    %v1810 = vpop.f32.mrb[0].mxu0
    %v1811 = vadd.f32 0.0, %v1810
    %v1812 = vpop.f32.mrb[0].mxu0
    %v1813 = vadd.f32 0.0, %v1812
    %1814 = vmatprep.mubr.f32.mxu0 0.0
    %1815 = vmatmul.mubr.f32.gmra.mrb[0].mxu0 %v756
    %v1816 = vpop.f32.mrb[0].mxu0
    %v1817 = vadd.f32 0.0, %v1816
    %v1818 = vpop.f32.mrb[0].mxu0
    %v1819 = vadd.f32 0.0, %v1818
    %1820 = vmatprep.mubr.f32.mxu0 0.0
    %1821 = vmatmul.mubr.f32.gmra.mrb[0].mxu0 %v759
    %v1822 = vpop.f32.mrb[0].mxu0
    %v1823 = vadd.f32 0.0, %v1822
    %v1824 = vpop.f32.mrb[0].mxu0
    %v1825 = vadd.f32 0.0, %v1824
    %1826 = vmatprep.mubr.f32.mxu0 0.0
    %1827 = vmatmul.mubr.f32.gmra.mrb[0].mxu0 %v762
    %v1828 = vpop.f32.mrb[0].mxu0
    %v1829 = vadd.f32 0.0, %v1828
    %v1830 = vpop.f32.mrb[0].mxu0
    %v1831 = vadd.f32 0.0, %v1830
    %1832 = vmatprep.mubr.f32.mxu0 0.0
    %1833 = vmatmul.mubr.f32.gmra.mrb[0].mxu0 %v765
    %v1834 = vpop.f32.mrb[0].mxu0
    %v1835 = vadd.f32 0.0, %v1834
    %v1836 = vpop.f32.mrb[0].mxu0
    %v1837 = vadd.f32 0.0, %v1836
    %1838 = vmatprep.mubr.f32.mxu0 0.0
    %1839 = vmatmul.mubr.f32.gmra.mrb[0].mxu0 %v768
    %v1840 = vpop.f32.mrb[0].mxu0
    %v1841 = vadd.f32 0.0, %v1840
    %v1842 = vpop.f32.mrb[0].mxu0
    %v1843 = vadd.f32 0.0, %v1842
    %1844 = vdwg.mxu0
    %1845 = vmatprep.subr.mxu0 %v609
    %1846 = vmatpush1.msra.mxu0 %v608
    %1847 = vmatprep.subr.mxu0 %v621
    %1848 = vmatpush1.msra.mxu0 %v620
    %1849 = vmatprep.subr.mxu0 %v633
    %1850 = vmatpush1.msra.mxu0 %v632
    %1851 = vmatprep.subr.mxu0 %v645
    %1852 = vmatpush1.msra.mxu0 %v644
    %1853 = vmatprep.subr.mxu0 %v657
    %1854 = vmatpush1.msra.mxu0 %v656
    %1855 = vmatprep.subr.mxu0 %v669
    %1856 = vmatpush1.msra.mxu0 %v668
    %1857 = vmatprep.subr.mxu0 %v681
    %1858 = vmatpush1.msra.mxu0 %v680
    %1859 = vmatprep.subr.mxu0 %v693
    %1860 = vmatpush1.msra.mxu0 %v692
    %1861 = vmatprep.subr.mxu0 0.0
    %1862 = vmatpush1.msra.mxu0 0.0
    %1863 = vmatprep.subr.mxu0 0.0
    %1864 = vmatpush1.msra.mxu0 0.0
    %1865 = vmatprep.subr.mxu0 0.0
    %1866 = vmatpush1.msra.mxu0 0.0
    %1867 = vmatprep.subr.mxu0 0.0
    %1868 = vmatpush1.msra.mxu0 0.0
    %1869 = vmatprep.subr.mxu0 0.0
    %1870 = vmatpush1.msra.mxu0 0.0
    %1871 = vmatprep.subr.mxu0 0.0
    %1872 = vmatpush1.msra.mxu0 0.0
    %1873 = vmatprep.subr.mxu0 0.0
    %1874 = vmatpush1.msra.mxu0 0.0
    %1875 = vmatprep.subr.mxu0 0.0
    %1876 = vmatpush1.msra.mxu0 0.0
    %1877 = vmatprep.subr.mxu0 0.0
    %1878 = vmatpush1.msra.mxu0 0.0
    %1879 = vmatprep.subr.mxu0 0.0
    %1880 = vmatpush1.msra.mxu0 0.0
    %1881 = vmatprep.subr.mxu0 0.0
    %1882 = vmatpush1.msra.mxu0 0.0
    %1883 = vmatprep.subr.mxu0 0.0
    %1884 = vmatpush1.msra.mxu0 0.0
    %1885 = vmatprep.subr.mxu0 0.0
    %1886 = vmatpush1.msra.mxu0 0.0
    %1887 = vmatprep.subr.mxu0 0.0
    %1888 = vmatpush1.msra.mxu0 0.0
    %1889 = vmatprep.subr.mxu0 0.0
    %1890 = vmatpush1.msra.mxu0 0.0
    %1891 = vmatprep.subr.mxu0 0.0
    %1892 = vmatpush1.msra.mxu0 0.0
    %1893 = vmatprep.subr.mxu0 0.0
    %1894 = vmatpush1.msra.mxu0 0.0
    %1895 = vmatprep.subr.mxu0 0.0
    %1896 = vmatpush1.msra.mxu0 0.0
    %1897 = vmatprep.subr.mxu0 0.0
    %1898 = vmatpush1.msra.mxu0 0.0
    %1899 = vmatprep.subr.mxu0 0.0
    %1900 = vmatpush1.msra.mxu0 0.0
    %1901 = vmatprep.subr.mxu0 0.0
    %1902 = vmatpush1.msra.mxu0 0.0
    %1903 = vmatprep.subr.mxu0 0.0
    %1904 = vmatpush1.msra.mxu0 0.0
    %1905 = vmatprep.subr.mxu0 0.0
    %1906 = vmatpush1.msra.mxu0 0.0
    %1907 = vmatprep.subr.mxu0 0.0
    %1908 = vmatpush1.msra.mxu0 0.0
    %1909 = vmatprep.mubr.f32.mxu0 0.0
    %1910 = vmatmul.mubr.f32.gmra.mrb[0].mxu0 %v696
    %v1911 = vpop.f32.mrb[0].mxu0
    %v1912 = vadd.f32 0.0, %v1911
    %v1913 = vpop.f32.mrb[0].mxu0
    %v1914 = vadd.f32 0.0, %v1913
    %1915 = vmatprep.mubr.f32.mxu0 0.0
    %1916 = vmatmul.mubr.f32.gmra.mrb[0].mxu0 %v699
    %v1917 = vpop.f32.mrb[0].mxu0
    %v1918 = vadd.f32 0.0, %v1917
    %v1919 = vpop.f32.mrb[0].mxu0
    %v1920 = vadd.f32 0.0, %v1919
    %1921 = vmatprep.mubr.f32.mxu0 0.0
    %1922 = vmatmul.mubr.f32.gmra.mrb[0].mxu0 %v702
    %v1923 = vpop.f32.mrb[0].mxu0
    %v1924 = vadd.f32 0.0, %v1923
    %v1925 = vpop.f32.mrb[0].mxu0
    %v1926 = vadd.f32 0.0, %v1925
    %1927 = vmatprep.mubr.f32.mxu0 0.0
    %1928 = vmatmul.mubr.f32.gmra.mrb[0].mxu0 %v705
    %v1929 = vpop.f32.mrb[0].mxu0
    %v1930 = vadd.f32 0.0, %v1929
    %v1931 = vpop.f32.mrb[0].mxu0
    %v1932 = vadd.f32 0.0, %v1931
    %1933 = vmatprep.mubr.f32.mxu0 0.0
    %1934 = vmatmul.mubr.f32.gmra.mrb[0].mxu0 %v708
    %v1935 = vpop.f32.mrb[0].mxu0
    %v1936 = vadd.f32 0.0, %v1935
    %v1937 = vpop.f32.mrb[0].mxu0
    %v1938 = vadd.f32 0.0, %v1937
    %1939 = vmatprep.mubr.f32.mxu0 0.0
    %1940 = vmatmul.mubr.f32.gmra.mrb[0].mxu0 %v711
    %v1941 = vpop.f32.mrb[0].mxu0
    %v1942 = vadd.f32 0.0, %v1941
    %v1943 = vpop.f32.mrb[0].mxu0
    %v1944 = vadd.f32 0.0, %v1943
    %1945 = vmatprep.mubr.f32.mxu0 0.0
    %1946 = vmatmul.mubr.f32.gmra.mrb[0].mxu0 %v714
    %v1947 = vpop.f32.mrb[0].mxu0
    %v1948 = vadd.f32 0.0, %v1947
    %v1949 = vpop.f32.mrb[0].mxu0
    %v1950 = vadd.f32 0.0, %v1949
    %1951 = vmatprep.mubr.f32.mxu0 0.0
    %1952 = vmatmul.mubr.f32.gmra.mrb[0].mxu0 %v717
    %v1953 = vpop.f32.mrb[0].mxu0
    %v1954 = vadd.f32 0.0, %v1953
    %v1955 = vpop.f32.mrb[0].mxu0
    %v1956 = vadd.f32 0.0, %v1955
    %1957 = vmatprep.mubr.f32.mxu0 0.0
    %1958 = vmatmul.mubr.f32.gmra.mrb[0].mxu0 %v720
    %v1959 = vpop.f32.mrb[0].mxu0
    %v1960 = vadd.f32 0.0, %v1959
    %v1961 = vpop.f32.mrb[0].mxu0
    %v1962 = vadd.f32 0.0, %v1961
    %1963 = vmatprep.mubr.f32.mxu0 0.0
    %1964 = vmatmul.mubr.f32.gmra.mrb[0].mxu0 %v723
    %v1965 = vpop.f32.mrb[0].mxu0
    %v1966 = vadd.f32 0.0, %v1965
    %v1967 = vpop.f32.mrb[0].mxu0
    %v1968 = vadd.f32 0.0, %v1967
    %1969 = vmatprep.mubr.f32.mxu0 0.0
    %1970 = vmatmul.mubr.f32.gmra.mrb[0].mxu0 %v726
    %v1971 = vpop.f32.mrb[0].mxu0
    %v1972 = vadd.f32 0.0, %v1971
    %v1973 = vpop.f32.mrb[0].mxu0
    %v1974 = vadd.f32 0.0, %v1973
    %1975 = vmatprep.mubr.f32.mxu0 0.0
    %1976 = vmatmul.mubr.f32.gmra.mrb[0].mxu0 %v729
    %v1977 = vpop.f32.mrb[0].mxu0
    %v1978 = vadd.f32 0.0, %v1977
    %v1979 = vpop.f32.mrb[0].mxu0
    %v1980 = vadd.f32 0.0, %v1979
    %1981 = vmatprep.mubr.f32.mxu0 0.0
    %1982 = vmatmul.mubr.f32.gmra.mrb[0].mxu0 %v732
    %v1983 = vpop.f32.mrb[0].mxu0
    %v1984 = vadd.f32 0.0, %v1983
    %v1985 = vpop.f32.mrb[0].mxu0
    %v1986 = vadd.f32 0.0, %v1985
    %1987 = vmatprep.mubr.f32.mxu0 0.0
    %1988 = vmatmul.mubr.f32.gmra.mrb[0].mxu0 %v735
    %v1989 = vpop.f32.mrb[0].mxu0
    %v1990 = vadd.f32 0.0, %v1989
    %v1991 = vpop.f32.mrb[0].mxu0
    %v1992 = vadd.f32 0.0, %v1991
    %1993 = vmatprep.mubr.f32.mxu0 0.0
    %1994 = vmatmul.mubr.f32.gmra.mrb[0].mxu0 %v738
    %v1995 = vpop.f32.mrb[0].mxu0
    %v1996 = vadd.f32 0.0, %v1995
    %v1997 = vpop.f32.mrb[0].mxu0
    %v1998 = vadd.f32 0.0, %v1997
    %1999 = vmatprep.mubr.f32.mxu0 0.0
    %2000 = vmatmul.mubr.f32.gmra.mrb[0].mxu0 %v741
    %v2001 = vpop.f32.mrb[0].mxu0
    %v2002 = vadd.f32 0.0, %v2001
    %v2003 = vpop.f32.mrb[0].mxu0
    %v2004 = vadd.f32 0.0, %v2003
    %2005 = vmatprep.mubr.f32.mxu0 0.0
    %2006 = vmatmul.mubr.f32.gmra.mrb[0].mxu0 %v744
    %v2007 = vpop.f32.mrb[0].mxu0
    %v2008 = vadd.f32 0.0, %v2007
    %v2009 = vpop.f32.mrb[0].mxu0
    %v2010 = vadd.f32 0.0, %v2009
    %2011 = vmatprep.mubr.f32.mxu0 0.0
    %2012 = vmatmul.mubr.f32.gmra.mrb[0].mxu0 %v747
    %v2013 = vpop.f32.mrb[0].mxu0
    %v2014 = vadd.f32 0.0, %v2013
    %v2015 = vpop.f32.mrb[0].mxu0
    %v2016 = vadd.f32 0.0, %v2015
    %2017 = vmatprep.mubr.f32.mxu0 0.0
    %2018 = vmatmul.mubr.f32.gmra.mrb[0].mxu0 %v750
    %v2019 = vpop.f32.mrb[0].mxu0
    %v2020 = vadd.f32 0.0, %v2019
    %v2021 = vpop.f32.mrb[0].mxu0
    %v2022 = vadd.f32 0.0, %v2021
    %2023 = vmatprep.mubr.f32.mxu0 0.0
    %2024 = vmatmul.mubr.f32.gmra.mrb[0].mxu0 %v753
    %v2025 = vpop.f32.mrb[0].mxu0
    %v2026 = vadd.f32 0.0, %v2025
    %v2027 = vpop.f32.mrb[0].mxu0
    %v2028 = vadd.f32 0.0, %v2027
    %2029 = vmatprep.mubr.f32.mxu0 0.0
    %2030 = vmatmul.mubr.f32.gmra.mrb[0].mxu0 %v756
    %v2031 = vpop.f32.mrb[0].mxu0
    %v2032 = vadd.f32 0.0, %v2031
    %v2033 = vpop.f32.mrb[0].mxu0
    %v2034 = vadd.f32 0.0, %v2033
    %2035 = vmatprep.mubr.f32.mxu0 0.0
    %2036 = vmatmul.mubr.f32.gmra.mrb[0].mxu0 %v759
    %v2037 = vpop.f32.mrb[0].mxu0
    %v2038 = vadd.f32 0.0, %v2037
    %v2039 = vpop.f32.mrb[0].mxu0
    %v2040 = vadd.f32 0.0, %v2039
    %2041 = vmatprep.mubr.f32.mxu0 0.0
    %2042 = vmatmul.mubr.f32.gmra.mrb[0].mxu0 %v762
    %v2043 = vpop.f32.mrb[0].mxu0
    %v2044 = vadd.f32 0.0, %v2043
    %v2045 = vpop.f32.mrb[0].mxu0
    %v2046 = vadd.f32 0.0, %v2045
    %2047 = vmatprep.mubr.f32.mxu0 0.0
    %2048 = vmatmul.mubr.f32.gmra.mrb[0].mxu0 %v765
    %v2049 = vpop.f32.mrb[0].mxu0
    %v2050 = vadd.f32 0.0, %v2049
    %v2051 = vpop.f32.mrb[0].mxu0
    %v2052 = vadd.f32 0.0, %v2051
    %2053 = vmatprep.mubr.f32.mxu0 0.0
    %2054 = vmatmul.mubr.f32.gmra.mrb[0].mxu0 %v768
    %v2055 = vpop.f32.mrb[0].mxu0
    %v2056 = vadd.f32 0.0, %v2055
    %v2057 = vpop.f32.mrb[0].mxu0
    %v2058 = vadd.f32 0.0, %v2057
    %2059 = vdwg.mxu0
    %2060 = vst [vmem:[#allocation3] sm:$0xff] %v837
    %2061 = vst [vmem:[#allocation3 + $0x8] sm:$0xff] %v839
    %2062 = vst [vmem:[#allocation3 + $0x10] sm:$0xff] %v1052
    %2063 = vst [vmem:[#allocation3 + $0x18] sm:$0xff] %v1054
    %2064 = vst [vmem:[#allocation3 + $0x20] sm:$0xff] %v1267
    %2065 = vst [vmem:[#allocation3 + $0x28] sm:$0xff] %v1269
    %2066 = vst [vmem:[#allocation3 + $0x30] sm:$0xff] %v1482
    %2067 = vst [vmem:[#allocation3 + $0x38] sm:$0xff] %v1484
    %2068 = vst [vmem:[#allocation3 + $0x40] sm:$0xff] %v1697
    %2069 = vst [vmem:[#allocation3 + $0x48] sm:$0xff] %v1699
    %2070 = vst [vmem:[#allocation3 + $0x50] sm:$0xff] %v1912
    %2071 = vst [vmem:[#allocation3 + $0x58] sm:$0xff] %v1914
    %2072 = vst [vmem:[#allocation3 + $0x60] sm:$0xff] %v843
    %2073 = vst [vmem:[#allocation3 + $0x68] sm:$0xff] %v845
    %2074 = vst [vmem:[#allocation3 + $0x70] sm:$0xff] %v1058
    %2075 = vst [vmem:[#allocation3 + $0x78] sm:$0xff] %v1060
    %2076 = vst [vmem:[#allocation3 + $0x80] sm:$0xff] %v1273
    %2077 = vst [vmem:[#allocation3 + $0x88] sm:$0xff] %v1275
    %2078 = vst [vmem:[#allocation3 + $0x90] sm:$0xff] %v1488
    %2079 = vst [vmem:[#allocation3 + $0x98] sm:$0xff] %v1490
    %2080 = vst [vmem:[#allocation3 + $0xa0] sm:$0xff] %v1703
    %2081 = vst [vmem:[#allocation3 + $0xa8] sm:$0xff] %v1705
    %2082 = vst [vmem:[#allocation3 + $0xb0] sm:$0xff] %v1918
    %2083 = vst [vmem:[#allocation3 + $0xb8] sm:$0xff] %v1920
    %2084 = vst [vmem:[#allocation3 + $0xc0] sm:$0xff] %v849
    %2085 = vst [vmem:[#allocation3 + $0xc8] sm:$0xff] %v851
    %2086 = vst [vmem:[#allocation3 + $0xd0] sm:$0xff] %v1064
    %2087 = vst [vmem:[#allocation3 + $0xd8] sm:$0xff] %v1066
    %2088 = vst [vmem:[#allocation3 + $0xe0] sm:$0xff] %v1279
    %2089 = vst [vmem:[#allocation3 + $0xe8] sm:$0xff] %v1281
    %2090 = vst [vmem:[#allocation3 + $0xf0] sm:$0xff] %v1494
    %2091 = vst [vmem:[#allocation3 + $0xf8] sm:$0xff] %v1496
    %2092 = vst [vmem:[#allocation3 + $0x100] sm:$0xff] %v1709
    %2093 = vst [vmem:[#allocation3 + $0x108] sm:$0xff] %v1711
    %2094 = vst [vmem:[#allocation3 + $0x110] sm:$0xff] %v1924
    %2095 = vst [vmem:[#allocation3 + $0x118] sm:$0xff] %v1926
    %2096 = vst [vmem:[#allocation3 + $0x120] sm:$0xff] %v855
    %2097 = vst [vmem:[#allocation3 + $0x128] sm:$0xff] %v857
    %2098 = vst [vmem:[#allocation3 + $0x130] sm:$0xff] %v1070
    %2099 = vst [vmem:[#allocation3 + $0x138] sm:$0xff] %v1072
    %2100 = vst [vmem:[#allocation3 + $0x140] sm:$0xff] %v1285
    %2101 = vst [vmem:[#allocation3 + $0x148] sm:$0xff] %v1287
    %2102 = vst [vmem:[#allocation3 + $0x150] sm:$0xff] %v1500
    %2103 = vst [vmem:[#allocation3 + $0x158] sm:$0xff] %v1502
    %2104 = vst [vmem:[#allocation3 + $0x160] sm:$0xff] %v1715
    %2105 = vst [vmem:[#allocation3 + $0x168] sm:$0xff] %v1717
    %2106 = vst [vmem:[#allocation3 + $0x170] sm:$0xff] %v1930
    %2107 = vst [vmem:[#allocation3 + $0x178] sm:$0xff] %v1932
    %2108 = vst [vmem:[#allocation3 + $0x180] sm:$0xff] %v861
    %2109 = vst [vmem:[#allocation3 + $0x188] sm:$0xff] %v863
    %2110 = vst [vmem:[#allocation3 + $0x190] sm:$0xff] %v1076
    %2111 = vst [vmem:[#allocation3 + $0x198] sm:$0xff] %v1078
    %2112 = vst [vmem:[#allocation3 + $0x1a0] sm:$0xff] %v1291
    %2113 = vst [vmem:[#allocation3 + $0x1a8] sm:$0xff] %v1293
    %2114 = vst [vmem:[#allocation3 + $0x1b0] sm:$0xff] %v1506
    %2115 = vst [vmem:[#allocation3 + $0x1b8] sm:$0xff] %v1508
    %2116 = vst [vmem:[#allocation3 + $0x1c0] sm:$0xff] %v1721
    %2117 = vst [vmem:[#allocation3 + $0x1c8] sm:$0xff] %v1723
    %2118 = vst [vmem:[#allocation3 + $0x1d0] sm:$0xff] %v1936
    %2119 = vst [vmem:[#allocation3 + $0x1d8] sm:$0xff] %v1938
    %2120 = vst [vmem:[#allocation3 + $0x1e0] sm:$0xff] %v867
    %2121 = vst [vmem:[#allocation3 + $0x1e8] sm:$0xff] %v869
    %2122 = vst [vmem:[#allocation3 + $0x1f0] sm:$0xff] %v1082
    %2123 = vst [vmem:[#allocation3 + $0x1f8] sm:$0xff] %v1084
    %2124 = vst [vmem:[#allocation3 + $0x200] sm:$0xff] %v1297
    %2125 = vst [vmem:[#allocation3 + $0x208] sm:$0xff] %v1299
    %2126 = vst [vmem:[#allocation3 + $0x210] sm:$0xff] %v1512
    %2127 = vst [vmem:[#allocation3 + $0x218] sm:$0xff] %v1514
    %2128 = vst [vmem:[#allocation3 + $0x220] sm:$0xff] %v1727
    %2129 = vst [vmem:[#allocation3 + $0x228] sm:$0xff] %v1729
    %2130 = vst [vmem:[#allocation3 + $0x230] sm:$0xff] %v1942
    %2131 = vst [vmem:[#allocation3 + $0x238] sm:$0xff] %v1944
    %2132 = vst [vmem:[#allocation3 + $0x240] sm:$0xff] %v873
    %2133 = vst [vmem:[#allocation3 + $0x248] sm:$0xff] %v875
    %2134 = vst [vmem:[#allocation3 + $0x250] sm:$0xff] %v1088
    %2135 = vst [vmem:[#allocation3 + $0x258] sm:$0xff] %v1090
    %2136 = vst [vmem:[#allocation3 + $0x260] sm:$0xff] %v1303
    %2137 = vst [vmem:[#allocation3 + $0x268] sm:$0xff] %v1305
    %2138 = vst [vmem:[#allocation3 + $0x270] sm:$0xff] %v1518
    %2139 = vst [vmem:[#allocation3 + $0x278] sm:$0xff] %v1520
    %2140 = vst [vmem:[#allocation3 + $0x280] sm:$0xff] %v1733
    %2141 = vst [vmem:[#allocation3 + $0x288] sm:$0xff] %v1735
    %2142 = vst [vmem:[#allocation3 + $0x290] sm:$0xff] %v1948
    %2143 = vst [vmem:[#allocation3 + $0x298] sm:$0xff] %v1950
    %2144 = vst [vmem:[#allocation3 + $0x2a0] sm:$0xff] %v879
    %2145 = vst [vmem:[#allocation3 + $0x2a8] sm:$0xff] %v881
    %2146 = vst [vmem:[#allocation3 + $0x2b0] sm:$0xff] %v1094
    %2147 = vst [vmem:[#allocation3 + $0x2b8] sm:$0xff] %v1096
    %2148 = vst [vmem:[#allocation3 + $0x2c0] sm:$0xff] %v1309
    %2149 = vst [vmem:[#allocation3 + $0x2c8] sm:$0xff] %v1311
    %2150 = vst [vmem:[#allocation3 + $0x2d0] sm:$0xff] %v1524
    %2151 = vst [vmem:[#allocation3 + $0x2d8] sm:$0xff] %v1526
    %2152 = vst [vmem:[#allocation3 + $0x2e0] sm:$0xff] %v1739
    %2153 = vst [vmem:[#allocation3 + $0x2e8] sm:$0xff] %v1741
    %2154 = vst [vmem:[#allocation3 + $0x2f0] sm:$0xff] %v1954
    %2155 = vst [vmem:[#allocation3 + $0x2f8] sm:$0xff] %v1956
    %2156 = vst [vmem:[#allocation3 + $0x300] sm:$0xff] %v885
    %2157 = vst [vmem:[#allocation3 + $0x308] sm:$0xff] %v887
    %2158 = vst [vmem:[#allocation3 + $0x310] sm:$0xff] %v1100
    %2159 = vst [vmem:[#allocation3 + $0x318] sm:$0xff] %v1102
    %2160 = vst [vmem:[#allocation3 + $0x320] sm:$0xff] %v1315
    %2161 = vst [vmem:[#allocation3 + $0x328] sm:$0xff] %v1317
    %2162 = vst [vmem:[#allocation3 + $0x330] sm:$0xff] %v1530
    %2163 = vst [vmem:[#allocation3 + $0x338] sm:$0xff] %v1532
    %2164 = vst [vmem:[#allocation3 + $0x340] sm:$0xff] %v1745
    %2165 = vst [vmem:[#allocation3 + $0x348] sm:$0xff] %v1747
    %2166 = vst [vmem:[#allocation3 + $0x350] sm:$0xff] %v1960
    %2167 = vst [vmem:[#allocation3 + $0x358] sm:$0xff] %v1962
    %2168 = vst [vmem:[#allocation3 + $0x360] sm:$0xff] %v891
    %2169 = vst [vmem:[#allocation3 + $0x368] sm:$0xff] %v893
    %2170 = vst [vmem:[#allocation3 + $0x370] sm:$0xff] %v1106
    %2171 = vst [vmem:[#allocation3 + $0x378] sm:$0xff] %v1108
    %2172 = vst [vmem:[#allocation3 + $0x380] sm:$0xff] %v1321
    %2173 = vst [vmem:[#allocation3 + $0x388] sm:$0xff] %v1323
    %2174 = vst [vmem:[#allocation3 + $0x390] sm:$0xff] %v1536
    %2175 = vst [vmem:[#allocation3 + $0x398] sm:$0xff] %v1538
    %2176 = vst [vmem:[#allocation3 + $0x3a0] sm:$0xff] %v1751
    %2177 = vst [vmem:[#allocation3 + $0x3a8] sm:$0xff] %v1753
    %2178 = vst [vmem:[#allocation3 + $0x3b0] sm:$0xff] %v1966
    %2179 = vst [vmem:[#allocation3 + $0x3b8] sm:$0xff] %v1968
    %2180 = vst [vmem:[#allocation3 + $0x3c0] sm:$0xff] %v897
    %2181 = vst [vmem:[#allocation3 + $0x3c8] sm:$0xff] %v899
    %2182 = vst [vmem:[#allocation3 + $0x3d0] sm:$0xff] %v1112
    %2183 = vst [vmem:[#allocation3 + $0x3d8] sm:$0xff] %v1114
    %2184 = vst [vmem:[#allocation3 + $0x3e0] sm:$0xff] %v1327
    %2185 = vst [vmem:[#allocation3 + $0x3e8] sm:$0xff] %v1329
    %2186 = vst [vmem:[#allocation3 + $0x3f0] sm:$0xff] %v1542
    %2187 = vst [vmem:[#allocation3 + $0x3f8] sm:$0xff] %v1544
    %2188 = vst [vmem:[#allocation3 + $0x400] sm:$0xff] %v1757
    %2189 = vst [vmem:[#allocation3 + $0x408] sm:$0xff] %v1759
    %2190 = vst [vmem:[#allocation3 + $0x410] sm:$0xff] %v1972
    %2191 = vst [vmem:[#allocation3 + $0x418] sm:$0xff] %v1974
    %2192 = vst [vmem:[#allocation3 + $0x420] sm:$0xff] %v903
    %2193 = vst [vmem:[#allocation3 + $0x428] sm:$0xff] %v905
    %2194 = vst [vmem:[#allocation3 + $0x430] sm:$0xff] %v1118
    %2195 = vst [vmem:[#allocation3 + $0x438] sm:$0xff] %v1120
    %2196 = vst [vmem:[#allocation3 + $0x440] sm:$0xff] %v1333
    %2197 = vst [vmem:[#allocation3 + $0x448] sm:$0xff] %v1335
    %2198 = vst [vmem:[#allocation3 + $0x450] sm:$0xff] %v1548
    %2199 = vst [vmem:[#allocation3 + $0x458] sm:$0xff] %v1550
    %2200 = vst [vmem:[#allocation3 + $0x460] sm:$0xff] %v1763
    %2201 = vst [vmem:[#allocation3 + $0x468] sm:$0xff] %v1765
    %2202 = vst [vmem:[#allocation3 + $0x470] sm:$0xff] %v1978
    %2203 = vst [vmem:[#allocation3 + $0x478] sm:$0xff] %v1980
    %2204 = vst [vmem:[#allocation3 + $0x480] sm:$0xff] %v909
    %2205 = vst [vmem:[#allocation3 + $0x488] sm:$0xff] %v911
    %2206 = vst [vmem:[#allocation3 + $0x490] sm:$0xff] %v1124
    %2207 = vst [vmem:[#allocation3 + $0x498] sm:$0xff] %v1126
    %2208 = vst [vmem:[#allocation3 + $0x4a0] sm:$0xff] %v1339
    %2209 = vst [vmem:[#allocation3 + $0x4a8] sm:$0xff] %v1341
    %2210 = vst [vmem:[#allocation3 + $0x4b0] sm:$0xff] %v1554
    %2211 = vst [vmem:[#allocation3 + $0x4b8] sm:$0xff] %v1556
    %2212 = vst [vmem:[#allocation3 + $0x4c0] sm:$0xff] %v1769
    %2213 = vst [vmem:[#allocation3 + $0x4c8] sm:$0xff] %v1771
    %2214 = vst [vmem:[#allocation3 + $0x4d0] sm:$0xff] %v1984
    %2215 = vst [vmem:[#allocation3 + $0x4d8] sm:$0xff] %v1986
    %2216 = vst [vmem:[#allocation3 + $0x4e0] sm:$0xff] %v915
    %2217 = vst [vmem:[#allocation3 + $0x4e8] sm:$0xff] %v917
    %2218 = vst [vmem:[#allocation3 + $0x4f0] sm:$0xff] %v1130
    %2219 = vst [vmem:[#allocation3 + $0x4f8] sm:$0xff] %v1132
    %2220 = vst [vmem:[#allocation3 + $0x500] sm:$0xff] %v1345
    %2221 = vst [vmem:[#allocation3 + $0x508] sm:$0xff] %v1347
    %2222 = vst [vmem:[#allocation3 + $0x510] sm:$0xff] %v1560
    %2223 = vst [vmem:[#allocation3 + $0x518] sm:$0xff] %v1562
    %2224 = vst [vmem:[#allocation3 + $0x520] sm:$0xff] %v1775
    %2225 = vst [vmem:[#allocation3 + $0x528] sm:$0xff] %v1777
    %2226 = vst [vmem:[#allocation3 + $0x530] sm:$0xff] %v1990
    %2227 = vst [vmem:[#allocation3 + $0x538] sm:$0xff] %v1992
    %2228 = vst [vmem:[#allocation3 + $0x540] sm:$0xff] %v921
    %2229 = vst [vmem:[#allocation3 + $0x548] sm:$0xff] %v923
    %2230 = vst [vmem:[#allocation3 + $0x550] sm:$0xff] %v1136
    %2231 = vst [vmem:[#allocation3 + $0x558] sm:$0xff] %v1138
    %2232 = vst [vmem:[#allocation3 + $0x560] sm:$0xff] %v1351
    %2233 = vst [vmem:[#allocation3 + $0x568] sm:$0xff] %v1353
    %2234 = vst [vmem:[#allocation3 + $0x570] sm:$0xff] %v1566
    %2235 = vst [vmem:[#allocation3 + $0x578] sm:$0xff] %v1568
    %2236 = vst [vmem:[#allocation3 + $0x580] sm:$0xff] %v1781
    %2237 = vst [vmem:[#allocation3 + $0x588] sm:$0xff] %v1783
    %2238 = vst [vmem:[#allocation3 + $0x590] sm:$0xff] %v1996
    %2239 = vst [vmem:[#allocation3 + $0x598] sm:$0xff] %v1998
    %2240 = vst [vmem:[#allocation3 + $0x5a0] sm:$0xff] %v927
    %2241 = vst [vmem:[#allocation3 + $0x5a8] sm:$0xff] %v929
    %2242 = vst [vmem:[#allocation3 + $0x5b0] sm:$0xff] %v1142
    %2243 = vst [vmem:[#allocation3 + $0x5b8] sm:$0xff] %v1144
    %2244 = vst [vmem:[#allocation3 + $0x5c0] sm:$0xff] %v1357
    %2245 = vst [vmem:[#allocation3 + $0x5c8] sm:$0xff] %v1359
    %2246 = vst [vmem:[#allocation3 + $0x5d0] sm:$0xff] %v1572
    %2247 = vst [vmem:[#allocation3 + $0x5d8] sm:$0xff] %v1574
    %2248 = vst [vmem:[#allocation3 + $0x5e0] sm:$0xff] %v1787
    %2249 = vst [vmem:[#allocation3 + $0x5e8] sm:$0xff] %v1789
    %2250 = vst [vmem:[#allocation3 + $0x5f0] sm:$0xff] %v2002
    %2251 = vst [vmem:[#allocation3 + $0x5f8] sm:$0xff] %v2004
    %2252 = vst [vmem:[#allocation3 + $0x600] sm:$0xff] %v933
    %2253 = vst [vmem:[#allocation3 + $0x608] sm:$0xff] %v935
    %2254 = vst [vmem:[#allocation3 + $0x610] sm:$0xff] %v1148
    %2255 = vst [vmem:[#allocation3 + $0x618] sm:$0xff] %v1150
    %2256 = vst [vmem:[#allocation3 + $0x620] sm:$0xff] %v1363
    %2257 = vst [vmem:[#allocation3 + $0x628] sm:$0xff] %v1365
    %2258 = vst [vmem:[#allocation3 + $0x630] sm:$0xff] %v1578
    %2259 = vst [vmem:[#allocation3 + $0x638] sm:$0xff] %v1580
    %2260 = vst [vmem:[#allocation3 + $0x640] sm:$0xff] %v1793
    %2261 = vst [vmem:[#allocation3 + $0x648] sm:$0xff] %v1795
    %2262 = vst [vmem:[#allocation3 + $0x650] sm:$0xff] %v2008
    %2263 = vst [vmem:[#allocation3 + $0x658] sm:$0xff] %v2010
    %2264 = vst [vmem:[#allocation3 + $0x660] sm:$0xff] %v939
    %2265 = vst [vmem:[#allocation3 + $0x668] sm:$0xff] %v941
    %2266 = vst [vmem:[#allocation3 + $0x670] sm:$0xff] %v1154
    %2267 = vst [vmem:[#allocation3 + $0x678] sm:$0xff] %v1156
    %2268 = vst [vmem:[#allocation3 + $0x680] sm:$0xff] %v1369
    %2269 = vst [vmem:[#allocation3 + $0x688] sm:$0xff] %v1371
    %2270 = vst [vmem:[#allocation3 + $0x690] sm:$0xff] %v1584
    %2271 = vst [vmem:[#allocation3 + $0x698] sm:$0xff] %v1586
    %2272 = vst [vmem:[#allocation3 + $0x6a0] sm:$0xff] %v1799
    %2273 = vst [vmem:[#allocation3 + $0x6a8] sm:$0xff] %v1801
    %2274 = vst [vmem:[#allocation3 + $0x6b0] sm:$0xff] %v2014
    %2275 = vst [vmem:[#allocation3 + $0x6b8] sm:$0xff] %v2016
    %2276 = vst [vmem:[#allocation3 + $0x6c0] sm:$0xff] %v945
    %2277 = vst [vmem:[#allocation3 + $0x6c8] sm:$0xff] %v947
    %2278 = vst [vmem:[#allocation3 + $0x6d0] sm:$0xff] %v1160
    %2279 = vst [vmem:[#allocation3 + $0x6d8] sm:$0xff] %v1162
    %2280 = vst [vmem:[#allocation3 + $0x6e0] sm:$0xff] %v1375
    %2281 = vst [vmem:[#allocation3 + $0x6e8] sm:$0xff] %v1377
    %2282 = vst [vmem:[#allocation3 + $0x6f0] sm:$0xff] %v1590
    %2283 = vst [vmem:[#allocation3 + $0x6f8] sm:$0xff] %v1592
    %2284 = vst [vmem:[#allocation3 + $0x700] sm:$0xff] %v1805
    %2285 = vst [vmem:[#allocation3 + $0x708] sm:$0xff] %v1807
    %2286 = vst [vmem:[#allocation3 + $0x710] sm:$0xff] %v2020
    %2287 = vst [vmem:[#allocation3 + $0x718] sm:$0xff] %v2022
    %2288 = vst [vmem:[#allocation3 + $0x720] sm:$0xff] %v951
    %2289 = vst [vmem:[#allocation3 + $0x728] sm:$0xff] %v953
    %2290 = vst [vmem:[#allocation3 + $0x730] sm:$0xff] %v1166
    %2291 = vst [vmem:[#allocation3 + $0x738] sm:$0xff] %v1168
    %2292 = vst [vmem:[#allocation3 + $0x740] sm:$0xff] %v1381
    %2293 = vst [vmem:[#allocation3 + $0x748] sm:$0xff] %v1383
    %2294 = vst [vmem:[#allocation3 + $0x750] sm:$0xff] %v1596
    %2295 = vst [vmem:[#allocation3 + $0x758] sm:$0xff] %v1598
    %2296 = vst [vmem:[#allocation3 + $0x760] sm:$0xff] %v1811
    %2297 = vst [vmem:[#allocation3 + $0x768] sm:$0xff] %v1813
    %2298 = vst [vmem:[#allocation3 + $0x770] sm:$0xff] %v2026
    %2299 = vst [vmem:[#allocation3 + $0x778] sm:$0xff] %v2028
    %2300 = vst [vmem:[#allocation3 + $0x780] sm:$0xff] %v957
    %2301 = vst [vmem:[#allocation3 + $0x788] sm:$0xff] %v959
    %2302 = vst [vmem:[#allocation3 + $0x790] sm:$0xff] %v1172
    %2303 = vst [vmem:[#allocation3 + $0x798] sm:$0xff] %v1174
    %2304 = vst [vmem:[#allocation3 + $0x7a0] sm:$0xff] %v1387
    %2305 = vst [vmem:[#allocation3 + $0x7a8] sm:$0xff] %v1389
    %2306 = vst [vmem:[#allocation3 + $0x7b0] sm:$0xff] %v1602
    %2307 = vst [vmem:[#allocation3 + $0x7b8] sm:$0xff] %v1604
    %2308 = vst [vmem:[#allocation3 + $0x7c0] sm:$0xff] %v1817
    %2309 = vst [vmem:[#allocation3 + $0x7c8] sm:$0xff] %v1819
    %2310 = vst [vmem:[#allocation3 + $0x7d0] sm:$0xff] %v2032
    %2311 = vst [vmem:[#allocation3 + $0x7d8] sm:$0xff] %v2034
    %2312 = vst [vmem:[#allocation3 + $0x7e0] sm:$0xff] %v963
    %2313 = vst [vmem:[#allocation3 + $0x7e8] sm:$0xff] %v965
    %2314 = vst [vmem:[#allocation3 + $0x7f0] sm:$0xff] %v1178
    %2315 = vst [vmem:[#allocation3 + $0x7f8] sm:$0xff] %v1180
    %2316 = vst [vmem:[#allocation3 + $0x800] sm:$0xff] %v1393
    %2317 = vst [vmem:[#allocation3 + $0x808] sm:$0xff] %v1395
    %2318 = vst [vmem:[#allocation3 + $0x810] sm:$0xff] %v1608
    %2319 = vst [vmem:[#allocation3 + $0x818] sm:$0xff] %v1610
    %2320 = vst [vmem:[#allocation3 + $0x820] sm:$0xff] %v1823
    %2321 = vst [vmem:[#allocation3 + $0x828] sm:$0xff] %v1825
    %2322 = vst [vmem:[#allocation3 + $0x830] sm:$0xff] %v2038
    %2323 = vst [vmem:[#allocation3 + $0x838] sm:$0xff] %v2040
    %2324 = vst [vmem:[#allocation3 + $0x840] sm:$0xff] %v969
    %2325 = vst [vmem:[#allocation3 + $0x848] sm:$0xff] %v971
    %2326 = vst [vmem:[#allocation3 + $0x850] sm:$0xff] %v1184
    %2327 = vst [vmem:[#allocation3 + $0x858] sm:$0xff] %v1186
    %2328 = vst [vmem:[#allocation3 + $0x860] sm:$0xff] %v1399
    %2329 = vst [vmem:[#allocation3 + $0x868] sm:$0xff] %v1401
    %2330 = vst [vmem:[#allocation3 + $0x870] sm:$0xff] %v1614
    %2331 = vst [vmem:[#allocation3 + $0x878] sm:$0xff] %v1616
    %2332 = vst [vmem:[#allocation3 + $0x880] sm:$0xff] %v1829
    %2333 = vst [vmem:[#allocation3 + $0x888] sm:$0xff] %v1831
    %2334 = vst [vmem:[#allocation3 + $0x890] sm:$0xff] %v2044
    %2335 = vst [vmem:[#allocation3 + $0x898] sm:$0xff] %v2046
    %2336 = vst [vmem:[#allocation3 + $0x8a0] sm:$0xff] %v975
    %2337 = vst [vmem:[#allocation3 + $0x8a8] sm:$0xff] %v977
    %2338 = vst [vmem:[#allocation3 + $0x8b0] sm:$0xff] %v1190
    %2339 = vst [vmem:[#allocation3 + $0x8b8] sm:$0xff] %v1192
    %2340 = vst [vmem:[#allocation3 + $0x8c0] sm:$0xff] %v1405
    %2341 = vst [vmem:[#allocation3 + $0x8c8] sm:$0xff] %v1407
    %2342 = vst [vmem:[#allocation3 + $0x8d0] sm:$0xff] %v1620
    %2343 = vst [vmem:[#allocation3 + $0x8d8] sm:$0xff] %v1622
    %2344 = vst [vmem:[#allocation3 + $0x8e0] sm:$0xff] %v1835
    %2345 = vst [vmem:[#allocation3 + $0x8e8] sm:$0xff] %v1837
    %2346 = vst [vmem:[#allocation3 + $0x8f0] sm:$0xff] %v2050
    %2347 = vst [vmem:[#allocation3 + $0x8f8] sm:$0xff] %v2052
    %2348 = vst [vmem:[#allocation3 + $0x900] sm:$0xff] %v981
    %2349 = vst [vmem:[#allocation3 + $0x908] sm:$0xff] %v983
    %2350 = vst [vmem:[#allocation3 + $0x910] sm:$0xff] %v1196
    %2351 = vst [vmem:[#allocation3 + $0x918] sm:$0xff] %v1198
    %2352 = vst [vmem:[#allocation3 + $0x920] sm:$0xff] %v1411
    %2353 = vst [vmem:[#allocation3 + $0x928] sm:$0xff] %v1413
    %2354 = vst [vmem:[#allocation3 + $0x930] sm:$0xff] %v1626
    %2355 = vst [vmem:[#allocation3 + $0x938] sm:$0xff] %v1628
    %2356 = vst [vmem:[#allocation3 + $0x940] sm:$0xff] %v1841
    %2357 = vst [vmem:[#allocation3 + $0x948] sm:$0xff] %v1843
    %2358 = vst [vmem:[#allocation3 + $0x950] sm:$0xff] %v2056
    %2359 = vst [vmem:[#allocation3 + $0x958] sm:$0xff] %v2058
    %v2360 = vld [vmem:[#allocation3] sm:$0xff]
    %v2361 = vld [vmem:[#allocation3 + $0x8] sm:$0xff]
    %v2362 = vld [vmem:[#allocation3 + $0x10] sm:$0xff]
    %v2363 = vld [vmem:[#allocation3 + $0x18] sm:$0xff]
    %v2364 = vld [vmem:[#allocation3 + $0x20] sm:$0xff]
    %v2365 = vld [vmem:[#allocation3 + $0x28] sm:$0xff]
    %v2366 = vld [vmem:[#allocation3 + $0x30] sm:$0xff]
    %v2367 = vld [vmem:[#allocation3 + $0x38] sm:$0xff]
    %v2368 = vld [vmem:[#allocation3 + $0x40] sm:$0xff]
    %v2369 = vld [vmem:[#allocation3 + $0x48] sm:$0xff]
    %v2370 = vld [vmem:[#allocation3 + $0x50] sm:$0xff]
    %v2371 = vld [vmem:[#allocation3 + $0x60] sm:$0xff]
    %v2372 = vld [vmem:[#allocation3 + $0x68] sm:$0xff]
    %v2373 = vld [vmem:[#allocation3 + $0x70] sm:$0xff]
    %v2374 = vld [vmem:[#allocation3 + $0x78] sm:$0xff]
    %v2375 = vld [vmem:[#allocation3 + $0x80] sm:$0xff]
    %v2376 = vld [vmem:[#allocation3 + $0x88] sm:$0xff]
    %v2377 = vld [vmem:[#allocation3 + $0x90] sm:$0xff]
    %v2378 = vld [vmem:[#allocation3 + $0x98] sm:$0xff]
    %v2379 = vld [vmem:[#allocation3 + $0xa0] sm:$0xff]
    %v2380 = vld [vmem:[#allocation3 + $0xa8] sm:$0xff]
    %v2381 = vld [vmem:[#allocation3 + $0xb0] sm:$0xff]
    %v2382 = vld [vmem:[#allocation3 + $0xc0] sm:$0xff]
    %v2383 = vld [vmem:[#allocation3 + $0xc8] sm:$0xff]
    %v2384 = vld [vmem:[#allocation3 + $0xd0] sm:$0xff]
    %v2385 = vld [vmem:[#allocation3 + $0xd8] sm:$0xff]
    %v2386 = vld [vmem:[#allocation3 + $0xe0] sm:$0xff]
    %v2387 = vld [vmem:[#allocation3 + $0xe8] sm:$0xff]
    %v2388 = vld [vmem:[#allocation3 + $0xf0] sm:$0xff]
    %v2389 = vld [vmem:[#allocation3 + $0xf8] sm:$0xff]
    %v2390 = vld [vmem:[#allocation3 + $0x100] sm:$0xff]
    %v2391 = vld [vmem:[#allocation3 + $0x108] sm:$0xff]
    %v2392 = vld [vmem:[#allocation3 + $0x110] sm:$0xff]
    %2404 = vrot.lane.b32.xlu0 %v2382, 126
    %v2405 = vpop.permute.xlu0 %2404
    %2406 = vrot.lane.b32.xlu0 %v2383, 126
    %v2407 = vpop.permute.xlu0 %2406
    %2408 = vrot.lane.b32.xlu0 %v2384, 126
    %v2409 = vpop.permute.xlu0 %2408
    %2410 = vrot.lane.b32.xlu0 %v2385, 126
    %v2411 = vpop.permute.xlu0 %2410
    %2412 = vrot.lane.b32.xlu0 %v2386, 126
    %v2413 = vpop.permute.xlu0 %2412
    %2414 = vrot.lane.b32.xlu0 %v2387, 126
    %v2415 = vpop.permute.xlu0 %2414
    %2416 = vrot.lane.b32.xlu0 %v2388, 126
    %v2417 = vpop.permute.xlu0 %2416
    %2418 = vrot.lane.b32.xlu0 %v2389, 126
    %v2419 = vpop.permute.xlu0 %2418
    %2420 = vrot.lane.b32.xlu0 %v2390, 126
    %v2421 = vpop.permute.xlu0 %2420
    %2422 = vrot.lane.b32.xlu0 %v2391, 126
    %v2423 = vpop.permute.xlu0 %2422
    %2424 = vrot.lane.b32.xlu0 %v2392, 126
    %v2425 = vpop.permute.xlu0 %2424
    %vm2426 = vcmask 1031168
    %v2427 = vsel %vm2426, %v2405, %v2407
    %v2428 = vsel %vm2426, %v2407, %v2409
    %v2429 = vsel %vm2426, %v2409, %v2411
    %v2430 = vsel %vm2426, %v2411, %v2413
    %v2431 = vsel %vm2426, %v2413, %v2415
    %v2432 = vsel %vm2426, %v2415, %v2417
    %v2433 = vsel %vm2426, %v2417, %v2419
    %v2434 = vsel %vm2426, %v2419, %v2421
    %v2435 = vsel %vm2426, %v2421, %v2423
    %v2436 = vsel %vm2426, %v2423, %v2425
    %v2448 = vadd.f32 %v2360, %v2427
    %v2449 = vadd.f32 %v2361, %v2428
    %v2450 = vadd.f32 %v2362, %v2429
    %v2451 = vadd.f32 %v2363, %v2430
    %v2452 = vadd.f32 %v2364, %v2431
    %v2453 = vadd.f32 %v2365, %v2432
    %v2454 = vadd.f32 %v2366, %v2433
    %v2455 = vadd.f32 %v2367, %v2434
    %v2456 = vadd.f32 %v2368, %v2435
    %v2457 = vadd.f32 %v2369, %v2436
    %v2458 = vadd.f32 %v2370, %v2425
    %v2459 = vld [vmem:[#allocation3 + $0x120] sm:$0xff]
    %v2460 = vld [vmem:[#allocation3 + $0x128] sm:$0xff]
    %v2461 = vld [vmem:[#allocation3 + $0x130] sm:$0xff]
    %v2462 = vld [vmem:[#allocation3 + $0x138] sm:$0xff]
    %v2463 = vld [vmem:[#allocation3 + $0x140] sm:$0xff]
    %v2464 = vld [vmem:[#allocation3 + $0x148] sm:$0xff]
    %v2465 = vld [vmem:[#allocation3 + $0x150] sm:$0xff]
    %v2466 = vld [vmem:[#allocation3 + $0x158] sm:$0xff]
    %v2467 = vld [vmem:[#allocation3 + $0x160] sm:$0xff]
    %v2468 = vld [vmem:[#allocation3 + $0x168] sm:$0xff]
    %v2469 = vld [vmem:[#allocation3 + $0x170] sm:$0xff]
    %2481 = vrot.lane.b32.xlu0 %v2459, 126
    %v2482 = vpop.permute.xlu0 %2481
    %2483 = vrot.lane.b32.xlu0 %v2460, 126
    %v2484 = vpop.permute.xlu0 %2483
    %2485 = vrot.lane.b32.xlu0 %v2461, 126
    %v2486 = vpop.permute.xlu0 %2485
    %2487 = vrot.lane.b32.xlu0 %v2462, 126
    %v2488 = vpop.permute.xlu0 %2487
    %2489 = vrot.lane.b32.xlu0 %v2463, 126
    %v2490 = vpop.permute.xlu0 %2489
    %2491 = vrot.lane.b32.xlu0 %v2464, 126
    %v2492 = vpop.permute.xlu0 %2491
    %2493 = vrot.lane.b32.xlu0 %v2465, 126
    %v2494 = vpop.permute.xlu0 %2493
    %2495 = vrot.lane.b32.xlu0 %v2466, 126
    %v2496 = vpop.permute.xlu0 %2495
    %2497 = vrot.lane.b32.xlu0 %v2467, 126
    %v2498 = vpop.permute.xlu0 %2497
    %2499 = vrot.lane.b32.xlu0 %v2468, 126
    %v2500 = vpop.permute.xlu0 %2499
    %2501 = vrot.lane.b32.xlu0 %v2469, 126
    %v2502 = vpop.permute.xlu0 %2501
    %v2503 = vsel %vm2426, %v2482, %v2484
    %v2504 = vsel %vm2426, %v2484, %v2486
    %v2505 = vsel %vm2426, %v2486, %v2488
    %v2506 = vsel %vm2426, %v2488, %v2490
    %v2507 = vsel %vm2426, %v2490, %v2492
    %v2508 = vsel %vm2426, %v2492, %v2494
    %v2509 = vsel %vm2426, %v2494, %v2496
    %v2510 = vsel %vm2426, %v2496, %v2498
    %v2511 = vsel %vm2426, %v2498, %v2500
    %v2512 = vsel %vm2426, %v2500, %v2502
    %v2524 = vadd.f32 %v2371, %v2503
    %v2525 = vadd.f32 %v2372, %v2504
    %v2526 = vadd.f32 %v2373, %v2505
    %v2527 = vadd.f32 %v2374, %v2506
    %v2528 = vadd.f32 %v2375, %v2507
    %v2529 = vadd.f32 %v2376, %v2508
    %v2530 = vadd.f32 %v2377, %v2509
    %v2531 = vadd.f32 %v2378, %v2510
    %v2532 = vadd.f32 %v2379, %v2511
    %v2533 = vadd.f32 %v2380, %v2512
    %v2534 = vadd.f32 %v2381, %v2502
    %v2535 = vld [vmem:[#allocation3 + $0x180] sm:$0xff]
    %v2536 = vld [vmem:[#allocation3 + $0x188] sm:$0xff]
    %v2537 = vld [vmem:[#allocation3 + $0x190] sm:$0xff]
    %v2538 = vld [vmem:[#allocation3 + $0x198] sm:$0xff]
    %v2539 = vld [vmem:[#allocation3 + $0x1a0] sm:$0xff]
    %v2540 = vld [vmem:[#allocation3 + $0x1a8] sm:$0xff]
    %v2541 = vld [vmem:[#allocation3 + $0x1b0] sm:$0xff]
    %v2542 = vld [vmem:[#allocation3 + $0x1b8] sm:$0xff]
    %v2543 = vld [vmem:[#allocation3 + $0x1c0] sm:$0xff]
    %v2544 = vld [vmem:[#allocation3 + $0x1c8] sm:$0xff]
    %v2545 = vld [vmem:[#allocation3 + $0x1d0] sm:$0xff]
    %2557 = vrot.lane.b32.xlu0 %v2535, 124
    %v2558 = vpop.permute.xlu0 %2557
    %2559 = vrot.lane.b32.xlu0 %v2536, 124
    %v2560 = vpop.permute.xlu0 %2559
    %2561 = vrot.lane.b32.xlu0 %v2537, 124
    %v2562 = vpop.permute.xlu0 %2561
    %2563 = vrot.lane.b32.xlu0 %v2538, 124
    %v2564 = vpop.permute.xlu0 %2563
    %2565 = vrot.lane.b32.xlu0 %v2539, 124
    %v2566 = vpop.permute.xlu0 %2565
    %2567 = vrot.lane.b32.xlu0 %v2540, 124
    %v2568 = vpop.permute.xlu0 %2567
    %2569 = vrot.lane.b32.xlu0 %v2541, 124
    %v2570 = vpop.permute.xlu0 %2569
    %2571 = vrot.lane.b32.xlu0 %v2542, 124
    %v2572 = vpop.permute.xlu0 %2571
    %2573 = vrot.lane.b32.xlu0 %v2543, 124
    %v2574 = vpop.permute.xlu0 %2573
    %2575 = vrot.lane.b32.xlu0 %v2544, 124
    %v2576 = vpop.permute.xlu0 %2575
    %2577 = vrot.lane.b32.xlu0 %v2545, 124
    %v2578 = vpop.permute.xlu0 %2577
    %vm2579 = vcmask 1014784
    %v2580 = vsel %vm2579, %v2558, %v2560
    %v2581 = vsel %vm2579, %v2560, %v2562
    %v2582 = vsel %vm2579, %v2562, %v2564
    %v2583 = vsel %vm2579, %v2564, %v2566
    %v2584 = vsel %vm2579, %v2566, %v2568
    %v2585 = vsel %vm2579, %v2568, %v2570
    %v2586 = vsel %vm2579, %v2570, %v2572
    %v2587 = vsel %vm2579, %v2572, %v2574
    %v2588 = vsel %vm2579, %v2574, %v2576
    %v2589 = vsel %vm2579, %v2576, %v2578
    %v2601 = vadd.f32 %v2448, %v2580
    %v2602 = vadd.f32 %v2449, %v2581
    %v2603 = vadd.f32 %v2450, %v2582
    %v2604 = vadd.f32 %v2451, %v2583
    %v2605 = vadd.f32 %v2452, %v2584
    %v2606 = vadd.f32 %v2453, %v2585
    %v2607 = vadd.f32 %v2454, %v2586
    %v2608 = vadd.f32 %v2455, %v2587
    %v2609 = vadd.f32 %v2456, %v2588
    %v2610 = vadd.f32 %v2457, %v2589
    %v2611 = vadd.f32 %v2458, %v2578
    %v2612 = vld [vmem:[#allocation3 + $0x1e0] sm:$0xff]
    %v2613 = vld [vmem:[#allocation3 + $0x1e8] sm:$0xff]
    %v2614 = vld [vmem:[#allocation3 + $0x1f0] sm:$0xff]
    %v2615 = vld [vmem:[#allocation3 + $0x1f8] sm:$0xff]
    %v2616 = vld [vmem:[#allocation3 + $0x200] sm:$0xff]
    %v2617 = vld [vmem:[#allocation3 + $0x208] sm:$0xff]
    %v2618 = vld [vmem:[#allocation3 + $0x210] sm:$0xff]
    %v2619 = vld [vmem:[#allocation3 + $0x218] sm:$0xff]
    %v2620 = vld [vmem:[#allocation3 + $0x220] sm:$0xff]
    %v2621 = vld [vmem:[#allocation3 + $0x228] sm:$0xff]
    %v2622 = vld [vmem:[#allocation3 + $0x230] sm:$0xff]
    %v2623 = vld [vmem:[#allocation3 + $0x238] sm:$0xff]
    %2636 = vrot.lane.b32.xlu0 %v2612, 97
    %v2637 = vpop.permute.xlu0 %2636
    %2638 = vrot.lane.b32.xlu0 %v2613, 97
    %v2639 = vpop.permute.xlu0 %2638
    %2640 = vrot.lane.b32.xlu0 %v2614, 97
    %v2641 = vpop.permute.xlu0 %2640
    %2642 = vrot.lane.b32.xlu0 %v2615, 97
    %v2643 = vpop.permute.xlu0 %2642
    %2644 = vrot.lane.b32.xlu0 %v2616, 97
    %v2645 = vpop.permute.xlu0 %2644
    %2646 = vrot.lane.b32.xlu0 %v2617, 97
    %v2647 = vpop.permute.xlu0 %2646
    %2648 = vrot.lane.b32.xlu0 %v2618, 97
    %v2649 = vpop.permute.xlu0 %2648
    %2650 = vrot.lane.b32.xlu0 %v2619, 97
    %v2651 = vpop.permute.xlu0 %2650
    %2652 = vrot.lane.b32.xlu0 %v2620, 97
    %v2653 = vpop.permute.xlu0 %2652
    %2654 = vrot.lane.b32.xlu0 %v2621, 97
    %v2655 = vpop.permute.xlu0 %2654
    %2656 = vrot.lane.b32.xlu0 %v2622, 97
    %v2657 = vpop.permute.xlu0 %2656
    %2658 = vrot.lane.b32.xlu0 %v2623, 97
    %v2659 = vpop.permute.xlu0 %2658
    %vm2660 = vcmask 793600
    %v2661 = vsel %vm2660, %v2637, %v2639
    %v2662 = vsel %vm2660, %v2639, %v2641
    %v2663 = vsel %vm2660, %v2641, %v2643
    %v2664 = vsel %vm2660, %v2643, %v2645
    %v2665 = vsel %vm2660, %v2645, %v2647
    %v2666 = vsel %vm2660, %v2647, %v2649
    %v2667 = vsel %vm2660, %v2649, %v2651
    %v2668 = vsel %vm2660, %v2651, %v2653
    %v2669 = vsel %vm2660, %v2653, %v2655
    %v2670 = vsel %vm2660, %v2655, %v2657
    %v2671 = vsel %vm2660, %v2657, %v2659
    %v2683 = vadd.f32 %v2524, %v2661
    %v2684 = vadd.f32 %v2525, %v2662
    %v2685 = vadd.f32 %v2526, %v2663
    %v2686 = vadd.f32 %v2527, %v2664
    %v2687 = vadd.f32 %v2528, %v2665
    %v2688 = vadd.f32 %v2529, %v2666
    %v2689 = vadd.f32 %v2530, %v2667
    %v2690 = vadd.f32 %v2531, %v2668
    %v2691 = vadd.f32 %v2532, %v2669
    %v2692 = vadd.f32 %v2533, %v2670
    %v2693 = vadd.f32 %v2534, %v2671
    %v2694 = vld [vmem:[#allocation3 + $0x240] sm:$0xff]
    %v2695 = vld [vmem:[#allocation3 + $0x248] sm:$0xff]
    %v2696 = vld [vmem:[#allocation3 + $0x250] sm:$0xff]
    %v2697 = vld [vmem:[#allocation3 + $0x258] sm:$0xff]
    %v2698 = vld [vmem:[#allocation3 + $0x260] sm:$0xff]
    %v2699 = vld [vmem:[#allocation3 + $0x268] sm:$0xff]
    %v2700 = vld [vmem:[#allocation3 + $0x270] sm:$0xff]
    %v2701 = vld [vmem:[#allocation3 + $0x278] sm:$0xff]
    %v2702 = vld [vmem:[#allocation3 + $0x280] sm:$0xff]
    %v2703 = vld [vmem:[#allocation3 + $0x288] sm:$0xff]
    %v2704 = vld [vmem:[#allocation3 + $0x290] sm:$0xff]
    %v2705 = vld [vmem:[#allocation3 + $0x298] sm:$0xff]
    %2718 = vrot.lane.b32.xlu0 %v2694, 95
    %v2719 = vpop.permute.xlu0 %2718
    %2720 = vrot.lane.b32.xlu0 %v2695, 95
    %v2721 = vpop.permute.xlu0 %2720
    %2722 = vrot.lane.b32.xlu0 %v2696, 95
    %v2723 = vpop.permute.xlu0 %2722
    %2724 = vrot.lane.b32.xlu0 %v2697, 95
    %v2725 = vpop.permute.xlu0 %2724
    %2726 = vrot.lane.b32.xlu0 %v2698, 95
    %v2727 = vpop.permute.xlu0 %2726
    %2728 = vrot.lane.b32.xlu0 %v2699, 95
    %v2729 = vpop.permute.xlu0 %2728
    %2730 = vrot.lane.b32.xlu0 %v2700, 95
    %v2731 = vpop.permute.xlu0 %2730
    %2732 = vrot.lane.b32.xlu0 %v2701, 95
    %v2733 = vpop.permute.xlu0 %2732
    %2734 = vrot.lane.b32.xlu0 %v2702, 95
    %v2735 = vpop.permute.xlu0 %2734
    %2736 = vrot.lane.b32.xlu0 %v2703, 95
    %v2737 = vpop.permute.xlu0 %2736
    %2738 = vrot.lane.b32.xlu0 %v2704, 95
    %v2739 = vpop.permute.xlu0 %2738
    %2740 = vrot.lane.b32.xlu0 %v2705, 95
    %v2741 = vpop.permute.xlu0 %2740
    %vm2742 = vcmask 777216
    %v2743 = vsel %vm2742, %v2719, %v2721
    %v2744 = vsel %vm2742, %v2721, %v2723
    %v2745 = vsel %vm2742, %v2723, %v2725
    %v2746 = vsel %vm2742, %v2725, %v2727
    %v2747 = vsel %vm2742, %v2727, %v2729
    %v2748 = vsel %vm2742, %v2729, %v2731
    %v2749 = vsel %vm2742, %v2731, %v2733
    %v2750 = vsel %vm2742, %v2733, %v2735
    %v2751 = vsel %vm2742, %v2735, %v2737
    %v2752 = vsel %vm2742, %v2737, %v2739
    %v2753 = vsel %vm2742, %v2739, %v2741
    %v2765 = vadd.f32 %v2601, %v2743
    %v2766 = vadd.f32 %v2602, %v2744
    %v2767 = vadd.f32 %v2603, %v2745
    %v2768 = vadd.f32 %v2604, %v2746
    %v2769 = vadd.f32 %v2605, %v2747
    %v2770 = vadd.f32 %v2606, %v2748
    %v2771 = vadd.f32 %v2607, %v2749
    %v2772 = vadd.f32 %v2608, %v2750
    %v2773 = vadd.f32 %v2609, %v2751
    %v2774 = vadd.f32 %v2610, %v2752
    %v2775 = vadd.f32 %v2611, %v2753
    %v2776 = vld [vmem:[#allocation3 + $0x2a0] sm:$0xff]
    %v2777 = vld [vmem:[#allocation3 + $0x2a8] sm:$0xff]
    %v2778 = vld [vmem:[#allocation3 + $0x2b0] sm:$0xff]
    %v2779 = vld [vmem:[#allocation3 + $0x2b8] sm:$0xff]
    %v2780 = vld [vmem:[#allocation3 + $0x2c0] sm:$0xff]
    %v2781 = vld [vmem:[#allocation3 + $0x2c8] sm:$0xff]
    %v2782 = vld [vmem:[#allocation3 + $0x2d0] sm:$0xff]
    %v2783 = vld [vmem:[#allocation3 + $0x2d8] sm:$0xff]
    %v2784 = vld [vmem:[#allocation3 + $0x2e0] sm:$0xff]
    %v2785 = vld [vmem:[#allocation3 + $0x2e8] sm:$0xff]
    %v2786 = vld [vmem:[#allocation3 + $0x2f0] sm:$0xff]
    %v2787 = vld [vmem:[#allocation3 + $0x2f8] sm:$0xff]
    %2800 = vrot.lane.b32.xlu0 %v2776, 95
    %v2801 = vpop.permute.xlu0 %2800
    %2802 = vrot.lane.b32.xlu0 %v2777, 95
    %v2803 = vpop.permute.xlu0 %2802
    %2804 = vrot.lane.b32.xlu0 %v2778, 95
    %v2805 = vpop.permute.xlu0 %2804
    %2806 = vrot.lane.b32.xlu0 %v2779, 95
    %v2807 = vpop.permute.xlu0 %2806
    %2808 = vrot.lane.b32.xlu0 %v2780, 95
    %v2809 = vpop.permute.xlu0 %2808
    %2810 = vrot.lane.b32.xlu0 %v2781, 95
    %v2811 = vpop.permute.xlu0 %2810
    %2812 = vrot.lane.b32.xlu0 %v2782, 95
    %v2813 = vpop.permute.xlu0 %2812
    %2814 = vrot.lane.b32.xlu0 %v2783, 95
    %v2815 = vpop.permute.xlu0 %2814
    %2816 = vrot.lane.b32.xlu0 %v2784, 95
    %v2817 = vpop.permute.xlu0 %2816
    %2818 = vrot.lane.b32.xlu0 %v2785, 95
    %v2819 = vpop.permute.xlu0 %2818
    %2820 = vrot.lane.b32.xlu0 %v2786, 95
    %v2821 = vpop.permute.xlu0 %2820
    %2822 = vrot.lane.b32.xlu0 %v2787, 95
    %v2823 = vpop.permute.xlu0 %2822
    %v2824 = vsel %vm2742, %v2801, %v2803
    %v2825 = vsel %vm2742, %v2803, %v2805
    %v2826 = vsel %vm2742, %v2805, %v2807
    %v2827 = vsel %vm2742, %v2807, %v2809
    %v2828 = vsel %vm2742, %v2809, %v2811
    %v2829 = vsel %vm2742, %v2811, %v2813
    %v2830 = vsel %vm2742, %v2813, %v2815
    %v2831 = vsel %vm2742, %v2815, %v2817
    %v2832 = vsel %vm2742, %v2817, %v2819
    %v2833 = vsel %vm2742, %v2819, %v2821
    %v2834 = vsel %vm2742, %v2821, %v2823
    %v2846 = vadd.f32 %v2683, %v2824
    %v2847 = vadd.f32 %v2684, %v2825
    %v2848 = vadd.f32 %v2685, %v2826
    %v2849 = vadd.f32 %v2686, %v2827
    %v2850 = vadd.f32 %v2687, %v2828
    %v2851 = vadd.f32 %v2688, %v2829
    %v2852 = vadd.f32 %v2689, %v2830
    %v2853 = vadd.f32 %v2690, %v2831
    %v2854 = vadd.f32 %v2691, %v2832
    %v2855 = vadd.f32 %v2692, %v2833
    %v2856 = vadd.f32 %v2693, %v2834
    %v2857 = vld [vmem:[#allocation3 + $0x300] sm:$0xff]
    %v2858 = vld [vmem:[#allocation3 + $0x308] sm:$0xff]
    %v2859 = vld [vmem:[#allocation3 + $0x310] sm:$0xff]
    %v2860 = vld [vmem:[#allocation3 + $0x318] sm:$0xff]
    %v2861 = vld [vmem:[#allocation3 + $0x320] sm:$0xff]
    %v2862 = vld [vmem:[#allocation3 + $0x328] sm:$0xff]
    %v2863 = vld [vmem:[#allocation3 + $0x330] sm:$0xff]
    %v2864 = vld [vmem:[#allocation3 + $0x338] sm:$0xff]
    %v2865 = vld [vmem:[#allocation3 + $0x340] sm:$0xff]
    %v2866 = vld [vmem:[#allocation3 + $0x348] sm:$0xff]
    %v2867 = vld [vmem:[#allocation3 + $0x350] sm:$0xff]
    %v2868 = vld [vmem:[#allocation3 + $0x358] sm:$0xff]
    %2881 = vrot.lane.b32.xlu0 %v2857, 93
    %v2882 = vpop.permute.xlu0 %2881
    %2883 = vrot.lane.b32.xlu0 %v2858, 93
    %v2884 = vpop.permute.xlu0 %2883
    %2885 = vrot.lane.b32.xlu0 %v2859, 93
    %v2886 = vpop.permute.xlu0 %2885
    %2887 = vrot.lane.b32.xlu0 %v2860, 93
    %v2888 = vpop.permute.xlu0 %2887
    %2889 = vrot.lane.b32.xlu0 %v2861, 93
    %v2890 = vpop.permute.xlu0 %2889
    %2891 = vrot.lane.b32.xlu0 %v2862, 93
    %v2892 = vpop.permute.xlu0 %2891
    %2893 = vrot.lane.b32.xlu0 %v2863, 93
    %v2894 = vpop.permute.xlu0 %2893
    %2895 = vrot.lane.b32.xlu0 %v2864, 93
    %v2896 = vpop.permute.xlu0 %2895
    %2897 = vrot.lane.b32.xlu0 %v2865, 93
    %v2898 = vpop.permute.xlu0 %2897
    %2899 = vrot.lane.b32.xlu0 %v2866, 93
    %v2900 = vpop.permute.xlu0 %2899
    %2901 = vrot.lane.b32.xlu0 %v2867, 93
    %v2902 = vpop.permute.xlu0 %2901
    %2903 = vrot.lane.b32.xlu0 %v2868, 93
    %v2904 = vpop.permute.xlu0 %2903
    %vm2905 = vcmask 760832
    %v2906 = vsel %vm2905, %v2882, %v2884
    %v2907 = vsel %vm2905, %v2884, %v2886
    %v2908 = vsel %vm2905, %v2886, %v2888
    %v2909 = vsel %vm2905, %v2888, %v2890
    %v2910 = vsel %vm2905, %v2890, %v2892
    %v2911 = vsel %vm2905, %v2892, %v2894
    %v2912 = vsel %vm2905, %v2894, %v2896
    %v2913 = vsel %vm2905, %v2896, %v2898
    %v2914 = vsel %vm2905, %v2898, %v2900
    %v2915 = vsel %vm2905, %v2900, %v2902
    %v2916 = vsel %vm2905, %v2902, %v2904
    %v2928 = vadd.f32 %v2765, %v2906
    %v2929 = vadd.f32 %v2766, %v2907
    %v2930 = vadd.f32 %v2767, %v2908
    %v2931 = vadd.f32 %v2768, %v2909
    %v2932 = vadd.f32 %v2769, %v2910
    %v2933 = vadd.f32 %v2770, %v2911
    %v2934 = vadd.f32 %v2771, %v2912
    %v2935 = vadd.f32 %v2772, %v2913
    %v2936 = vadd.f32 %v2773, %v2914
    %v2937 = vadd.f32 %v2774, %v2915
    %v2938 = vadd.f32 %v2775, %v2916
    %v2939 = vld [vmem:[#allocation3 + $0x360] sm:$0xff]
    %v2940 = vld [vmem:[#allocation3 + $0x368] sm:$0xff]
    %v2941 = vld [vmem:[#allocation3 + $0x370] sm:$0xff]
    %v2942 = vld [vmem:[#allocation3 + $0x378] sm:$0xff]
    %v2943 = vld [vmem:[#allocation3 + $0x380] sm:$0xff]
    %v2944 = vld [vmem:[#allocation3 + $0x388] sm:$0xff]
    %v2945 = vld [vmem:[#allocation3 + $0x390] sm:$0xff]
    %v2946 = vld [vmem:[#allocation3 + $0x398] sm:$0xff]
    %v2947 = vld [vmem:[#allocation3 + $0x3a0] sm:$0xff]
    %v2948 = vld [vmem:[#allocation3 + $0x3a8] sm:$0xff]
    %v2949 = vld [vmem:[#allocation3 + $0x3b0] sm:$0xff]
    %v2950 = vld [vmem:[#allocation3 + $0x3b8] sm:$0xff]
    %2963 = vrot.lane.b32.xlu0 %v2939, 93
    %v2964 = vpop.permute.xlu0 %2963
    %2965 = vrot.lane.b32.xlu0 %v2940, 93
    %v2966 = vpop.permute.xlu0 %2965
    %2967 = vrot.lane.b32.xlu0 %v2941, 93
    %v2968 = vpop.permute.xlu0 %2967
    %2969 = vrot.lane.b32.xlu0 %v2942, 93
    %v2970 = vpop.permute.xlu0 %2969
    %2971 = vrot.lane.b32.xlu0 %v2943, 93
    %v2972 = vpop.permute.xlu0 %2971
    %2973 = vrot.lane.b32.xlu0 %v2944, 93
    %v2974 = vpop.permute.xlu0 %2973
    %2975 = vrot.lane.b32.xlu0 %v2945, 93
    %v2976 = vpop.permute.xlu0 %2975
    %2977 = vrot.lane.b32.xlu0 %v2946, 93
    %v2978 = vpop.permute.xlu0 %2977
    %2979 = vrot.lane.b32.xlu0 %v2947, 93
    %v2980 = vpop.permute.xlu0 %2979
    %2981 = vrot.lane.b32.xlu0 %v2948, 93
    %v2982 = vpop.permute.xlu0 %2981
    %2983 = vrot.lane.b32.xlu0 %v2949, 93
    %v2984 = vpop.permute.xlu0 %2983
    %2985 = vrot.lane.b32.xlu0 %v2950, 93
    %v2986 = vpop.permute.xlu0 %2985
    %v2987 = vsel %vm2905, %v2964, %v2966
    %v2988 = vsel %vm2905, %v2966, %v2968
    %v2989 = vsel %vm2905, %v2968, %v2970
    %v2990 = vsel %vm2905, %v2970, %v2972
    %v2991 = vsel %vm2905, %v2972, %v2974
    %v2992 = vsel %vm2905, %v2974, %v2976
    %v2993 = vsel %vm2905, %v2976, %v2978
    %v2994 = vsel %vm2905, %v2978, %v2980
    %v2995 = vsel %vm2905, %v2980, %v2982
    %v2996 = vsel %vm2905, %v2982, %v2984
    %v2997 = vsel %vm2905, %v2984, %v2986
    %v3009 = vadd.f32 %v2846, %v2987
    %v3010 = vadd.f32 %v2847, %v2988
    %v3011 = vadd.f32 %v2848, %v2989
    %v3012 = vadd.f32 %v2849, %v2990
    %v3013 = vadd.f32 %v2850, %v2991
    %v3014 = vadd.f32 %v2851, %v2992
    %v3015 = vadd.f32 %v2852, %v2993
    %v3016 = vadd.f32 %v2853, %v2994
    %v3017 = vadd.f32 %v2854, %v2995
    %v3018 = vadd.f32 %v2855, %v2996
    %v3019 = vadd.f32 %v2856, %v2997
    %v3020 = vld [vmem:[#allocation3 + $0x3c0] sm:$0xff]
    %v3021 = vld [vmem:[#allocation3 + $0x3c8] sm:$0xff]
    %v3022 = vld [vmem:[#allocation3 + $0x3d0] sm:$0xff]
    %v3023 = vld [vmem:[#allocation3 + $0x3d8] sm:$0xff]
    %v3024 = vld [vmem:[#allocation3 + $0x3e0] sm:$0xff]
    %v3025 = vld [vmem:[#allocation3 + $0x3e8] sm:$0xff]
    %v3026 = vld [vmem:[#allocation3 + $0x3f0] sm:$0xff]
    %v3027 = vld [vmem:[#allocation3 + $0x3f8] sm:$0xff]
    %v3028 = vld [vmem:[#allocation3 + $0x400] sm:$0xff]
    %v3029 = vld [vmem:[#allocation3 + $0x408] sm:$0xff]
    %v3030 = vld [vmem:[#allocation3 + $0x410] sm:$0xff]
    %v3031 = vld [vmem:[#allocation3 + $0x418] sm:$0xff]
    %3044 = vrot.lane.b32.xlu0 %v3020, 64
    %v3045 = vpop.permute.xlu0 %3044
    %3046 = vrot.lane.b32.xlu0 %v3021, 64
    %v3047 = vpop.permute.xlu0 %3046
    %3048 = vrot.lane.b32.xlu0 %v3022, 64
    %v3049 = vpop.permute.xlu0 %3048
    %3050 = vrot.lane.b32.xlu0 %v3023, 64
    %v3051 = vpop.permute.xlu0 %3050
    %3052 = vrot.lane.b32.xlu0 %v3024, 64
    %v3053 = vpop.permute.xlu0 %3052
    %3054 = vrot.lane.b32.xlu0 %v3025, 64
    %v3055 = vpop.permute.xlu0 %3054
    %3056 = vrot.lane.b32.xlu0 %v3026, 64
    %v3057 = vpop.permute.xlu0 %3056
    %3058 = vrot.lane.b32.xlu0 %v3027, 64
    %v3059 = vpop.permute.xlu0 %3058
    %3060 = vrot.lane.b32.xlu0 %v3028, 64
    %v3061 = vpop.permute.xlu0 %3060
    %3062 = vrot.lane.b32.xlu0 %v3029, 64
    %v3063 = vpop.permute.xlu0 %3062
    %3064 = vrot.lane.b32.xlu0 %v3030, 64
    %v3065 = vpop.permute.xlu0 %3064
    %3066 = vrot.lane.b32.xlu0 %v3031, 64
    %v3067 = vpop.permute.xlu0 %3066
    %v3068 = vsel %vm694, %v3045, %v3047
    %v3069 = vsel %vm694, %v3047, %v3049
    %v3070 = vsel %vm694, %v3049, %v3051
    %v3071 = vsel %vm694, %v3051, %v3053
    %v3072 = vsel %vm694, %v3053, %v3055
    %v3073 = vsel %vm694, %v3055, %v3057
    %v3074 = vsel %vm694, %v3057, %v3059
    %v3075 = vsel %vm694, %v3059, %v3061
    %v3076 = vsel %vm694, %v3061, %v3063
    %v3077 = vsel %vm694, %v3063, %v3065
    %v3078 = vsel %vm694, %v3065, %v3067
    %v3090 = vadd.f32 %v2928, %v3068
    %v3091 = vadd.f32 %v2929, %v3069
    %v3092 = vadd.f32 %v2930, %v3070
    %v3093 = vadd.f32 %v2931, %v3071
    %v3094 = vadd.f32 %v2932, %v3072
    %v3095 = vadd.f32 %v2933, %v3073
    %v3096 = vadd.f32 %v2934, %v3074
    %v3097 = vadd.f32 %v2935, %v3075
    %v3098 = vadd.f32 %v2936, %v3076
    %v3099 = vadd.f32 %v2937, %v3077
    %v3100 = vadd.f32 %v2938, %v3078
    %v3101 = vld [vmem:[#allocation3 + $0x420] sm:$0xff]
    %v3102 = vld [vmem:[#allocation3 + $0x428] sm:$0xff]
    %v3103 = vld [vmem:[#allocation3 + $0x430] sm:$0xff]
    %v3104 = vld [vmem:[#allocation3 + $0x438] sm:$0xff]
    %v3105 = vld [vmem:[#allocation3 + $0x440] sm:$0xff]
    %v3106 = vld [vmem:[#allocation3 + $0x448] sm:$0xff]
    %v3107 = vld [vmem:[#allocation3 + $0x450] sm:$0xff]
    %v3108 = vld [vmem:[#allocation3 + $0x458] sm:$0xff]
    %v3109 = vld [vmem:[#allocation3 + $0x460] sm:$0xff]
    %v3110 = vld [vmem:[#allocation3 + $0x468] sm:$0xff]
    %v3111 = vld [vmem:[#allocation3 + $0x470] sm:$0xff]
    %v3112 = vld [vmem:[#allocation3 + $0x478] sm:$0xff]
    %3125 = vrot.lane.b32.xlu0 %v3101, 64
    %v3126 = vpop.permute.xlu0 %3125
    %3127 = vrot.lane.b32.xlu0 %v3102, 64
    %v3128 = vpop.permute.xlu0 %3127
    %3129 = vrot.lane.b32.xlu0 %v3103, 64
    %v3130 = vpop.permute.xlu0 %3129
    %3131 = vrot.lane.b32.xlu0 %v3104, 64
    %v3132 = vpop.permute.xlu0 %3131
    %3133 = vrot.lane.b32.xlu0 %v3105, 64
    %v3134 = vpop.permute.xlu0 %3133
    %3135 = vrot.lane.b32.xlu0 %v3106, 64
    %v3136 = vpop.permute.xlu0 %3135
    %3137 = vrot.lane.b32.xlu0 %v3107, 64
    %v3138 = vpop.permute.xlu0 %3137
    %3139 = vrot.lane.b32.xlu0 %v3108, 64
    %v3140 = vpop.permute.xlu0 %3139
    %3141 = vrot.lane.b32.xlu0 %v3109, 64
    %v3142 = vpop.permute.xlu0 %3141
    %3143 = vrot.lane.b32.xlu0 %v3110, 64
    %v3144 = vpop.permute.xlu0 %3143
    %3145 = vrot.lane.b32.xlu0 %v3111, 64
    %v3146 = vpop.permute.xlu0 %3145
    %3147 = vrot.lane.b32.xlu0 %v3112, 64
    %v3148 = vpop.permute.xlu0 %3147
    %v3149 = vsel %vm694, %v3126, %v3128
    %v3150 = vsel %vm694, %v3128, %v3130
    %v3151 = vsel %vm694, %v3130, %v3132
    %v3152 = vsel %vm694, %v3132, %v3134
    %v3153 = vsel %vm694, %v3134, %v3136
    %v3154 = vsel %vm694, %v3136, %v3138
    %v3155 = vsel %vm694, %v3138, %v3140
    %v3156 = vsel %vm694, %v3140, %v3142
    %v3157 = vsel %vm694, %v3142, %v3144
    %v3158 = vsel %vm694, %v3144, %v3146
    %v3159 = vsel %vm694, %v3146, %v3148
    %v3171 = vadd.f32 %v3009, %v3149
    %v3172 = vadd.f32 %v3010, %v3150
    %v3173 = vadd.f32 %v3011, %v3151
    %v3174 = vadd.f32 %v3012, %v3152
    %v3175 = vadd.f32 %v3013, %v3153
    %v3176 = vadd.f32 %v3014, %v3154
    %v3177 = vadd.f32 %v3015, %v3155
    %v3178 = vadd.f32 %v3016, %v3156
    %v3179 = vadd.f32 %v3017, %v3157
    %v3180 = vadd.f32 %v3018, %v3158
    %v3181 = vadd.f32 %v3019, %v3159
    %v3182 = vld [vmem:[#allocation3 + $0x480] sm:$0xff]
    %v3183 = vld [vmem:[#allocation3 + $0x488] sm:$0xff]
    %v3184 = vld [vmem:[#allocation3 + $0x490] sm:$0xff]
    %v3185 = vld [vmem:[#allocation3 + $0x498] sm:$0xff]
    %v3186 = vld [vmem:[#allocation3 + $0x4a0] sm:$0xff]
    %v3187 = vld [vmem:[#allocation3 + $0x4a8] sm:$0xff]
    %v3188 = vld [vmem:[#allocation3 + $0x4b0] sm:$0xff]
    %v3189 = vld [vmem:[#allocation3 + $0x4b8] sm:$0xff]
    %v3190 = vld [vmem:[#allocation3 + $0x4c0] sm:$0xff]
    %v3191 = vld [vmem:[#allocation3 + $0x4c8] sm:$0xff]
    %v3192 = vld [vmem:[#allocation3 + $0x4d0] sm:$0xff]
    %v3193 = vld [vmem:[#allocation3 + $0x4d8] sm:$0xff]
    %3206 = vrot.lane.b32.xlu0 %v3182, 62
    %v3207 = vpop.permute.xlu0 %3206
    %3208 = vrot.lane.b32.xlu0 %v3183, 62
    %v3209 = vpop.permute.xlu0 %3208
    %3210 = vrot.lane.b32.xlu0 %v3184, 62
    %v3211 = vpop.permute.xlu0 %3210
    %3212 = vrot.lane.b32.xlu0 %v3185, 62
    %v3213 = vpop.permute.xlu0 %3212
    %3214 = vrot.lane.b32.xlu0 %v3186, 62
    %v3215 = vpop.permute.xlu0 %3214
    %3216 = vrot.lane.b32.xlu0 %v3187, 62
    %v3217 = vpop.permute.xlu0 %3216
    %3218 = vrot.lane.b32.xlu0 %v3188, 62
    %v3219 = vpop.permute.xlu0 %3218
    %3220 = vrot.lane.b32.xlu0 %v3189, 62
    %v3221 = vpop.permute.xlu0 %3220
    %3222 = vrot.lane.b32.xlu0 %v3190, 62
    %v3223 = vpop.permute.xlu0 %3222
    %3224 = vrot.lane.b32.xlu0 %v3191, 62
    %v3225 = vpop.permute.xlu0 %3224
    %3226 = vrot.lane.b32.xlu0 %v3192, 62
    %v3227 = vpop.permute.xlu0 %3226
    %3228 = vrot.lane.b32.xlu0 %v3193, 62
    %v3229 = vpop.permute.xlu0 %3228
    %vm3230 = vcmask 506880
    %v3231 = vsel %vm3230, %v3207, %v3209
    %v3232 = vsel %vm3230, %v3209, %v3211
    %v3233 = vsel %vm3230, %v3211, %v3213
    %v3234 = vsel %vm3230, %v3213, %v3215
    %v3235 = vsel %vm3230, %v3215, %v3217
    %v3236 = vsel %vm3230, %v3217, %v3219
    %v3237 = vsel %vm3230, %v3219, %v3221
    %v3238 = vsel %vm3230, %v3221, %v3223
    %v3239 = vsel %vm3230, %v3223, %v3225
    %v3240 = vsel %vm3230, %v3225, %v3227
    %v3241 = vsel %vm3230, %v3227, %v3229
    %v3253 = vadd.f32 %v3090, %v3231
    %v3254 = vadd.f32 %v3091, %v3232
    %v3255 = vadd.f32 %v3092, %v3233
    %v3256 = vadd.f32 %v3093, %v3234
    %v3257 = vadd.f32 %v3094, %v3235
    %v3258 = vadd.f32 %v3095, %v3236
    %v3259 = vadd.f32 %v3096, %v3237
    %v3260 = vadd.f32 %v3097, %v3238
    %v3261 = vadd.f32 %v3098, %v3239
    %v3262 = vadd.f32 %v3099, %v3240
    %v3263 = vadd.f32 %v3100, %v3241
    %v3264 = vld [vmem:[#allocation3 + $0x4e0] sm:$0xff]
    %v3265 = vld [vmem:[#allocation3 + $0x4e8] sm:$0xff]
    %v3266 = vld [vmem:[#allocation3 + $0x4f0] sm:$0xff]
    %v3267 = vld [vmem:[#allocation3 + $0x4f8] sm:$0xff]
    %v3268 = vld [vmem:[#allocation3 + $0x500] sm:$0xff]
    %v3269 = vld [vmem:[#allocation3 + $0x508] sm:$0xff]
    %v3270 = vld [vmem:[#allocation3 + $0x510] sm:$0xff]
    %v3271 = vld [vmem:[#allocation3 + $0x518] sm:$0xff]
    %v3272 = vld [vmem:[#allocation3 + $0x520] sm:$0xff]
    %v3273 = vld [vmem:[#allocation3 + $0x528] sm:$0xff]
    %v3274 = vld [vmem:[#allocation3 + $0x530] sm:$0xff]
    %v3275 = vld [vmem:[#allocation3 + $0x538] sm:$0xff]
    %3288 = vrot.lane.b32.xlu0 %v3264, 62
    %v3289 = vpop.permute.xlu0 %3288
    %3290 = vrot.lane.b32.xlu0 %v3265, 62
    %v3291 = vpop.permute.xlu0 %3290
    %3292 = vrot.lane.b32.xlu0 %v3266, 62
    %v3293 = vpop.permute.xlu0 %3292
    %3294 = vrot.lane.b32.xlu0 %v3267, 62
    %v3295 = vpop.permute.xlu0 %3294
    %3296 = vrot.lane.b32.xlu0 %v3268, 62
    %v3297 = vpop.permute.xlu0 %3296
    %3298 = vrot.lane.b32.xlu0 %v3269, 62
    %v3299 = vpop.permute.xlu0 %3298
    %3300 = vrot.lane.b32.xlu0 %v3270, 62
    %v3301 = vpop.permute.xlu0 %3300
    %3302 = vrot.lane.b32.xlu0 %v3271, 62
    %v3303 = vpop.permute.xlu0 %3302
    %3304 = vrot.lane.b32.xlu0 %v3272, 62
    %v3305 = vpop.permute.xlu0 %3304
    %3306 = vrot.lane.b32.xlu0 %v3273, 62
    %v3307 = vpop.permute.xlu0 %3306
    %3308 = vrot.lane.b32.xlu0 %v3274, 62
    %v3309 = vpop.permute.xlu0 %3308
    %3310 = vrot.lane.b32.xlu0 %v3275, 62
    %v3311 = vpop.permute.xlu0 %3310
    %v3312 = vsel %vm3230, %v3289, %v3291
    %v3313 = vsel %vm3230, %v3291, %v3293
    %v3314 = vsel %vm3230, %v3293, %v3295
    %v3315 = vsel %vm3230, %v3295, %v3297
    %v3316 = vsel %vm3230, %v3297, %v3299
    %v3317 = vsel %vm3230, %v3299, %v3301
    %v3318 = vsel %vm3230, %v3301, %v3303
    %v3319 = vsel %vm3230, %v3303, %v3305
    %v3320 = vsel %vm3230, %v3305, %v3307
    %v3321 = vsel %vm3230, %v3307, %v3309
    %v3322 = vsel %vm3230, %v3309, %v3311
    %v3334 = vadd.f32 %v3171, %v3312
    %v3335 = vadd.f32 %v3172, %v3313
    %v3336 = vadd.f32 %v3173, %v3314
    %v3337 = vadd.f32 %v3174, %v3315
    %v3338 = vadd.f32 %v3175, %v3316
    %v3339 = vadd.f32 %v3176, %v3317
    %v3340 = vadd.f32 %v3177, %v3318
    %v3341 = vadd.f32 %v3178, %v3319
    %v3342 = vadd.f32 %v3179, %v3320
    %v3343 = vadd.f32 %v3180, %v3321
    %v3344 = vadd.f32 %v3181, %v3322
    %v3345 = vld [vmem:[#allocation3 + $0x540] sm:$0xff]
    %v3346 = vld [vmem:[#allocation3 + $0x548] sm:$0xff]
    %v3347 = vld [vmem:[#allocation3 + $0x550] sm:$0xff]
    %v3348 = vld [vmem:[#allocation3 + $0x558] sm:$0xff]
    %v3349 = vld [vmem:[#allocation3 + $0x560] sm:$0xff]
    %v3350 = vld [vmem:[#allocation3 + $0x568] sm:$0xff]
    %v3351 = vld [vmem:[#allocation3 + $0x570] sm:$0xff]
    %v3352 = vld [vmem:[#allocation3 + $0x578] sm:$0xff]
    %v3353 = vld [vmem:[#allocation3 + $0x580] sm:$0xff]
    %v3354 = vld [vmem:[#allocation3 + $0x588] sm:$0xff]
    %v3355 = vld [vmem:[#allocation3 + $0x590] sm:$0xff]
    %v3356 = vld [vmem:[#allocation3 + $0x598] sm:$0xff]
    %3369 = vrot.lane.b32.xlu0 %v3345, 60
    %v3370 = vpop.permute.xlu0 %3369
    %3371 = vrot.lane.b32.xlu0 %v3346, 60
    %v3372 = vpop.permute.xlu0 %3371
    %3373 = vrot.lane.b32.xlu0 %v3347, 60
    %v3374 = vpop.permute.xlu0 %3373
    %3375 = vrot.lane.b32.xlu0 %v3348, 60
    %v3376 = vpop.permute.xlu0 %3375
    %3377 = vrot.lane.b32.xlu0 %v3349, 60
    %v3378 = vpop.permute.xlu0 %3377
    %3379 = vrot.lane.b32.xlu0 %v3350, 60
    %v3380 = vpop.permute.xlu0 %3379
    %3381 = vrot.lane.b32.xlu0 %v3351, 60
    %v3382 = vpop.permute.xlu0 %3381
    %3383 = vrot.lane.b32.xlu0 %v3352, 60
    %v3384 = vpop.permute.xlu0 %3383
    %3385 = vrot.lane.b32.xlu0 %v3353, 60
    %v3386 = vpop.permute.xlu0 %3385
    %3387 = vrot.lane.b32.xlu0 %v3354, 60
    %v3388 = vpop.permute.xlu0 %3387
    %3389 = vrot.lane.b32.xlu0 %v3355, 60
    %v3390 = vpop.permute.xlu0 %3389
    %3391 = vrot.lane.b32.xlu0 %v3356, 60
    %v3392 = vpop.permute.xlu0 %3391
    %vm3393 = vcmask 490496
    %v3394 = vsel %vm3393, %v3370, %v3372
    %v3395 = vsel %vm3393, %v3372, %v3374
    %v3396 = vsel %vm3393, %v3374, %v3376
    %v3397 = vsel %vm3393, %v3376, %v3378
    %v3398 = vsel %vm3393, %v3378, %v3380
    %v3399 = vsel %vm3393, %v3380, %v3382
    %v3400 = vsel %vm3393, %v3382, %v3384
    %v3401 = vsel %vm3393, %v3384, %v3386
    %v3402 = vsel %vm3393, %v3386, %v3388
    %v3403 = vsel %vm3393, %v3388, %v3390
    %v3404 = vsel %vm3393, %v3390, %v3392
    %v3416 = vadd.f32 %v3253, %v3394
    %v3417 = vadd.f32 %v3254, %v3395
    %v3418 = vadd.f32 %v3255, %v3396
    %v3419 = vadd.f32 %v3256, %v3397
    %v3420 = vadd.f32 %v3257, %v3398
    %v3421 = vadd.f32 %v3258, %v3399
    %v3422 = vadd.f32 %v3259, %v3400
    %v3423 = vadd.f32 %v3260, %v3401
    %v3424 = vadd.f32 %v3261, %v3402
    %v3425 = vadd.f32 %v3262, %v3403
    %v3426 = vadd.f32 %v3263, %v3404
    %v3427 = vld [vmem:[#allocation3 + $0x5a0] sm:$0xff]
    %v3428 = vld [vmem:[#allocation3 + $0x5a8] sm:$0xff]
    %v3429 = vld [vmem:[#allocation3 + $0x5b0] sm:$0xff]
    %v3430 = vld [vmem:[#allocation3 + $0x5b8] sm:$0xff]
    %v3431 = vld [vmem:[#allocation3 + $0x5c0] sm:$0xff]
    %v3432 = vld [vmem:[#allocation3 + $0x5c8] sm:$0xff]
    %v3433 = vld [vmem:[#allocation3 + $0x5d0] sm:$0xff]
    %v3434 = vld [vmem:[#allocation3 + $0x5d8] sm:$0xff]
    %v3435 = vld [vmem:[#allocation3 + $0x5e0] sm:$0xff]
    %v3436 = vld [vmem:[#allocation3 + $0x5e8] sm:$0xff]
    %v3437 = vld [vmem:[#allocation3 + $0x5f0] sm:$0xff]
    %v3438 = vld [vmem:[#allocation3 + $0x5f8] sm:$0xff]
    %3451 = vrot.lane.b32.xlu0 %v3427, 33
    %v3452 = vpop.permute.xlu0 %3451
    %3453 = vrot.lane.b32.xlu0 %v3428, 33
    %v3454 = vpop.permute.xlu0 %3453
    %3455 = vrot.lane.b32.xlu0 %v3429, 33
    %v3456 = vpop.permute.xlu0 %3455
    %3457 = vrot.lane.b32.xlu0 %v3430, 33
    %v3458 = vpop.permute.xlu0 %3457
    %3459 = vrot.lane.b32.xlu0 %v3431, 33
    %v3460 = vpop.permute.xlu0 %3459
    %3461 = vrot.lane.b32.xlu0 %v3432, 33
    %v3462 = vpop.permute.xlu0 %3461
    %3463 = vrot.lane.b32.xlu0 %v3433, 33
    %v3464 = vpop.permute.xlu0 %3463
    %3465 = vrot.lane.b32.xlu0 %v3434, 33
    %v3466 = vpop.permute.xlu0 %3465
    %3467 = vrot.lane.b32.xlu0 %v3435, 33
    %v3468 = vpop.permute.xlu0 %3467
    %3469 = vrot.lane.b32.xlu0 %v3436, 33
    %v3470 = vpop.permute.xlu0 %3469
    %3471 = vrot.lane.b32.xlu0 %v3437, 33
    %v3472 = vpop.permute.xlu0 %3471
    %3473 = vrot.lane.b32.xlu0 %v3438, 33
    %v3474 = vpop.permute.xlu0 %3473
    %vm3475 = vcmask 269312
    %v3476 = vsel %vm3475, %v3452, %v3454
    %v3477 = vsel %vm3475, %v3454, %v3456
    %v3478 = vsel %vm3475, %v3456, %v3458
    %v3479 = vsel %vm3475, %v3458, %v3460
    %v3480 = vsel %vm3475, %v3460, %v3462
    %v3481 = vsel %vm3475, %v3462, %v3464
    %v3482 = vsel %vm3475, %v3464, %v3466
    %v3483 = vsel %vm3475, %v3466, %v3468
    %v3484 = vsel %vm3475, %v3468, %v3470
    %v3485 = vsel %vm3475, %v3470, %v3472
    %v3486 = vsel %vm3475, %v3472, %v3474
    %v3498 = vadd.f32 %v3334, %v3476
    %v3499 = vadd.f32 %v3335, %v3477
    %v3500 = vadd.f32 %v3336, %v3478
    %v3501 = vadd.f32 %v3337, %v3479
    %v3502 = vadd.f32 %v3338, %v3480
    %v3503 = vadd.f32 %v3339, %v3481
    %v3504 = vadd.f32 %v3340, %v3482
    %v3505 = vadd.f32 %v3341, %v3483
    %v3506 = vadd.f32 %v3342, %v3484
    %v3507 = vadd.f32 %v3343, %v3485
    %v3508 = vadd.f32 %v3344, %v3486
    %v3509 = vld [vmem:[#allocation3 + $0x600] sm:$0xff]
    %v3510 = vld [vmem:[#allocation3 + $0x608] sm:$0xff]
    %v3511 = vld [vmem:[#allocation3 + $0x610] sm:$0xff]
    %v3512 = vld [vmem:[#allocation3 + $0x618] sm:$0xff]
    %v3513 = vld [vmem:[#allocation3 + $0x620] sm:$0xff]
    %v3514 = vld [vmem:[#allocation3 + $0x628] sm:$0xff]
    %v3515 = vld [vmem:[#allocation3 + $0x630] sm:$0xff]
    %v3516 = vld [vmem:[#allocation3 + $0x638] sm:$0xff]
    %v3517 = vld [vmem:[#allocation3 + $0x640] sm:$0xff]
    %v3518 = vld [vmem:[#allocation3 + $0x648] sm:$0xff]
    %v3519 = vld [vmem:[#allocation3 + $0x650] sm:$0xff]
    %v3520 = vld [vmem:[#allocation3 + $0x658] sm:$0xff]
    %3533 = vrot.lane.b32.xlu0 %v3509, 31
    %v3534 = vpop.permute.xlu0 %3533
    %3535 = vrot.lane.b32.xlu0 %v3510, 31
    %v3536 = vpop.permute.xlu0 %3535
    %3537 = vrot.lane.b32.xlu0 %v3511, 31
    %v3538 = vpop.permute.xlu0 %3537
    %3539 = vrot.lane.b32.xlu0 %v3512, 31
    %v3540 = vpop.permute.xlu0 %3539
    %3541 = vrot.lane.b32.xlu0 %v3513, 31
    %v3542 = vpop.permute.xlu0 %3541
    %3543 = vrot.lane.b32.xlu0 %v3514, 31
    %v3544 = vpop.permute.xlu0 %3543
    %3545 = vrot.lane.b32.xlu0 %v3515, 31
    %v3546 = vpop.permute.xlu0 %3545
    %3547 = vrot.lane.b32.xlu0 %v3516, 31
    %v3548 = vpop.permute.xlu0 %3547
    %3549 = vrot.lane.b32.xlu0 %v3517, 31
    %v3550 = vpop.permute.xlu0 %3549
    %3551 = vrot.lane.b32.xlu0 %v3518, 31
    %v3552 = vpop.permute.xlu0 %3551
    %3553 = vrot.lane.b32.xlu0 %v3519, 31
    %v3554 = vpop.permute.xlu0 %3553
    %3555 = vrot.lane.b32.xlu0 %v3520, 31
    %v3556 = vpop.permute.xlu0 %3555
    %vm3557 = vcmask 252928
    %v3558 = vsel %vm3557, %v3534, %v3536
    %v3559 = vsel %vm3557, %v3536, %v3538
    %v3560 = vsel %vm3557, %v3538, %v3540
    %v3561 = vsel %vm3557, %v3540, %v3542
    %v3562 = vsel %vm3557, %v3542, %v3544
    %v3563 = vsel %vm3557, %v3544, %v3546
    %v3564 = vsel %vm3557, %v3546, %v3548
    %v3565 = vsel %vm3557, %v3548, %v3550
    %v3566 = vsel %vm3557, %v3550, %v3552
    %v3567 = vsel %vm3557, %v3552, %v3554
    %v3568 = vsel %vm3557, %v3554, %v3556
    %v3580 = vadd.f32 %v3416, %v3558
    %v3581 = vadd.f32 %v3417, %v3559
    %v3582 = vadd.f32 %v3418, %v3560
    %v3583 = vadd.f32 %v3419, %v3561
    %v3584 = vadd.f32 %v3420, %v3562
    %v3585 = vadd.f32 %v3421, %v3563
    %v3586 = vadd.f32 %v3422, %v3564
    %v3587 = vadd.f32 %v3423, %v3565
    %v3588 = vadd.f32 %v3424, %v3566
    %v3589 = vadd.f32 %v3425, %v3567
    %v3590 = vadd.f32 %v3426, %v3568
    %v3591 = vld [vmem:[#allocation3 + $0x660] sm:$0xff]
    %v3592 = vld [vmem:[#allocation3 + $0x668] sm:$0xff]
    %v3593 = vld [vmem:[#allocation3 + $0x670] sm:$0xff]
    %v3594 = vld [vmem:[#allocation3 + $0x678] sm:$0xff]
    %v3595 = vld [vmem:[#allocation3 + $0x680] sm:$0xff]
    %v3596 = vld [vmem:[#allocation3 + $0x688] sm:$0xff]
    %v3597 = vld [vmem:[#allocation3 + $0x690] sm:$0xff]
    %v3598 = vld [vmem:[#allocation3 + $0x698] sm:$0xff]
    %v3599 = vld [vmem:[#allocation3 + $0x6a0] sm:$0xff]
    %v3600 = vld [vmem:[#allocation3 + $0x6a8] sm:$0xff]
    %v3601 = vld [vmem:[#allocation3 + $0x6b0] sm:$0xff]
    %v3602 = vld [vmem:[#allocation3 + $0x6b8] sm:$0xff]
    %3615 = vrot.lane.b32.xlu0 %v3591, 31
    %v3616 = vpop.permute.xlu0 %3615
    %3617 = vrot.lane.b32.xlu0 %v3592, 31
    %v3618 = vpop.permute.xlu0 %3617
    %3619 = vrot.lane.b32.xlu0 %v3593, 31
    %v3620 = vpop.permute.xlu0 %3619
    %3621 = vrot.lane.b32.xlu0 %v3594, 31
    %v3622 = vpop.permute.xlu0 %3621
    %3623 = vrot.lane.b32.xlu0 %v3595, 31
    %v3624 = vpop.permute.xlu0 %3623
    %3625 = vrot.lane.b32.xlu0 %v3596, 31
    %v3626 = vpop.permute.xlu0 %3625
    %3627 = vrot.lane.b32.xlu0 %v3597, 31
    %v3628 = vpop.permute.xlu0 %3627
    %3629 = vrot.lane.b32.xlu0 %v3598, 31
    %v3630 = vpop.permute.xlu0 %3629
    %3631 = vrot.lane.b32.xlu0 %v3599, 31
    %v3632 = vpop.permute.xlu0 %3631
    %3633 = vrot.lane.b32.xlu0 %v3600, 31
    %v3634 = vpop.permute.xlu0 %3633
    %3635 = vrot.lane.b32.xlu0 %v3601, 31
    %v3636 = vpop.permute.xlu0 %3635
    %3637 = vrot.lane.b32.xlu0 %v3602, 31
    %v3638 = vpop.permute.xlu0 %3637
    %v3639 = vsel %vm3557, %v3616, %v3618
    %v3640 = vsel %vm3557, %v3618, %v3620
    %v3641 = vsel %vm3557, %v3620, %v3622
    %v3642 = vsel %vm3557, %v3622, %v3624
    %v3643 = vsel %vm3557, %v3624, %v3626
    %v3644 = vsel %vm3557, %v3626, %v3628
    %v3645 = vsel %vm3557, %v3628, %v3630
    %v3646 = vsel %vm3557, %v3630, %v3632
    %v3647 = vsel %vm3557, %v3632, %v3634
    %v3648 = vsel %vm3557, %v3634, %v3636
    %v3649 = vsel %vm3557, %v3636, %v3638
    %v3661 = vadd.f32 %v3498, %v3639
    %v3662 = vadd.f32 %v3499, %v3640
    %v3663 = vadd.f32 %v3500, %v3641
    %v3664 = vadd.f32 %v3501, %v3642
    %v3665 = vadd.f32 %v3502, %v3643
    %v3666 = vadd.f32 %v3503, %v3644
    %v3667 = vadd.f32 %v3504, %v3645
    %v3668 = vadd.f32 %v3505, %v3646
    %v3669 = vadd.f32 %v3506, %v3647
    %v3670 = vadd.f32 %v3507, %v3648
    %v3671 = vadd.f32 %v3508, %v3649
    %v3672 = vld [vmem:[#allocation3 + $0x6c0] sm:$0xff]
    %v3673 = vld [vmem:[#allocation3 + $0x6c8] sm:$0xff]
    %v3674 = vld [vmem:[#allocation3 + $0x6d0] sm:$0xff]
    %v3675 = vld [vmem:[#allocation3 + $0x6d8] sm:$0xff]
    %v3676 = vld [vmem:[#allocation3 + $0x6e0] sm:$0xff]
    %v3677 = vld [vmem:[#allocation3 + $0x6e8] sm:$0xff]
    %v3678 = vld [vmem:[#allocation3 + $0x6f0] sm:$0xff]
    %v3679 = vld [vmem:[#allocation3 + $0x6f8] sm:$0xff]
    %v3680 = vld [vmem:[#allocation3 + $0x700] sm:$0xff]
    %v3681 = vld [vmem:[#allocation3 + $0x708] sm:$0xff]
    %v3682 = vld [vmem:[#allocation3 + $0x710] sm:$0xff]
    %v3683 = vld [vmem:[#allocation3 + $0x718] sm:$0xff]
    %3696 = vrot.lane.b32.xlu0 %v3672, 29
    %v3697 = vpop.permute.xlu0 %3696
    %3698 = vrot.lane.b32.xlu0 %v3673, 29
    %v3699 = vpop.permute.xlu0 %3698
    %3700 = vrot.lane.b32.xlu0 %v3674, 29
    %v3701 = vpop.permute.xlu0 %3700
    %3702 = vrot.lane.b32.xlu0 %v3675, 29
    %v3703 = vpop.permute.xlu0 %3702
    %3704 = vrot.lane.b32.xlu0 %v3676, 29
    %v3705 = vpop.permute.xlu0 %3704
    %3706 = vrot.lane.b32.xlu0 %v3677, 29
    %v3707 = vpop.permute.xlu0 %3706
    %3708 = vrot.lane.b32.xlu0 %v3678, 29
    %v3709 = vpop.permute.xlu0 %3708
    %3710 = vrot.lane.b32.xlu0 %v3679, 29
    %v3711 = vpop.permute.xlu0 %3710
    %3712 = vrot.lane.b32.xlu0 %v3680, 29
    %v3713 = vpop.permute.xlu0 %3712
    %3714 = vrot.lane.b32.xlu0 %v3681, 29
    %v3715 = vpop.permute.xlu0 %3714
    %3716 = vrot.lane.b32.xlu0 %v3682, 29
    %v3717 = vpop.permute.xlu0 %3716
    %3718 = vrot.lane.b32.xlu0 %v3683, 29
    %v3719 = vpop.permute.xlu0 %3718
    %vm3720 = vcmask 236544
    %v3721 = vsel %vm3720, %v3697, %v3699
    %v3722 = vsel %vm3720, %v3699, %v3701
    %v3723 = vsel %vm3720, %v3701, %v3703
    %v3724 = vsel %vm3720, %v3703, %v3705
    %v3725 = vsel %vm3720, %v3705, %v3707
    %v3726 = vsel %vm3720, %v3707, %v3709
    %v3727 = vsel %vm3720, %v3709, %v3711
    %v3728 = vsel %vm3720, %v3711, %v3713
    %v3729 = vsel %vm3720, %v3713, %v3715
    %v3730 = vsel %vm3720, %v3715, %v3717
    %v3731 = vsel %vm3720, %v3717, %v3719
    %v3743 = vadd.f32 %v3580, %v3721
    %v3744 = vadd.f32 %v3581, %v3722
    %v3745 = vadd.f32 %v3582, %v3723
    %v3746 = vadd.f32 %v3583, %v3724
    %v3747 = vadd.f32 %v3584, %v3725
    %v3748 = vadd.f32 %v3585, %v3726
    %v3749 = vadd.f32 %v3586, %v3727
    %v3750 = vadd.f32 %v3587, %v3728
    %v3751 = vadd.f32 %v3588, %v3729
    %v3752 = vadd.f32 %v3589, %v3730
    %v3753 = vadd.f32 %v3590, %v3731
    %v3754 = vld [vmem:[#allocation3 + $0x720] sm:$0xff]
    %v3755 = vld [vmem:[#allocation3 + $0x728] sm:$0xff]
    %v3756 = vld [vmem:[#allocation3 + $0x730] sm:$0xff]
    %v3757 = vld [vmem:[#allocation3 + $0x738] sm:$0xff]
    %v3758 = vld [vmem:[#allocation3 + $0x740] sm:$0xff]
    %v3759 = vld [vmem:[#allocation3 + $0x748] sm:$0xff]
    %v3760 = vld [vmem:[#allocation3 + $0x750] sm:$0xff]
    %v3761 = vld [vmem:[#allocation3 + $0x758] sm:$0xff]
    %v3762 = vld [vmem:[#allocation3 + $0x760] sm:$0xff]
    %v3763 = vld [vmem:[#allocation3 + $0x768] sm:$0xff]
    %v3764 = vld [vmem:[#allocation3 + $0x770] sm:$0xff]
    %v3765 = vld [vmem:[#allocation3 + $0x778] sm:$0xff]
    %3778 = vrot.lane.b32.xlu0 %v3754, 29
    %v3779 = vpop.permute.xlu0 %3778
    %3780 = vrot.lane.b32.xlu0 %v3755, 29
    %v3781 = vpop.permute.xlu0 %3780
    %3782 = vrot.lane.b32.xlu0 %v3756, 29
    %v3783 = vpop.permute.xlu0 %3782
    %3784 = vrot.lane.b32.xlu0 %v3757, 29
    %v3785 = vpop.permute.xlu0 %3784
    %3786 = vrot.lane.b32.xlu0 %v3758, 29
    %v3787 = vpop.permute.xlu0 %3786
    %3788 = vrot.lane.b32.xlu0 %v3759, 29
    %v3789 = vpop.permute.xlu0 %3788
    %3790 = vrot.lane.b32.xlu0 %v3760, 29
    %v3791 = vpop.permute.xlu0 %3790
    %3792 = vrot.lane.b32.xlu0 %v3761, 29
    %v3793 = vpop.permute.xlu0 %3792
    %3794 = vrot.lane.b32.xlu0 %v3762, 29
    %v3795 = vpop.permute.xlu0 %3794
    %3796 = vrot.lane.b32.xlu0 %v3763, 29
    %v3797 = vpop.permute.xlu0 %3796
    %3798 = vrot.lane.b32.xlu0 %v3764, 29
    %v3799 = vpop.permute.xlu0 %3798
    %3800 = vrot.lane.b32.xlu0 %v3765, 29
    %v3801 = vpop.permute.xlu0 %3800
    %v3802 = vsel %vm3720, %v3779, %v3781
    %v3803 = vsel %vm3720, %v3781, %v3783
    %v3804 = vsel %vm3720, %v3783, %v3785
    %v3805 = vsel %vm3720, %v3785, %v3787
    %v3806 = vsel %vm3720, %v3787, %v3789
    %v3807 = vsel %vm3720, %v3789, %v3791
    %v3808 = vsel %vm3720, %v3791, %v3793
    %v3809 = vsel %vm3720, %v3793, %v3795
    %v3810 = vsel %vm3720, %v3795, %v3797
    %v3811 = vsel %vm3720, %v3797, %v3799
    %v3812 = vsel %vm3720, %v3799, %v3801
    %v3824 = vadd.f32 %v3661, %v3802
    %v3825 = vadd.f32 %v3662, %v3803
    %v3826 = vadd.f32 %v3663, %v3804
    %v3827 = vadd.f32 %v3664, %v3805
    %v3828 = vadd.f32 %v3665, %v3806
    %v3829 = vadd.f32 %v3666, %v3807
    %v3830 = vadd.f32 %v3667, %v3808
    %v3831 = vadd.f32 %v3668, %v3809
    %v3832 = vadd.f32 %v3669, %v3810
    %v3833 = vadd.f32 %v3670, %v3811
    %v3834 = vadd.f32 %v3671, %v3812
    %v3835 = vld [vmem:[#allocation3 + $0x788] sm:$0xff]
    %v3836 = vld [vmem:[#allocation3 + $0x790] sm:$0xff]
    %v3837 = vld [vmem:[#allocation3 + $0x798] sm:$0xff]
    %v3838 = vld [vmem:[#allocation3 + $0x7a0] sm:$0xff]
    %v3839 = vld [vmem:[#allocation3 + $0x7a8] sm:$0xff]
    %v3840 = vld [vmem:[#allocation3 + $0x7b0] sm:$0xff]
    %v3841 = vld [vmem:[#allocation3 + $0x7b8] sm:$0xff]
    %v3842 = vld [vmem:[#allocation3 + $0x7c0] sm:$0xff]
    %v3843 = vld [vmem:[#allocation3 + $0x7c8] sm:$0xff]
    %v3844 = vld [vmem:[#allocation3 + $0x7d0] sm:$0xff]
    %v3845 = vld [vmem:[#allocation3 + $0x7d8] sm:$0xff]
    %v3846 = vadd.f32 %v3743, %v3835
    %v3847 = vadd.f32 %v3744, %v3836
    %v3848 = vadd.f32 %v3745, %v3837
    %v3849 = vadd.f32 %v3746, %v3838
    %v3850 = vadd.f32 %v3747, %v3839
    %v3851 = vadd.f32 %v3748, %v3840
    %v3852 = vadd.f32 %v3749, %v3841
    %v3853 = vadd.f32 %v3750, %v3842
    %v3854 = vadd.f32 %v3751, %v3843
    %v3855 = vadd.f32 %v3752, %v3844
    %v3856 = vadd.f32 %v3753, %v3845
    %v3857 = vld [vmem:[#allocation3 + $0x7e8] sm:$0xff]
    %v3858 = vld [vmem:[#allocation3 + $0x7f0] sm:$0xff]
    %v3859 = vld [vmem:[#allocation3 + $0x7f8] sm:$0xff]
    %v3860 = vld [vmem:[#allocation3 + $0x800] sm:$0xff]
    %v3861 = vld [vmem:[#allocation3 + $0x808] sm:$0xff]
    %v3862 = vld [vmem:[#allocation3 + $0x810] sm:$0xff]
    %v3863 = vld [vmem:[#allocation3 + $0x818] sm:$0xff]
    %v3864 = vld [vmem:[#allocation3 + $0x820] sm:$0xff]
    %v3865 = vld [vmem:[#allocation3 + $0x828] sm:$0xff]
    %v3866 = vld [vmem:[#allocation3 + $0x830] sm:$0xff]
    %v3867 = vld [vmem:[#allocation3 + $0x838] sm:$0xff]
    %v3868 = vadd.f32 %v3824, %v3857
    %v3869 = vadd.f32 %v3825, %v3858
    %v3870 = vadd.f32 %v3826, %v3859
    %v3871 = vadd.f32 %v3827, %v3860
    %v3872 = vadd.f32 %v3828, %v3861
    %v3873 = vadd.f32 %v3829, %v3862
    %v3874 = vadd.f32 %v3830, %v3863
    %v3875 = vadd.f32 %v3831, %v3864
    %v3876 = vadd.f32 %v3832, %v3865
    %v3877 = vadd.f32 %v3833, %v3866
    %v3878 = vadd.f32 %v3834, %v3867
    %v3879 = vld [vmem:[#allocation3 + $0x848] sm:$0xff]
    %v3880 = vld [vmem:[#allocation3 + $0x850] sm:$0xff]
    %v3881 = vld [vmem:[#allocation3 + $0x858] sm:$0xff]
    %v3882 = vld [vmem:[#allocation3 + $0x860] sm:$0xff]
    %v3883 = vld [vmem:[#allocation3 + $0x868] sm:$0xff]
    %v3884 = vld [vmem:[#allocation3 + $0x870] sm:$0xff]
    %v3885 = vld [vmem:[#allocation3 + $0x878] sm:$0xff]
    %v3886 = vld [vmem:[#allocation3 + $0x880] sm:$0xff]
    %v3887 = vld [vmem:[#allocation3 + $0x888] sm:$0xff]
    %v3888 = vld [vmem:[#allocation3 + $0x890] sm:$0xff]
    %v3889 = vld [vmem:[#allocation3 + $0x898] sm:$0xff]
    %3901 = vrot.lane.b32.xlu0 %v3879, 126
    %v3902 = vpop.permute.xlu0 %3901
    %3903 = vrot.lane.b32.xlu0 %v3880, 126
    %v3904 = vpop.permute.xlu0 %3903
    %3905 = vrot.lane.b32.xlu0 %v3881, 126
    %v3906 = vpop.permute.xlu0 %3905
    %3907 = vrot.lane.b32.xlu0 %v3882, 126
    %v3908 = vpop.permute.xlu0 %3907
    %3909 = vrot.lane.b32.xlu0 %v3883, 126
    %v3910 = vpop.permute.xlu0 %3909
    %3911 = vrot.lane.b32.xlu0 %v3884, 126
    %v3912 = vpop.permute.xlu0 %3911
    %3913 = vrot.lane.b32.xlu0 %v3885, 126
    %v3914 = vpop.permute.xlu0 %3913
    %3915 = vrot.lane.b32.xlu0 %v3886, 126
    %v3916 = vpop.permute.xlu0 %3915
    %3917 = vrot.lane.b32.xlu0 %v3887, 126
    %v3918 = vpop.permute.xlu0 %3917
    %3919 = vrot.lane.b32.xlu0 %v3888, 126
    %v3920 = vpop.permute.xlu0 %3919
    %3921 = vrot.lane.b32.xlu0 %v3889, 126
    %v3922 = vpop.permute.xlu0 %3921
    %v3923 = vsel %vm2426, %v3902, %v3904
    %v3924 = vsel %vm2426, %v3904, %v3906
    %v3925 = vsel %vm2426, %v3906, %v3908
    %v3926 = vsel %vm2426, %v3908, %v3910
    %v3927 = vsel %vm2426, %v3910, %v3912
    %v3928 = vsel %vm2426, %v3912, %v3914
    %v3929 = vsel %vm2426, %v3914, %v3916
    %v3930 = vsel %vm2426, %v3916, %v3918
    %v3931 = vsel %vm2426, %v3918, %v3920
    %v3932 = vsel %vm2426, %v3920, %v3922
    %v3944 = vadd.f32 %v3846, %v3923
    %v3945 = vadd.f32 %v3847, %v3924
    %v3946 = vadd.f32 %v3848, %v3925
    %v3947 = vadd.f32 %v3849, %v3926
    %v3948 = vadd.f32 %v3850, %v3927
    %v3949 = vadd.f32 %v3851, %v3928
    %v3950 = vadd.f32 %v3852, %v3929
    %v3951 = vadd.f32 %v3853, %v3930
    %v3952 = vadd.f32 %v3854, %v3931
    %v3953 = vadd.f32 %v3855, %v3932
    %v3954 = vadd.f32 %v3856, %v3922
    %v3955 = vld [vmem:[#allocation3 + $0x8a8] sm:$0xff]
    %v3956 = vld [vmem:[#allocation3 + $0x8b0] sm:$0xff]
    %v3957 = vld [vmem:[#allocation3 + $0x8b8] sm:$0xff]
    %v3958 = vld [vmem:[#allocation3 + $0x8c0] sm:$0xff]
    %v3959 = vld [vmem:[#allocation3 + $0x8c8] sm:$0xff]
    %v3960 = vld [vmem:[#allocation3 + $0x8d0] sm:$0xff]
    %v3961 = vld [vmem:[#allocation3 + $0x8d8] sm:$0xff]
    %v3962 = vld [vmem:[#allocation3 + $0x8e0] sm:$0xff]
    %v3963 = vld [vmem:[#allocation3 + $0x8e8] sm:$0xff]
    %v3964 = vld [vmem:[#allocation3 + $0x8f0] sm:$0xff]
    %v3965 = vld [vmem:[#allocation3 + $0x8f8] sm:$0xff]
    %3977 = vrot.lane.b32.xlu0 %v3955, 126
    %v3978 = vpop.permute.xlu0 %3977
    %3979 = vrot.lane.b32.xlu0 %v3956, 126
    %v3980 = vpop.permute.xlu0 %3979
    %3981 = vrot.lane.b32.xlu0 %v3957, 126
    %v3982 = vpop.permute.xlu0 %3981
    %3983 = vrot.lane.b32.xlu0 %v3958, 126
    %v3984 = vpop.permute.xlu0 %3983
    %3985 = vrot.lane.b32.xlu0 %v3959, 126
    %v3986 = vpop.permute.xlu0 %3985
    %3987 = vrot.lane.b32.xlu0 %v3960, 126
    %v3988 = vpop.permute.xlu0 %3987
    %3989 = vrot.lane.b32.xlu0 %v3961, 126
    %v3990 = vpop.permute.xlu0 %3989
    %3991 = vrot.lane.b32.xlu0 %v3962, 126
    %v3992 = vpop.permute.xlu0 %3991
    %3993 = vrot.lane.b32.xlu0 %v3963, 126
    %v3994 = vpop.permute.xlu0 %3993
    %3995 = vrot.lane.b32.xlu0 %v3964, 126
    %v3996 = vpop.permute.xlu0 %3995
    %3997 = vrot.lane.b32.xlu0 %v3965, 126
    %v3998 = vpop.permute.xlu0 %3997
    %v3999 = vsel %vm2426, %v3978, %v3980
    %v4000 = vsel %vm2426, %v3980, %v3982
    %v4001 = vsel %vm2426, %v3982, %v3984
    %v4002 = vsel %vm2426, %v3984, %v3986
    %v4003 = vsel %vm2426, %v3986, %v3988
    %v4004 = vsel %vm2426, %v3988, %v3990
    %v4005 = vsel %vm2426, %v3990, %v3992
    %v4006 = vsel %vm2426, %v3992, %v3994
    %v4007 = vsel %vm2426, %v3994, %v3996
    %v4008 = vsel %vm2426, %v3996, %v3998
    %v4020 = vadd.f32 %v3868, %v3999
    %v4021 = vadd.f32 %v3869, %v4000
    %v4022 = vadd.f32 %v3870, %v4001
    %v4023 = vadd.f32 %v3871, %v4002
    %v4024 = vadd.f32 %v3872, %v4003
    %v4025 = vadd.f32 %v3873, %v4004
    %v4026 = vadd.f32 %v3874, %v4005
    %v4027 = vadd.f32 %v3875, %v4006
    %v4028 = vadd.f32 %v3876, %v4007
    %v4029 = vadd.f32 %v3877, %v4008
    %v4030 = vadd.f32 %v3878, %v3998
    %v4031 = vld [vmem:[#allocation3 + $0x908] sm:$0xff]
    %v4032 = vld [vmem:[#allocation3 + $0x910] sm:$0xff]
    %v4033 = vld [vmem:[#allocation3 + $0x918] sm:$0xff]
    %v4034 = vld [vmem:[#allocation3 + $0x920] sm:$0xff]
    %v4035 = vld [vmem:[#allocation3 + $0x928] sm:$0xff]
    %v4036 = vld [vmem:[#allocation3 + $0x930] sm:$0xff]
    %v4037 = vld [vmem:[#allocation3 + $0x938] sm:$0xff]
    %v4038 = vld [vmem:[#allocation3 + $0x940] sm:$0xff]
    %v4039 = vld [vmem:[#allocation3 + $0x948] sm:$0xff]
    %v4040 = vld [vmem:[#allocation3 + $0x950] sm:$0xff]
    %v4041 = vld [vmem:[#allocation3 + $0x958] sm:$0xff]
    %4053 = vrot.lane.b32.xlu0 %v4031, 124
    %v4054 = vpop.permute.xlu0 %4053
    %4055 = vrot.lane.b32.xlu0 %v4032, 124
    %v4056 = vpop.permute.xlu0 %4055
    %4057 = vrot.lane.b32.xlu0 %v4033, 124
    %v4058 = vpop.permute.xlu0 %4057
    %4059 = vrot.lane.b32.xlu0 %v4034, 124
    %v4060 = vpop.permute.xlu0 %4059
    %4061 = vrot.lane.b32.xlu0 %v4035, 124
    %v4062 = vpop.permute.xlu0 %4061
    %4063 = vrot.lane.b32.xlu0 %v4036, 124
    %v4064 = vpop.permute.xlu0 %4063
    %4065 = vrot.lane.b32.xlu0 %v4037, 124
    %v4066 = vpop.permute.xlu0 %4065
    %4067 = vrot.lane.b32.xlu0 %v4038, 124
    %v4068 = vpop.permute.xlu0 %4067
    %4069 = vrot.lane.b32.xlu0 %v4039, 124
    %v4070 = vpop.permute.xlu0 %4069
    %4071 = vrot.lane.b32.xlu0 %v4040, 124
    %v4072 = vpop.permute.xlu0 %4071
    %4073 = vrot.lane.b32.xlu0 %v4041, 124
    %v4074 = vpop.permute.xlu0 %4073
    %v4075 = vsel %vm2579, %v4054, %v4056
    %v4076 = vsel %vm2579, %v4056, %v4058
    %v4077 = vsel %vm2579, %v4058, %v4060
    %v4078 = vsel %vm2579, %v4060, %v4062
    %v4079 = vsel %vm2579, %v4062, %v4064
    %v4080 = vsel %vm2579, %v4064, %v4066
    %v4081 = vsel %vm2579, %v4066, %v4068
    %v4082 = vsel %vm2579, %v4068, %v4070
    %v4083 = vsel %vm2579, %v4070, %v4072
    %v4084 = vsel %vm2579, %v4072, %v4074
    %v4096 = vadd.f32 %v3944, %v4075
    %v4097 = vadd.f32 %v3945, %v4076
    %v4098 = vadd.f32 %v3946, %v4077
    %v4099 = vadd.f32 %v3947, %v4078
    %v4100 = vadd.f32 %v3948, %v4079
    %v4101 = vadd.f32 %v3949, %v4080
    %v4102 = vadd.f32 %v3950, %v4081
    %v4103 = vadd.f32 %v3951, %v4082
    %v4104 = vadd.f32 %v3952, %v4083
    %v4105 = vadd.f32 %v3953, %v4084
    %v4106 = vadd.f32 %v3954, %v4074
    %4118 = vrot.lane.b32.xlu0 %v4020, 127
    %v4119 = vpop.permute.xlu0 %4118
    %4120 = vrot.lane.b32.xlu0 %v4021, 127
    %v4121 = vpop.permute.xlu0 %4120
    %4122 = vrot.lane.b32.xlu0 %v4022, 127
    %v4123 = vpop.permute.xlu0 %4122
    %4124 = vrot.lane.b32.xlu0 %v4023, 127
    %v4125 = vpop.permute.xlu0 %4124
    %4126 = vrot.lane.b32.xlu0 %v4024, 127
    %v4127 = vpop.permute.xlu0 %4126
    %4128 = vrot.lane.b32.xlu0 %v4025, 127
    %v4129 = vpop.permute.xlu0 %4128
    %4130 = vrot.lane.b32.xlu0 %v4026, 127
    %v4131 = vpop.permute.xlu0 %4130
    %4132 = vrot.lane.b32.xlu0 %v4027, 127
    %v4133 = vpop.permute.xlu0 %4132
    %4134 = vrot.lane.b32.xlu0 %v4028, 127
    %v4135 = vpop.permute.xlu0 %4134
    %4136 = vrot.lane.b32.xlu0 %v4029, 127
    %v4137 = vpop.permute.xlu0 %4136
    %4138 = vrot.lane.b32.xlu0 %v4030, 127
    %v4139 = vpop.permute.xlu0 %4138
    %vm4140 = vcmask 1039360
    %v4141 = vsel %vm4140, %v4119, %v4121
    %v4142 = vsel %vm4140, %v4121, %v4123
    %v4143 = vsel %vm4140, %v4123, %v4125
    %v4144 = vsel %vm4140, %v4125, %v4127
    %v4145 = vsel %vm4140, %v4127, %v4129
    %v4146 = vsel %vm4140, %v4129, %v4131
    %v4147 = vsel %vm4140, %v4131, %v4133
    %v4148 = vsel %vm4140, %v4133, %v4135
    %v4149 = vsel %vm4140, %v4135, %v4137
    %v4150 = vsel %vm4140, %v4137, %v4139
    %v4162 = vadd.f32 %v4096, %v4141
    %v4163 = vadd.f32 %v4097, %v4142
    %v4164 = vadd.f32 %v4098, %v4143
    %v4165 = vadd.f32 %v4099, %v4144
    %v4166 = vadd.f32 %v4100, %v4145
    %v4167 = vadd.f32 %v4101, %v4146
    %v4168 = vadd.f32 %v4102, %v4147
    %v4169 = vadd.f32 %v4103, %v4148
    %v4170 = vadd.f32 %v4104, %v4149
    %v4171 = vadd.f32 %v4105, %v4150
    %v4172 = vadd.f32 %v4106, %v4139
    %4184 = vrot.lane.b32.xlu0 %v4162, 127
    %v4185 = vpop.permute.xlu0 %4184
    %4186 = vrot.lane.b32.xlu0 %v4163, 127
    %v4187 = vpop.permute.xlu0 %4186
    %4188 = vrot.lane.b32.xlu0 %v4164, 127
    %v4189 = vpop.permute.xlu0 %4188
    %4190 = vrot.lane.b32.xlu0 %v4165, 127
    %v4191 = vpop.permute.xlu0 %4190
    %4192 = vrot.lane.b32.xlu0 %v4166, 127
    %v4193 = vpop.permute.xlu0 %4192
    %4194 = vrot.lane.b32.xlu0 %v4167, 127
    %v4195 = vpop.permute.xlu0 %4194
    %4196 = vrot.lane.b32.xlu0 %v4168, 127
    %v4197 = vpop.permute.xlu0 %4196
    %4198 = vrot.lane.b32.xlu0 %v4169, 127
    %v4199 = vpop.permute.xlu0 %4198
    %4200 = vrot.lane.b32.xlu0 %v4170, 127
    %v4201 = vpop.permute.xlu0 %4200
    %4202 = vrot.lane.b32.xlu0 %v4171, 127
    %v4203 = vpop.permute.xlu0 %4202
    %4204 = vrot.lane.b32.xlu0 %v4172, 127
    %v4205 = vpop.permute.xlu0 %4204
    %v4206 = vsel %vm4140, %v4185, %v4187
    %v4207 = vsel %vm4140, %v4187, %v4189
    %v4208 = vsel %vm4140, %v4189, %v4191
    %v4209 = vsel %vm4140, %v4191, %v4193
    %v4210 = vsel %vm4140, %v4193, %v4195
    %v4211 = vsel %vm4140, %v4195, %v4197
    %v4212 = vsel %vm4140, %v4197, %v4199
    %v4213 = vsel %vm4140, %v4199, %v4201
    %v4214 = vsel %vm4140, %v4201, %v4203
    %v4215 = vsel %vm4140, %v4203, %v4205
    %v4227 = vmax.f32 %v4162, %v4206
    %v4228 = vmax.f32 %v4163, %v4207
    %v4229 = vmax.f32 %v4164, %v4208
    %v4230 = vmax.f32 %v4165, %v4209
    %v4231 = vmax.f32 %v4166, %v4210
    %v4232 = vmax.f32 %v4167, %v4211
    %v4233 = vmax.f32 %v4168, %v4212
    %v4234 = vmax.f32 %v4169, %v4213
    %v4235 = vmax.f32 %v4170, %v4214
    %v4236 = vmax.f32 %v4171, %v4215
    %v4237 = vmax.f32 %v4172, %v4205
    %4249 = vrot.lane.b32.xlu0 %v4227, 96
    %v4250 = vpop.permute.xlu0 %4249
    %4251 = vrot.lane.b32.xlu0 %v4228, 96
    %v4252 = vpop.permute.xlu0 %4251
    %4253 = vrot.lane.b32.xlu0 %v4229, 96
    %v4254 = vpop.permute.xlu0 %4253
    %4255 = vrot.lane.b32.xlu0 %v4230, 96
    %v4256 = vpop.permute.xlu0 %4255
    %4257 = vrot.lane.b32.xlu0 %v4231, 96
    %v4258 = vpop.permute.xlu0 %4257
    %4259 = vrot.lane.b32.xlu0 %v4232, 96
    %v4260 = vpop.permute.xlu0 %4259
    %4261 = vrot.lane.b32.xlu0 %v4233, 96
    %v4262 = vpop.permute.xlu0 %4261
    %4263 = vrot.lane.b32.xlu0 %v4234, 96
    %v4264 = vpop.permute.xlu0 %4263
    %4265 = vrot.lane.b32.xlu0 %v4235, 96
    %v4266 = vpop.permute.xlu0 %4265
    %4267 = vrot.lane.b32.xlu0 %v4236, 96
    %v4268 = vpop.permute.xlu0 %4267
    %4269 = vrot.lane.b32.xlu0 %v4237, 96
    %v4270 = vpop.permute.xlu0 %4269
    %vm4271 = vcmask 785408
    %v4272 = vsel %vm4271, %v4250, %v4252
    %v4273 = vsel %vm4271, %v4252, %v4254
    %v4274 = vsel %vm4271, %v4254, %v4256
    %v4275 = vsel %vm4271, %v4256, %v4258
    %v4276 = vsel %vm4271, %v4258, %v4260
    %v4277 = vsel %vm4271, %v4262, %v4264
    %v4278 = vsel %vm4271, %v4264, %v4266
    %v4279 = vsel %vm4271, %v4266, %v4268
    %v4280 = vsel %vm4271, %v4268, %v4270
    %v4291 = vmax.f32 %v4227, %v4272
    %v4292 = vmax.f32 %v4228, %v4273
    %v4293 = vmax.f32 %v4229, %v4274
    %v4294 = vmax.f32 %v4230, %v4275
    %v4295 = vmax.f32 %v4231, %v4276
    %v4296 = vmax.f32 %v4233, %v4277
    %v4297 = vmax.f32 %v4234, %v4278
    %v4298 = vmax.f32 %v4235, %v4279
    %v4299 = vmax.f32 %v4236, %v4280
    %v4300 = vmax.f32 %v4237, %v4270
    %v4301 = vld [vmem:[%s4] sm:$0xff]
    %4303 = vset.pattern.permute.xlu0 0
    %4304 = vperm.xlu0 %4303, %v4301
    %v4305 = vpop.permute.xlu0 %4304
    %v4307 = vadd.f32 %v4291, %v4305
    %v4308 = vadd.f32 %v4292, %v4305
    %v4309 = vadd.f32 %v4293, %v4305
    %v4310 = vadd.f32 %v4294, %v4305
    %v4311 = vadd.f32 %v4295, %v4305
    %v4312 = vadd.f32 %v4296, %v4305
    %v4313 = vadd.f32 %v4297, %v4305
    %v4314 = vadd.f32 %v4298, %v4305
    %v4315 = vadd.f32 %v4299, %v4305
    %v4316 = vadd.f32 %v4300, %v4305
    %v4317 = vmax.f32 %v4307, 0.0
    %v4318 = vmax.f32 %v4308, 0.0
    %v4319 = vmax.f32 %v4309, 0.0
    %v4320 = vmax.f32 %v4310, 0.0
    %v4321 = vmax.f32 %v4311, 0.0
    %v4322 = vmax.f32 %v4312, 0.0
    %v4323 = vmax.f32 %v4313, 0.0
    %v4324 = vmax.f32 %v4314, 0.0
    %v4325 = vmax.f32 %v4315, 0.0
    %v4326 = vmax.f32 %v4316, 0.0
    %v4327 = vlaneseq
    %v4328 = vand.u32 %v4327, 127
    %v4329 = vld [vmem:[%s5] sm:$0xff]
    %v4330 = vld [vmem:[%s5 + $0x8] sm:$0xff]
    %v4331 = vld [vmem:[%s5 + $0x10] sm:$0xff]
    %v4332 = vld [vmem:[%s5 + $0x18] sm:$0xff]
    %v4333 = vld [vmem:[%s5 + $0x20] sm:$0xff]
    %v4334 = vmul.f32 %v4317, %v4329
    %v4335 = vmul.f32 %v4318, %v4330
    %v4336 = vmul.f32 %v4319, %v4331
    %v4337 = vmul.f32 %v4320, %v4332
    %v4338 = vmul.f32 %v4321, %v4333
    %v4339 = vadd.f32 %v4334, %v4335
    %v4340 = vadd.f32 %v4339, %v4336
    %v4341 = vadd.f32 %v4340, %v4337
    %v4342 = vsel %vm694, %v4338, 0.0
    %v4343 = vadd.f32 %v4341, %v4342
    %4344 = vadd.xlane.f32.xlu0 %v4343
    %v4345 = vpop.xlane.xlu0 %4344
    %v4346 = vrot.slane %v4345, 4
    %v4347 = vadd.f32 %v4345, %v4346
    %v4348 = vrot.slane %v4347, 2
    %v4349 = vadd.f32 %v4347, %v4348
    %v4350 = vrot.slane %v4349, 1
    %v4351 = vadd.f32 %v4349, %v4350
    %s4352 = vtos %v4351
    %vm4353 = vcmp.eq.s32.totalorder %v4328, 0
    %v4354 = vstv %s4352
    %v4355 = vsel %vm4353, %v4354, 0.0
    %v4356 = vadd.f32 %v4355, 0.0
    %v4357 = vmul.f32 %v4322, %v4329
    %v4358 = vmul.f32 %v4323, %v4330
    %v4359 = vmul.f32 %v4324, %v4331
    %v4360 = vmul.f32 %v4325, %v4332
    %v4361 = vmul.f32 %v4326, %v4333
    %v4362 = vadd.f32 %v4357, %v4358
    %v4363 = vadd.f32 %v4362, %v4359
    %v4364 = vadd.f32 %v4363, %v4360
    %v4365 = vsel %vm694, %v4361, 0.0
    %v4366 = vadd.f32 %v4364, %v4365
    %4367 = vadd.xlane.f32.xlu0 %v4366
    %v4368 = vpop.xlane.xlu0 %4367
    %v4369 = vrot.slane %v4368, 4
    %v4370 = vadd.f32 %v4368, %v4369
    %v4371 = vrot.slane %v4370, 2
    %v4372 = vadd.f32 %v4370, %v4371
    %v4373 = vrot.slane %v4372, 1
    %v4374 = vadd.f32 %v4372, %v4373
    %s4375 = vtos %v4374
    %vm4376 = vcmp.eq.s32.totalorder %v4328, 1
    %v4377 = vstv %s4375
    %v4378 = vsel %vm4376, %v4377, 0.0
    %v4379 = vadd.f32 %v4356, %v4378
    %v4380 = vld [vmem:[#allocation4] sm:$0x1]
    %4382 = vset.pattern.permute.xlu0 0
    %4383 = vperm.xlu0 %4382, %v4380
    %v4384 = vpop.permute.xlu0 %4383
    %v4386 = vlaneseq
    %v4387 = vshrl.u32 %v4386, 7
    %v4388 = vsub.s32 0, %v4387
    %v4389 = vrot.slane %v4384, %v4388
    %v4390 = vadd.f32 %v4379, %v4389
    %vm4391 = vcmask 8192
    %4392 = vst.msk [vmem:[#allocation5] sm:$0x1] %vm4391, %v4390
    // Predicated region
    $region30: #{net_fc5_forward.1} parent=1 // pred_check
      _
    $region31: #{net_fc5_forward.1} parent=1 // pred_check_branch
      %4394 = sbr.rel (0) target = $region33
    $region32: #{net_fc5_forward.1} parent=1 // pred_region
      %s4396 = ssub.s32 16, 16
      %4397 = vsyncadd [#allocation6], %s4396
      %s4399 = sshll.u32 [#allocation5], 4
      %s4400 = int_to_ptr.vmem [resolvable:$true] %s4399
      %4402 = dma.vmem_to_hbm [thread:$0]  %s4400, 16, %s7, [#allocation6]
    $region33: #{net_fc5_forward.1} parent=1 // pred_fallthru
      _
    // Predicated region
    $region34: #{net_fc5_forward.1} parent=1 // pred_check
      _
    $region35: #{net_fc5_forward.1} parent=1 // pred_check_branch
      %4404 = sbr.rel (0) target = $region37
    $region36: #{net_fc5_forward.1} parent=1 // pred_region
      %4405 = dma.done [#allocation6], 16
    $region37: #{net_fc5_forward.1} parent=1 // pred_fallthru
      _
    %4406 = vsyncpa [#allocation6], 1

</llo_original>
